<compile_context>
chip_gen: v7x
topology: tpu7x:2x2x1
jax: 0.10.0
libtpu: 0.0.40
codegen_flags: <defaults>
</compile_context>

<pallas_src>
import functools

import jax
import jax.numpy as jnp
from jax import lax
from jax.experimental import pallas as pl
from jax.experimental.pallas import tpu as pltpu

EPS = 1e-5
LANE = 128


# ---------------------------------------------------------------------------
# small helpers
# ---------------------------------------------------------------------------
def _round_up(v, m):
    return (v + m - 1) // m * m


def _pad_axis(a, target, axis):
    pad = target - a.shape[axis]
    if pad == 0:
        return a
    widths = [(0, 0)] * a.ndim
    widths[axis] = (0, pad)
    return jnp.pad(a, widths)


def _pad_last(a, target):
    return _pad_axis(a, target, axis=-1)


def _compiler_params(block_bytes):
    """dimension_semantics + a VMEM limit derived from the block working set."""
    try:
        kind = jax.devices()[0].device_kind.lower()
    except Exception:  # pragma: no cover - defensive; device query is cheap
        kind = ""
    phys = (64 << 20) if "v7" in kind else (128 << 20)
    limit = min(max(int(block_bytes * 1.25) + (4 << 20), 16 << 20), (phys * 3) // 4)
    return pltpu.CompilerParams(dimension_semantics=("parallel",),
                                vmem_limit_bytes=int(limit))


# ---------------------------------------------------------------------------
# in-kernel helpers
# ---------------------------------------------------------------------------
def _zero_border(pad_ref):
    """Zero only the 1-pixel border strips of the halo scratch (cheap, runs
    every grid step so it is megacore-safe)."""
    Hp, Wp, C = pad_ref.shape
    row = jnp.zeros((1, Wp, C), pad_ref.dtype)
    col = jnp.zeros((Hp, 1, C), pad_ref.dtype)
    pad_ref[pl.ds(0, 1), :, :] = row
    pad_ref[pl.ds(Hp - 1, 1), :, :] = row
    pad_ref[:, pl.ds(0, 1), :] = col
    pad_ref[:, pl.ds(Wp - 1, 1), :] = col


def _conv3x3(pad_ref, w_ref, stride, Ho, Wo):
    """3x3 conv (pad=1 already applied via the zero-bordered bf16 halo buffer)
    as 9 shifted MXU matmuls, accumulated in a live f32 value."""
    def window(kh, kw):
        if stride == 1:
            win = pad_ref[pl.ds(kh, Ho), pl.ds(kw, Wo), :]
        else:
            hw = stride * (Ho - 1) + 1
            ww = stride * (Wo - 1) + 1
            win = pad_ref[pl.ds(kh, hw), pl.ds(kw, ww), :]
            win = win[::stride, ::stride, :]
        return win.reshape(Ho * Wo, -1)                     # bf16, lane-dense

    acc = jnp.dot(window(0, 0), w_ref[0], preferred_element_type=jnp.float32)
    for t in range(1, 9):
        acc = acc + jnp.dot(window(t // 3, t % 3), w_ref[t],
                            preferred_element_type=jnp.float32)
    return acc                                              # (Ho*Wo, Cpo) f32


# ---------------------------------------------------------------------------
# Pallas kernels (grid over batch; one image per grid step)
# ---------------------------------------------------------------------------
def _stage1_kernel(x_ref, s1_ref, b1_ref, w1_ref, *refs,
                   stride, Ho, Wo, identity_sc):
    if identity_sc:
        y1_ref, sc_ref, sum_ref, ssq_ref, pad_ref = refs
        ws_ref = None
    else:
        ws_ref, y1_ref, sc_ref, sum_ref, ssq_ref, pad_ref = refs

    H = x_ref.shape[1]
    W = x_ref.shape[2]

    # BN1 (pre-folded per-channel scale/shift) + ReLU; f32 math on upcast bf16 x,
    # single cast of the activation to bf16 for all downstream MXU consumers.
    x = x_ref[0].astype(jnp.float32)                        # (H, W, Cpi)
    act = jnp.maximum(x * s1_ref[0] + b1_ref[0], 0.0).astype(jnp.bfloat16)

    # bf16 zero-bordered activation halo in VMEM; border-only re-zeroing.
    _zero_border(pad_ref)
    pad_ref[pl.ds(1, H), pl.ds(1, W), :] = act

    # shortcut: identity copy, or 1x1 conv with stride on the MXU (bf16 x bf16).
    if identity_sc:
        sc_ref[0] = act.astype(sc_ref.dtype)
    else:
        sub = act[::stride, ::stride, :] if stride != 1 else act
        sc = jnp.dot(sub.reshape(Ho * Wo, -1), ws_ref[...],
                     preferred_element_type=jnp.float32)
        sc_ref[0] = sc.reshape(Ho, Wo, -1).astype(sc_ref.dtype)

    # conv1: 3x3, pad=1, stride; live f32 accumulator, single store.
    acc = _conv3x3(pad_ref, w1_ref, stride, Ho, Wo)         # (Ho*Wo, Cpo) f32
    y1_ref[0] = acc.reshape(Ho, Wo, -1).astype(y1_ref.dtype)
    # per-image per-channel sum / sum-of-squares -> BN2 stats without re-reading y1.
    sum_ref[0] = jnp.sum(acc, axis=0, keepdims=True)
    ssq_ref[0] = jnp.sum(acc * acc, axis=0, keepdims=True)


def _stage2_kernel(y1_ref, s2_ref, b2_ref, w2_ref, sc_ref, o_ref, pad_ref,
                   *, Ho, Wo):
    # BN2 (folded) + ReLU in f32 on upcast bf16 y1; single bf16 cast.
    act = jnp.maximum(y1_ref[0].astype(jnp.float32) * s2_ref[0] + b2_ref[0],
                      0.0).astype(jnp.bfloat16)

    _zero_border(pad_ref)
    pad_ref[pl.ds(1, Ho), pl.ds(1, Wo), :] = act

    # conv2: 3x3, pad=1, stride=1; then residual add, store in caller dtype.
    acc = _conv3x3(pad_ref, w2_ref, 1, Ho, Wo)
    o_ref[0] = (acc.reshape(Ho, Wo, -1)
                + sc_ref[0].astype(jnp.float32)).astype(o_ref.dtype)


# ---------------------------------------------------------------------------
# Wrapper
# ---------------------------------------------------------------------------
def preact_block_forward(x_nhwc, params, stride=1):
    N, H, W, Cin = x_nhwc.shape
    Cout = params["w1"].shape[-1]
    Ho = (H - 1) // stride + 1
    Wo = (W - 1) // stride + 1
    dt = x_nhwc.dtype
    out_isize = jnp.dtype(dt).itemsize

    Cpi = _round_up(Cin, LANE)
    Cpo = _round_up(Cout, LANE)
    identity_sc = (stride == 1 and Cin == Cout)

    # ---- BN1: single fused-pass batch stats in f32, folded to scale/shift.
    xf = x_nhwc.astype(jnp.float32)
    cnt1 = N * H * W
    mean1 = jnp.sum(xf, axis=(0, 1, 2)) / cnt1
    msq1 = jnp.sum(xf * xf, axis=(0, 1, 2)) / cnt1
    var1 = jnp.maximum(msq1 - mean1 * mean1, 0.0)      # biased, as torch training BN
    scale1 = params["g1"].astype(jnp.float32) / jnp.sqrt(var1 + EPS)
    shift1 = params["b1"].astype(jnp.float32) - mean1 * scale1
    scale1 = _pad_last(scale1, Cpi).reshape(1, Cpi)    # padded channels: scale=shift=0
    shift1 = _pad_last(shift1, Cpi).reshape(1, Cpi)

    # ---- lane-dense (channel-padded) bf16 operands for every MXU dot.
    xp = _pad_last(x_nhwc.astype(jnp.bfloat16), Cpi)                           # (N,H,W,Cpi)
    w1 = _pad_axis(_pad_last(params["w1"], Cpo), Cpi, 1).astype(jnp.bfloat16)  # (9,Cpi,Cpo)
    w2 = _pad_axis(_pad_last(params["w2"], Cpo), Cpo, 1).astype(jnp.bfloat16)  # (9,Cpo,Cpo)

    # ---- stage 1 -----------------------------------------------------------
    stage1_args = [xp, scale1, shift1, w1]
    in_specs1 = [
        pl.BlockSpec((1, H, W, Cpi), lambda b: (b, 0, 0, 0)),
        pl.BlockSpec((1, Cpi), lambda b: (0, 0)),
        pl.BlockSpec((1, Cpi), lambda b: (0, 0)),
        pl.BlockSpec((9, Cpi, Cpo), lambda b: (0, 0, 0)),
    ]
    sc_weight_bytes = 0
    if not identity_sc:
        ws = _pad_axis(_pad_last(params["w_sc"], Cpo), Cpi, 0).astype(jnp.bfloat16)
        stage1_args.append(ws)
        in_specs1.append(pl.BlockSpec((Cpi, Cpo), lambda b: (0, 0)))
        sc_weight_bytes = 2 * Cpi * Cpo * 2

    bytes1 = (2 * H * W * Cpi * 2            # x block (bf16, double-buffered)
              + 2 * 9 * Cpi * Cpo * 2        # conv1 weights
              + sc_weight_bytes              # optional 1x1 shortcut weights
              + 2 * 2 * Ho * Wo * Cpo * 2    # y1 + sc outputs (bf16)
              + 2 * 2 * Cpo * 4              # sum / ssq outputs
              + (H + 2) * (W + 2) * Cpi * 2  # bf16 halo scratch
              + (1 << 20))

    stage1 = pl.pallas_call(
        functools.partial(_stage1_kernel, stride=stride, Ho=Ho, Wo=Wo,
                          identity_sc=identity_sc),
        out_shape=(jax.ShapeDtypeStruct((N, Ho, Wo, Cpo), jnp.bfloat16),  # y1
                   jax.ShapeDtypeStruct((N, Ho, Wo, Cpo), jnp.bfloat16),  # shortcut
                   jax.ShapeDtypeStruct((N, 1, Cpo), jnp.float32),        # sum(y1)
                   jax.ShapeDtypeStruct((N, 1, Cpo), jnp.float32)),       # sum(y1^2)
        grid=(N,),
        in_specs=in_specs1,
        out_specs=(pl.BlockSpec((1, Ho, Wo, Cpo), lambda b: (b, 0, 0, 0)),
                   pl.BlockSpec((1, Ho, Wo, Cpo), lambda b: (b, 0, 0, 0)),
                   pl.BlockSpec((1, 1, Cpo), lambda b: (b, 0, 0)),
                   pl.BlockSpec((1, 1, Cpo), lambda b: (b, 0, 0))),
        scratch_shapes=[pltpu.VMEM((H + 2, W + 2, Cpi), jnp.bfloat16)],
        compiler_params=_compiler_params(bytes1),
    )
    y1, sc, ysum, yssq = stage1(*stage1_args)

    # ---- BN2 folded from stage1's statistics (no HBM re-read of y1).
    cnt2 = N * Ho * Wo
    mean2 = jnp.sum(ysum[:, 0, :], axis=0) / cnt2
    msq2 = jnp.sum(yssq[:, 0, :], axis=0) / cnt2
    var2 = jnp.maximum(msq2 - mean2 * mean2, 0.0)
    g2p = _pad_last(params["g2"].astype(jnp.float32), Cpo)
    b2p = _pad_last(params["b2"].astype(jnp.float32), Cpo)
    scale2 = (g2p / jnp.sqrt(var2 + EPS)).reshape(1, Cpo)
    shift2 = (b2p - mean2 * scale2[0]).reshape(1, Cpo)

    # ---- stage 2 -----------------------------------------------------------
    bytes2 = (2 * 2 * Ho * Wo * Cpo * 2            # y1 + sc inputs (bf16)
              + 2 * 9 * Cpo * Cpo * 2              # conv2 weights
              + 2 * Ho * Wo * Cpo * out_isize      # output in caller dtype
              + (Ho + 2) * (Wo + 2) * Cpo * 2      # bf16 halo scratch
              + (1 << 20))

    stage2 = pl.pallas_call(
        functools.partial(_stage2_kernel, Ho=Ho, Wo=Wo),
        out_shape=jax.ShapeDtypeStruct((N, Ho, Wo, Cpo), dt),
        grid=(N,),
        in_specs=[
            pl.BlockSpec((1, Ho, Wo, Cpo), lambda b: (b, 0, 0, 0)),
            pl.BlockSpec((1, Cpo), lambda b: (0, 0)),
            pl.BlockSpec((1, Cpo), lambda b: (0, 0)),
            pl.BlockSpec((9, Cpo, Cpo), lambda b: (0, 0, 0)),
            pl.BlockSpec((1, Ho, Wo, Cpo), lambda b: (b, 0, 0, 0)),
        ],
        out_specs=pl.BlockSpec((1, Ho, Wo, Cpo), lambda b: (b, 0, 0, 0)),
        scratch_shapes=[pltpu.VMEM((Ho + 2, Wo + 2, Cpo), jnp.bfloat16)],
        compiler_params=_compiler_params(bytes2),
    )
    out = stage2(y1, scale2, shift2, w2, sc)
    return out[..., :Cout]


# ---------------------------------------------------------------------------
# Pure-JAX reference (correctness smoke test)
# ---------------------------------------------------------------------------
def _ref_forward(x, params, stride):
    def bn_relu(t, g, b):
        m = jnp.mean(t, axis=(0, 1, 2))
        v = jnp.mean((t - m) ** 2, axis=(0, 1, 2))
        return jnp.maximum((t - m) / jnp.sqrt(v + EPS) * g + b, 0.0)

    Cin = x.shape[-1]
    Cout = params["w1"].shape[-1]
    dn = ("NHWC", "HWIO", "NHWC")
    act = bn_relu(x, params["g1"], params["b1"])
    if stride != 1 or Cin != Cout:
        sc = lax.conv_general_dilated(act, params["w_sc"].reshape(1, 1, Cin, Cout),
                                      (stride, stride), "VALID",
                                      dimension_numbers=dn,
                                      precision=lax.Precision.HIGHEST)
    else:
        sc = act
    y1 = lax.conv_general_dilated(act, params["w1"].reshape(3, 3, Cin, Cout),
                                  (stride, stride), ((1, 1), (1, 1)),
                                  dimension_numbers=dn,
                                  precision=lax.Precision.HIGHEST)
    act2 = bn_relu(y1, params["g2"], params["b2"])
    y2 = lax.conv_general_dilated(act2, params["w2"].reshape(3, 3, Cout, Cout),
                                  (1, 1), ((1, 1), (1, 1)),
                                  dimension_numbers=dn,
                                  precision=lax.Precision.HIGHEST)
    return y2 + sc


if __name__ == "__main__":
    def run_case(key, N, Cin, Cout, H, W, stride):
        keys = jax.random.split(key, 8)
        x_nchw = jax.random.normal(keys[0], (N, Cin, H, W), jnp.float32)
        params = {
            "g1": 1.0 + 0.1 * jax.random.normal(keys[1], (Cin,), jnp.float32),
            "b1": 0.1 * jax.random.normal(keys[2], (Cin,), jnp.float32),
            "w1": 0.1 * jax.random.normal(keys[3], (9, Cin, Cout), jnp.float32),
            "g2": 1.0 + 0.1 * jax.random.normal(keys[4], (Cout,), jnp.float32),
            "b2": 0.1 * jax.random.normal(keys[5], (Cout,), jnp.float32),
            "w2": 0.1 * jax.random.normal(keys[6], (9, Cout, Cout), jnp.float32),
        }
        if stride != 1 or Cin != Cout:
            params["w_sc"] = 0.1 * jax.random.normal(keys[7], (Cin, Cout), jnp.float32)

        x_nhwc = jnp.transpose(x_nchw, (0, 2, 3, 1))          # NCHW -> NHWC
        out_nhwc = preact_block_forward(x_nhwc, params, stride=stride)
        jax.block_until_ready(out_nhwc)

        ref = _ref_forward(x_nhwc, params, stride)
        assert out_nhwc.shape == ref.shape
        max_err = float(jnp.max(jnp.abs(out_nhwc.astype(jnp.float32) - ref)))
        # bf16 MXU operands + bf16 inter-stage storage vs HIGHEST-precision f32
        # reference: intentional precision tradeoff -> 5e-2 tolerance.
        assert jnp.allclose(out_nhwc.astype(jnp.float32), ref,
                            rtol=5e-2, atol=5e-2), (
            f"mismatch vs reference (max abs err {max_err})")
        return jnp.transpose(out_nhwc, (0, 3, 1, 2))           # back to NCHW

    master = jax.random.PRNGKey(0)
    k1, k2 = jax.random.split(master)
    # PreActBlock(in_planes=4, planes=8, stride=1): 1x1-conv shortcut path.
    run_case(k1, N=2, Cin=4, Cout=8, H=16, W=16, stride=1)
    # PreActBlock(in_planes=8, planes=8, stride=1): identity shortcut path.
    run_case(k2, N=2, Cin=8, Cout=8, H=16, W=16, stride=1)

    print("KERNEL_OK")
</pallas_src>

<mosaic_0001>
module attributes {stable_mosaic.version = 11 : i64} {
  func.func @_stage1_kernel(%arg0: i32, %arg1: memref<1x16x16x128xbf16, #tpu.memory_space<vmem>>, %arg2: memref<1x128xf32, #tpu.memory_space<vmem>>, %arg3: memref<1x128xf32, #tpu.memory_space<vmem>>, %arg4: memref<9x128x128xbf16, #tpu.memory_space<vmem>>, %arg5: memref<128x128xbf16, #tpu.memory_space<vmem>>, %arg6: memref<1x16x16x128xbf16, #tpu.memory_space<vmem>>, %arg7: memref<1x16x16x128xbf16, #tpu.memory_space<vmem>>, %arg8: memref<1x1x128xf32, #tpu.memory_space<vmem>>, %arg9: memref<1x1x128xf32, #tpu.memory_space<vmem>>, %arg10: memref<18x18x128xbf16, #tpu.memory_space<vmem>>) attributes {dimension_semantics = [#tpu.dimension_semantics<parallel>], iteration_bounds = array<i64: 2>, scalar_prefetch = 0 : i64, scratch_operands = 1 : i64, tpu.core_type = #tpu.core_type<tc>, window_params = [{transform_indices = @transform_0, window_bounds = array<i64: 1, 16, 16, 128>}, {pipeline_mode = #tpu.pipeline_mode<synchronous>, transform_indices = @transform_1, window_bounds = array<i64: 1, 128>}, {pipeline_mode = #tpu.pipeline_mode<synchronous>, transform_indices = @transform_2, window_bounds = array<i64: 1, 128>}, {pipeline_mode = #tpu.pipeline_mode<synchronous>, transform_indices = @transform_3, window_bounds = array<i64: 9, 128, 128>}, {pipeline_mode = #tpu.pipeline_mode<synchronous>, transform_indices = @transform_4, window_bounds = array<i64: 128, 128>}, {transform_indices = @transform_5, window_bounds = array<i64: 1, 16, 16, 128>}, {transform_indices = @transform_6, window_bounds = array<i64: 1, 16, 16, 128>}, {transform_indices = @transform_7, window_bounds = array<i64: 1, 1, 128>}, {transform_indices = @transform_8, window_bounds = array<i64: 1, 1, 128>}]} {
    %c0 = arith.constant 0 : index
    %c0_0 = arith.constant 0 : index
    %c0_1 = arith.constant 0 : index
    %c0_2 = arith.constant 0 : index
    %0 = vector.load %arg1[%c0, %c0_0, %c0_1, %c0_2] : memref<1x16x16x128xbf16, #tpu.memory_space<vmem>>, vector<1x16x16x128xbf16>
    %1 = vector.shape_cast %0 : vector<1x16x16x128xbf16> to vector<16x16x128xbf16>
    %2 = arith.extf %1 : vector<16x16x128xbf16> to vector<16x16x128xf32>
    %c0_3 = arith.constant 0 : index
    %c0_4 = arith.constant 0 : index
    %3 = vector.load %arg2[%c0_3, %c0_4] : memref<1x128xf32, #tpu.memory_space<vmem>>, vector<1x128xf32>
    %4 = vector.shape_cast %3 : vector<1x128xf32> to vector<128xf32>
    %5 = vector.shape_cast %4 : vector<128xf32> to vector<1x1x128xf32>
    %6 = vector.broadcast %5 : vector<1x1x128xf32> to vector<16x16x128xf32>
    %7 = arith.mulf %2, %6 : vector<16x16x128xf32>
    %c0_5 = arith.constant 0 : index
    %c0_6 = arith.constant 0 : index
    %8 = vector.load %arg3[%c0_5, %c0_6] : memref<1x128xf32, #tpu.memory_space<vmem>>, vector<1x128xf32>
    %9 = vector.shape_cast %8 : vector<1x128xf32> to vector<128xf32>
    %10 = vector.shape_cast %9 : vector<128xf32> to vector<1x1x128xf32>
    %11 = vector.broadcast %10 : vector<1x1x128xf32> to vector<16x16x128xf32>
    %12 = arith.addf %7, %11 : vector<16x16x128xf32>
    %cst = arith.constant 0.000000e+00 : f32
    %13 = vector.broadcast %cst : f32 to vector<16x16x128xf32>
    %14 = arith.maximumf %12, %13 : vector<16x16x128xf32>
    %15 = arith.truncf %14 : vector<16x16x128xf32> to vector<16x16x128xbf16>
    %cst_7 = arith.constant 0.000000e+00 : bf16
    %16 = vector.broadcast %cst_7 : bf16 to vector<1x18x128xbf16>
    %cst_8 = arith.constant 0.000000e+00 : bf16
    %17 = vector.broadcast %cst_8 : bf16 to vector<18x1x128xbf16>
    %c0_9 = arith.constant 0 : index
    %c0_10 = arith.constant 0 : index
    %c0_11 = arith.constant 0 : index
    %18 = vector.load %arg10[%c0_9, %c0_10, %c0_11] : memref<18x18x128xbf16, #tpu.memory_space<vmem>>, vector<1x18x128xbf16>
    tpu.vector_store %arg10[%c0_9, %c0_10, %c0_11], %16 {strides = array<i32>} : memref<18x18x128xbf16, #tpu.memory_space<vmem>>, vector<1x18x128xbf16>,
    %c17 = arith.constant 17 : index
    %c0_12 = arith.constant 0 : index
    %c0_13 = arith.constant 0 : index
    %19 = vector.load %arg10[%c17, %c0_12, %c0_13] : memref<18x18x128xbf16, #tpu.memory_space<vmem>>, vector<1x18x128xbf16>
    tpu.vector_store %arg10[%c17, %c0_12, %c0_13], %16 {strides = array<i32>} : memref<18x18x128xbf16, #tpu.memory_space<vmem>>, vector<1x18x128xbf16>,
    %c0_14 = arith.constant 0 : index
    %c0_15 = arith.constant 0 : index
    %c0_16 = arith.constant 0 : index
    %20 = vector.load %arg10[%c0_14, %c0_15, %c0_16] : memref<18x18x128xbf16, #tpu.memory_space<vmem>>, vector<18x1x128xbf16>
    tpu.vector_store %arg10[%c0_14, %c0_15, %c0_16], %17 {strides = array<i32>} : memref<18x18x128xbf16, #tpu.memory_space<vmem>>, vector<18x1x128xbf16>,
    %c0_17 = arith.constant 0 : index
    %c17_18 = arith.constant 17 : index
    %c0_19 = arith.constant 0 : index
    %21 = vector.load %arg10[%c0_17, %c17_18, %c0_19] : memref<18x18x128xbf16, #tpu.memory_space<vmem>>, vector<18x1x128xbf16>
    tpu.vector_store %arg10[%c0_17, %c17_18, %c0_19], %17 {strides = array<i32>} : memref<18x18x128xbf16, #tpu.memory_space<vmem>>, vector<18x1x128xbf16>,
    %c1 = arith.constant 1 : index
    %c1_20 = arith.constant 1 : index
    %c0_21 = arith.constant 0 : index
    %22 = vector.load %arg10[%c1, %c1_20, %c0_21] : memref<18x18x128xbf16, #tpu.memory_space<vmem>>, vector<16x16x128xbf16>
    tpu.vector_store %arg10[%c1, %c1_20, %c0_21], %15 {strides = array<i32>} : memref<18x18x128xbf16, #tpu.memory_space<vmem>>, vector<16x16x128xbf16>,
    %23 = vector.shape_cast %15 : vector<16x16x128xbf16> to vector<256x128xbf16>
    %c0_22 = arith.constant 0 : index
    %c0_23 = arith.constant 0 : index
    %24 = vector.load %arg5[%c0_22, %c0_23] : memref<128x128xbf16, #tpu.memory_space<vmem>>, vector<128x128xbf16>
    %cst_24 = arith.constant dense<0.000000e+00> : vector<256x128xf32>
    %25 = tpu.matmul %23, %24, %cst_24 {dimension_numbers = #tpu.dot_dimension_numbers<[1], [0], [0], [1], [0, 0, 1, 1], [], []>} : vector<256x128xbf16>, vector<128x128xbf16>, vector<256x128xf32> -> vector<256x128xf32>
    %26 = vector.shape_cast %25 : vector<256x128xf32> to vector<16x16x128xf32>
    %27 = arith.truncf %26 : vector<16x16x128xf32> to vector<16x16x128xbf16>
    %c0_25 = arith.constant 0 : index
    %c0_26 = arith.constant 0 : index
    %c0_27 = arith.constant 0 : index
    %c0_28 = arith.constant 0 : index
    %28 = vector.load %arg7[%c0_25, %c0_26, %c0_27, %c0_28] : memref<1x16x16x128xbf16, #tpu.memory_space<vmem>>, vector<1x16x16x128xbf16>
    %29 = vector.shape_cast %28 : vector<1x16x16x128xbf16> to vector<16x16x128xbf16>
    %30 = vector.shape_cast %27 : vector<16x16x128xbf16> to vector<1x16x16x128xbf16>
    tpu.vector_store %arg7[%c0_25, %c0_26, %c0_27, %c0_28], %30 {strides = array<i32>} : memref<1x16x16x128xbf16, #tpu.memory_space<vmem>>, vector<1x16x16x128xbf16>,
    %c0_29 = arith.constant 0 : index
    %c0_30 = arith.constant 0 : index
    %c0_31 = arith.constant 0 : index
    %31 = vector.load %arg10[%c0_29, %c0_30, %c0_31] : memref<18x18x128xbf16, #tpu.memory_space<vmem>>, vector<16x16x128xbf16>
    %32 = vector.shape_cast %31 : vector<16x16x128xbf16> to vector<256x128xbf16>
    %c0_32 = arith.constant 0 : index
    %c0_33 = arith.constant 0 : index
    %c0_34 = arith.constant 0 : index
    %33 = vector.load %arg4[%c0_32, %c0_33, %c0_34] : memref<9x128x128xbf16, #tpu.memory_space<vmem>>, vector<1x128x128xbf16>
    %34 = vector.shape_cast %33 : vector<1x128x128xbf16> to vector<128x128xbf16>
    %cst_35 = arith.constant dense<0.000000e+00> : vector<256x128xf32>
    %35 = tpu.matmul %32, %34, %cst_35 {dimension_numbers = #tpu.dot_dimension_numbers<[1], [0], [0], [1], [0, 0, 1, 1], [], []>} : vector<256x128xbf16>, vector<128x128xbf16>, vector<256x128xf32> -> vector<256x128xf32>
    %c0_36 = arith.constant 0 : index
    %c1_37 = arith.constant 1 : index
    %c0_38 = arith.constant 0 : index
    %36 = vector.load %arg10[%c0_36, %c1_37, %c0_38] : memref<18x18x128xbf16, #tpu.memory_space<vmem>>, vector<16x16x128xbf16>
    %37 = vector.shape_cast %36 : vector<16x16x128xbf16> to vector<256x128xbf16>
    %c1_39 = arith.constant 1 : index
    %c0_40 = arith.constant 0 : index
    %c0_41 = arith.constant 0 : index
    %38 = vector.load %arg4[%c1_39, %c0_40, %c0_41] : memref<9x128x128xbf16, #tpu.memory_space<vmem>>, vector<1x128x128xbf16>
    %39 = vector.shape_cast %38 : vector<1x128x128xbf16> to vector<128x128xbf16>
    %cst_42 = arith.constant dense<0.000000e+00> : vector<256x128xf32>
    %40 = tpu.matmul %37, %39, %cst_42 {dimension_numbers = #tpu.dot_dimension_numbers<[1], [0], [0], [1], [0, 0, 1, 1], [], []>} : vector<256x128xbf16>, vector<128x128xbf16>, vector<256x128xf32> -> vector<256x128xf32>
    %41 = arith.addf %35, %40 : vector<256x128xf32>
    %c0_43 = arith.constant 0 : index
    %c2 = arith.constant 2 : index
    %c0_44 = arith.constant 0 : index
    %42 = vector.load %arg10[%c0_43, %c2, %c0_44] : memref<18x18x128xbf16, #tpu.memory_space<vmem>>, vector<16x16x128xbf16>
    %43 = vector.shape_cast %42 : vector<16x16x128xbf16> to vector<256x128xbf16>
    %c2_45 = arith.constant 2 : index
    %c0_46 = arith.constant 0 : index
    %c0_47 = arith.constant 0 : index
    %44 = vector.load %arg4[%c2_45, %c0_46, %c0_47] : memref<9x128x128xbf16, #tpu.memory_space<vmem>>, vector<1x128x128xbf16>
    %45 = vector.shape_cast %44 : vector<1x128x128xbf16> to vector<128x128xbf16>
    %cst_48 = arith.constant dense<0.000000e+00> : vector<256x128xf32>
    %46 = tpu.matmul %43, %45, %cst_48 {dimension_numbers = #tpu.dot_dimension_numbers<[1], [0], [0], [1], [0, 0, 1, 1], [], []>} : vector<256x128xbf16>, vector<128x128xbf16>, vector<256x128xf32> -> vector<256x128xf32>
    %47 = arith.addf %41, %46 : vector<256x128xf32>
    %c1_49 = arith.constant 1 : index
    %c0_50 = arith.constant 0 : index
    %c0_51 = arith.constant 0 : index
    %48 = vector.load %arg10[%c1_49, %c0_50, %c0_51] : memref<18x18x128xbf16, #tpu.memory_space<vmem>>, vector<16x16x128xbf16>
    %49 = vector.shape_cast %48 : vector<16x16x128xbf16> to vector<256x128xbf16>
    %c3 = arith.constant 3 : index
    %c0_52 = arith.constant 0 : index
    %c0_53 = arith.constant 0 : index
    %50 = vector.load %arg4[%c3, %c0_52, %c0_53] : memref<9x128x128xbf16, #tpu.memory_space<vmem>>, vector<1x128x128xbf16>
    %51 = vector.shape_cast %50 : vector<1x128x128xbf16> to vector<128x128xbf16>
    %cst_54 = arith.constant dense<0.000000e+00> : vector<256x128xf32>
    %52 = tpu.matmul %49, %51, %cst_54 {dimension_numbers = #tpu.dot_dimension_numbers<[1], [0], [0], [1], [0, 0, 1, 1], [], []>} : vector<256x128xbf16>, vector<128x128xbf16>, vector<256x128xf32> -> vector<256x128xf32>
    %53 = arith.addf %47, %52 : vector<256x128xf32>
    %c1_55 = arith.constant 1 : index
    %c1_56 = arith.constant 1 : index
    %c0_57 = arith.constant 0 : index
    %54 = vector.load %arg10[%c1_55, %c1_56, %c0_57] : memref<18x18x128xbf16, #tpu.memory_space<vmem>>, vector<16x16x128xbf16>
    %55 = vector.shape_cast %54 : vector<16x16x128xbf16> to vector<256x128xbf16>
    %c4 = arith.constant 4 : index
    %c0_58 = arith.constant 0 : index
    %c0_59 = arith.constant 0 : index
    %56 = vector.load %arg4[%c4, %c0_58, %c0_59] : memref<9x128x128xbf16, #tpu.memory_space<vmem>>, vector<1x128x128xbf16>
    %57 = vector.shape_cast %56 : vector<1x128x128xbf16> to vector<128x128xbf16>
    %cst_60 = arith.constant dense<0.000000e+00> : vector<256x128xf32>
    %58 = tpu.matmul %55, %57, %cst_60 {dimension_numbers = #tpu.dot_dimension_numbers<[1], [0], [0], [1], [0, 0, 1, 1], [], []>} : vector<256x128xbf16>, vector<128x128xbf16>, vector<256x128xf32> -> vector<256x128xf32>
    %59 = arith.addf %53, %58 : vector<256x128xf32>
    %c1_61 = arith.constant 1 : index
    %c2_62 = arith.constant 2 : index
    %c0_63 = arith.constant 0 : index
    %60 = vector.load %arg10[%c1_61, %c2_62, %c0_63] : memref<18x18x128xbf16, #tpu.memory_space<vmem>>, vector<16x16x128xbf16>
    %61 = vector.shape_cast %60 : vector<16x16x128xbf16> to vector<256x128xbf16>
    %c5 = arith.constant 5 : index
    %c0_64 = arith.constant 0 : index
    %c0_65 = arith.constant 0 : index
    %62 = vector.load %arg4[%c5, %c0_64, %c0_65] : memref<9x128x128xbf16, #tpu.memory_space<vmem>>, vector<1x128x128xbf16>
    %63 = vector.shape_cast %62 : vector<1x128x128xbf16> to vector<128x128xbf16>
    %cst_66 = arith.constant dense<0.000000e+00> : vector<256x128xf32>
    %64 = tpu.matmul %61, %63, %cst_66 {dimension_numbers = #tpu.dot_dimension_numbers<[1], [0], [0], [1], [0, 0, 1, 1], [], []>} : vector<256x128xbf16>, vector<128x128xbf16>, vector<256x128xf32> -> vector<256x128xf32>
    %65 = arith.addf %59, %64 : vector<256x128xf32>
    %c2_67 = arith.constant 2 : index
    %c0_68 = arith.constant 0 : index
    %c0_69 = arith.constant 0 : index
    %66 = vector.load %arg10[%c2_67, %c0_68, %c0_69] : memref<18x18x128xbf16, #tpu.memory_space<vmem>>, vector<16x16x128xbf16>
    %67 = vector.shape_cast %66 : vector<16x16x128xbf16> to vector<256x128xbf16>
    %c6 = arith.constant 6 : index
    %c0_70 = arith.constant 0 : index
    %c0_71 = arith.constant 0 : index
    %68 = vector.load %arg4[%c6, %c0_70, %c0_71] : memref<9x128x128xbf16, #tpu.memory_space<vmem>>, vector<1x128x128xbf16>
    %69 = vector.shape_cast %68 : vector<1x128x128xbf16> to vector<128x128xbf16>
    %cst_72 = arith.constant dense<0.000000e+00> : vector<256x128xf32>
    %70 = tpu.matmul %67, %69, %cst_72 {dimension_numbers = #tpu.dot_dimension_numbers<[1], [0], [0], [1], [0, 0, 1, 1], [], []>} : vector<256x128xbf16>, vector<128x128xbf16>, vector<256x128xf32> -> vector<256x128xf32>
    %71 = arith.addf %65, %70 : vector<256x128xf32>
    %c2_73 = arith.constant 2 : index
    %c1_74 = arith.constant 1 : index
    %c0_75 = arith.constant 0 : index
    %72 = vector.load %arg10[%c2_73, %c1_74, %c0_75] : memref<18x18x128xbf16, #tpu.memory_space<vmem>>, vector<16x16x128xbf16>
    %73 = vector.shape_cast %72 : vector<16x16x128xbf16> to vector<256x128xbf16>
    %c7 = arith.constant 7 : index
    %c0_76 = arith.constant 0 : index
    %c0_77 = arith.constant 0 : index
    %74 = vector.load %arg4[%c7, %c0_76, %c0_77] : memref<9x128x128xbf16, #tpu.memory_space<vmem>>, vector<1x128x128xbf16>
    %75 = vector.shape_cast %74 : vector<1x128x128xbf16> to vector<128x128xbf16>
    %cst_78 = arith.constant dense<0.000000e+00> : vector<256x128xf32>
    %76 = tpu.matmul %73, %75, %cst_78 {dimension_numbers = #tpu.dot_dimension_numbers<[1], [0], [0], [1], [0, 0, 1, 1], [], []>} : vector<256x128xbf16>, vector<128x128xbf16>, vector<256x128xf32> -> vector<256x128xf32>
    %77 = arith.addf %71, %76 : vector<256x128xf32>
    %c2_79 = arith.constant 2 : index
    %c2_80 = arith.constant 2 : index
    %c0_81 = arith.constant 0 : index
    %78 = vector.load %arg10[%c2_79, %c2_80, %c0_81] : memref<18x18x128xbf16, #tpu.memory_space<vmem>>, vector<16x16x128xbf16>
    %79 = vector.shape_cast %78 : vector<16x16x128xbf16> to vector<256x128xbf16>
    %c8 = arith.constant 8 : index
    %c0_82 = arith.constant 0 : index
    %c0_83 = arith.constant 0 : index
    %80 = vector.load %arg4[%c8, %c0_82, %c0_83] : memref<9x128x128xbf16, #tpu.memory_space<vmem>>, vector<1x128x128xbf16>
    %81 = vector.shape_cast %80 : vector<1x128x128xbf16> to vector<128x128xbf16>
    %cst_84 = arith.constant dense<0.000000e+00> : vector<256x128xf32>
    %82 = tpu.matmul %79, %81, %cst_84 {dimension_numbers = #tpu.dot_dimension_numbers<[1], [0], [0], [1], [0, 0, 1, 1], [], []>} : vector<256x128xbf16>, vector<128x128xbf16>, vector<256x128xf32> -> vector<256x128xf32>
    %83 = arith.addf %77, %82 : vector<256x128xf32>
    %84 = vector.shape_cast %83 : vector<256x128xf32> to vector<16x16x128xf32>
    %85 = arith.truncf %84 : vector<16x16x128xf32> to vector<16x16x128xbf16>
    %c0_85 = arith.constant 0 : index
    %c0_86 = arith.constant 0 : index
    %c0_87 = arith.constant 0 : index
    %c0_88 = arith.constant 0 : index
    %86 = vector.load %arg6[%c0_85, %c0_86, %c0_87, %c0_88] : memref<1x16x16x128xbf16, #tpu.memory_space<vmem>>, vector<1x16x16x128xbf16>
    %87 = vector.shape_cast %86 : vector<1x16x16x128xbf16> to vector<16x16x128xbf16>
    %88 = vector.shape_cast %85 : vector<16x16x128xbf16> to vector<1x16x16x128xbf16>
    tpu.vector_store %arg6[%c0_85, %c0_86, %c0_87, %c0_88], %88 {strides = array<i32>} : memref<1x16x16x128xbf16, #tpu.memory_space<vmem>>, vector<1x16x16x128xbf16>,
    %cst_89 = arith.constant dense<0.000000e+00> : vector<128xf32>
    %89 = vector.multi_reduction <add>, %83, %cst_89 [0] : vector<256x128xf32> to vector<128xf32>
    %90 = vector.shape_cast %89 : vector<128xf32> to vector<1x128xf32>
    %c0_90 = arith.constant 0 : index
    %c0_91 = arith.constant 0 : index
    %c0_92 = arith.constant 0 : index
    %91 = vector.load %arg8[%c0_90, %c0_91, %c0_92] : memref<1x1x128xf32, #tpu.memory_space<vmem>>, vector<1x1x128xf32>
    %92 = vector.shape_cast %91 : vector<1x1x128xf32> to vector<1x128xf32>
    %93 = vector.shape_cast %90 : vector<1x128xf32> to vector<1x1x128xf32>
    tpu.vector_store %arg8[%c0_90, %c0_91, %c0_92], %93 {strides = array<i32>} : memref<1x1x128xf32, #tpu.memory_space<vmem>>, vector<1x1x128xf32>,
    %94 = arith.mulf %83, %83 : vector<256x128xf32>
    %cst_93 = arith.constant dense<0.000000e+00> : vector<128xf32>
    %95 = vector.multi_reduction <add>, %94, %cst_93 [0] : vector<256x128xf32> to vector<128xf32>
    %96 = vector.shape_cast %95 : vector<128xf32> to vector<1x128xf32>
    %c0_94 = arith.constant 0 : index
    %c0_95 = arith.constant 0 : index
    %c0_96 = arith.constant 0 : index
    %97 = vector.load %arg9[%c0_94, %c0_95, %c0_96] : memref<1x1x128xf32, #tpu.memory_space<vmem>>, vector<1x1x128xf32>
    %98 = vector.shape_cast %97 : vector<1x1x128xf32> to vector<1x128xf32>
    %99 = vector.shape_cast %96 : vector<1x128xf32> to vector<1x1x128xf32>
    tpu.vector_store %arg9[%c0_94, %c0_95, %c0_96], %99 {strides = array<i32>} : memref<1x1x128xf32, #tpu.memory_space<vmem>>, vector<1x1x128xf32>,
    return
  }
  func.func @transform_0(%arg0: i32) -> (i32, i32, i32, i32) {
    %c0_i32 = arith.constant 0 : i32
    %c0_i32_0 = arith.constant 0 : i32
    %c0_i32_1 = arith.constant 0 : i32
    %c0_i32_2 = arith.constant 0 : i32
    return %arg0, %c0_i32, %c0_i32_0, %c0_i32_1 : i32, i32, i32, i32
  }
  func.func @transform_1(%arg0: i32) -> (i32, i32) {
    %c0_i32 = arith.constant 0 : i32
    %c0_i32_0 = arith.constant 0 : i32
    %c0_i32_1 = arith.constant 0 : i32
    return %c0_i32, %c0_i32_0 : i32, i32
  }
  func.func @transform_2(%arg0: i32) -> (i32, i32) {
    %c0_i32 = arith.constant 0 : i32
    %c0_i32_0 = arith.constant 0 : i32
    %c0_i32_1 = arith.constant 0 : i32
    return %c0_i32, %c0_i32_0 : i32, i32
  }
  func.func @transform_3(%arg0: i32) -> (i32, i32, i32) {
    %c0_i32 = arith.constant 0 : i32
    %c0_i32_0 = arith.constant 0 : i32
    %c0_i32_1 = arith.constant 0 : i32
    %c0_i32_2 = arith.constant 0 : i32
    return %c0_i32, %c0_i32_0, %c0_i32_1 : i32, i32, i32
  }
  func.func @transform_4(%arg0: i32) -> (i32, i32) {
    %c0_i32 = arith.constant 0 : i32
    %c0_i32_0 = arith.constant 0 : i32
    %c0_i32_1 = arith.constant 0 : i32
    return %c0_i32, %c0_i32_0 : i32, i32
  }
  func.func @transform_5(%arg0: i32) -> (i32, i32, i32, i32) {
    %c0_i32 = arith.constant 0 : i32
    %c0_i32_0 = arith.constant 0 : i32
    %c0_i32_1 = arith.constant 0 : i32
    %c0_i32_2 = arith.constant 0 : i32
    return %arg0, %c0_i32, %c0_i32_0, %c0_i32_1 : i32, i32, i32, i32
  }
  func.func @transform_6(%arg0: i32) -> (i32, i32, i32, i32) {
    %c0_i32 = arith.constant 0 : i32
    %c0_i32_0 = arith.constant 0 : i32
    %c0_i32_1 = arith.constant 0 : i32
    %c0_i32_2 = arith.constant 0 : i32
    return %arg0, %c0_i32, %c0_i32_0, %c0_i32_1 : i32, i32, i32, i32
  }
  func.func @transform_7(%arg0: i32) -> (i32, i32, i32) {
    %c0_i32 = arith.constant 0 : i32
    %c0_i32_0 = arith.constant 0 : i32
    %c0_i32_1 = arith.constant 0 : i32
    return %arg0, %c0_i32, %c0_i32_0 : i32, i32, i32
  }
  func.func @transform_8(%arg0: i32) -> (i32, i32, i32) {
    %c0_i32 = arith.constant 0 : i32
    %c0_i32_0 = arith.constant 0 : i32
    %c0_i32_1 = arith.constant 0 : i32
    return %arg0, %c0_i32, %c0_i32_0 : i32, i32, i32
  }
}

</mosaic_0001>

<llo_original>
// kernel: tpu_custom_call.1
$region0: #{tpu_custom_call.1}
  #allocation0 [shape = 'u32[]', space=smem, size = 0x4, offset = 0x4, fixed_abs, tag = 'smem constant byte address 0x4 - core index']
  #allocation1 [shape = 'u32[144,128]{1,0:T(1,128)}', space=vmem, size = 0x12000, scoped, tag = 'internal scratch']
  #allocation2 [shape = 'bf16[18,18,128]{2,1,0:T(8,128)(2,1)}', space=vmem, size = 0x1b000, scoped, tag = 'scratch operand']
  %s0 = inlined_call_operand.hbm [shape: bf16[2,16,16,128], index: 0, kind: input, shape index: {}]
  %s1 = inlined_call_operand.vmem [shape: f32[1,128], index: 1, kind: input, shape index: {}]
  %s2 = inlined_call_operand.vmem [shape: f32[1,128], index: 2, kind: input, shape index: {}]
  %s3 = inlined_call_operand.hbm [shape: bf16[9,128,128], index: 3, kind: input, shape index: {}]
  %s4 = inlined_call_operand.hbm [shape: bf16[128,128], index: 4, kind: input, shape index: {}]
  %s5 = inlined_call_operand.hbm [shape: bf16[2,16,16,128], index: 5, kind: output, shape index: {0}]
  %s6 = inlined_call_operand.hbm [shape: bf16[2,16,16,128], index: 6, kind: output, shape index: {1}]
  %s7 = inlined_call_operand.hbm [shape: f32[2,1,128], index: 7, kind: output, shape index: {2}]
  %s8 = inlined_call_operand.hbm [shape: f32[2,1,128], index: 8, kind: output, shape index: {3}]
  %9 = xla_tuple %s5, %s6, %s7, %s8
  %s10 = sld [smem:[#allocation0]]
  $region89: #{tpu_custom_call.1} parent=0
    _
  %s12 = ssub.s32 1, %s10
  %s13 = scalar_select 0, %s12, %s10
  $region1: #{tpu_custom_call.1} parent=0
    #allocation3 [shape = 'u8[131072]{0}', space=vmem, size = 0x20000, scoped, tag = 'input window, operand 0']
    #allocation4 [shape = 's32[2]{0}', space=sflag, size = 0x8, scoped, tag = 'scoped memory for tpu_custom_call.1']
    #allocation5 [shape = 's32[2]{0}', space=sflag, size = 0x8, scoped, tag = 'scoped memory for tpu_custom_call.1']
    #allocation6 [shape = 'u8[294912]{0}', space=vmem, size = 0x48000, scoped, tag = 'input window, operand 3, single buffered']
    #allocation7 [shape = 's32[1]{0}', space=sflag, size = 0x4, scoped, tag = 'scoped memory for tpu_custom_call.1']
    #allocation8 [shape = 'u8[32768]{0}', space=vmem, size = 0x8000, scoped, tag = 'input window, operand 4, single buffered']
    #allocation9 [shape = 'u8[131072]{0}', space=vmem, size = 0x20000, scoped, tag = 'output window, operand 0']
    #allocation10 [shape = 'u8[131072]{0}', space=vmem, size = 0x20000, scoped, tag = 'output window, operand 1']
    #allocation11 [shape = 's32[2]{0}', space=sflag, size = 0x8, scoped, tag = 'scoped memory for tpu_custom_call.1']
    #allocation12 [shape = 'u8[1024]{0}', space=vmem, size = 0x400, scoped, tag = 'output window, operand 2']
    #allocation13 [shape = 'u8[1024]{0}', space=vmem, size = 0x400, scoped, tag = 'output window, operand 3']
    #allocation14 [shape = 's32[2]{0}', space=sflag, size = 0x8, scoped, tag = 'scoped memory for tpu_custom_call.1']
    %14 = vsyncpa [#allocation4], 0
    %s15 = scalar_lea.sflag [#allocation4], 1
    %16 = vsyncpa %s15, 0
    %17 = vsyncpa [#allocation7], 0
    %18 = vsyncpa [#allocation5], 0
    %s19 = scalar_lea.sflag [#allocation5], 1
    %20 = vsyncpa %s19, 0
    %21 = vsyncpa [#allocation11], 0
    %s22 = scalar_lea.sflag [#allocation11], 1
    %23 = vsyncpa %s22, 0
    %24 = vsyncpa [#allocation14], 0
    %s25 = scalar_lea.sflag [#allocation14], 1
    %26 = vsyncpa %s25, 0
    loop: start=0, step=1, limit=4
    $region2: #{tpu_custom_call.1} parent=1 // loop_pre_header
      _
    $region3: #{tpu_custom_call.1} parent=1 // loop_header
      %s28 = sphi 0, %s32
      %p29 = scmp.ge.s32.totalorder %s28, 4
      %s38 = sphi 0, %s40
      %s41 = sphi 0, %s38
      %s42 = sphi 0, %s41
      %s58 = sphi 0, %s42
      %s62 = sphi 0, %s62
      %s64 = sphi 0, %s62
      %s65 = sphi 0, %s64
      %s79 = sphi 0, %s65
      %s83 = sphi 0, %s83
      %s85 = sphi 0, %s83
      %s86 = sphi 0, %s85
      %s100 = sphi 0, %s86
      %s104 = sphi 0, %s104
      %s106 = sphi 0, %s104
      %s107 = sphi 0, %s106
      %s121 = sphi 0, %s107
      %s125 = sphi 0, %s125
      %s127 = sphi 0, %s125
      %s128 = sphi 0, %s127
      %s142 = sphi 0, %s128
      %s148 = sphi 0, %s150
      %s151 = sphi 0, %s148
      %s152 = sphi 0, %s151
      %s168 = sphi 0, %s152
      %s174 = sphi 0, %s176
      %s177 = sphi 0, %s174
      %s178 = sphi 0, %s177
      %s194 = sphi 0, %s178
      %s200 = sphi 0, %s202
      %s203 = sphi 0, %s200
      %s204 = sphi 0, %s203
      %s220 = sphi 0, %s204
      %s226 = sphi 0, %s228
      %s229 = sphi 0, %s226
      %s230 = sphi 0, %s229
      %s246 = sphi 0, %s230
    $region4: #{tpu_custom_call.1} parent=1 // loop_header_branch
      %31 = sbr.rel (%p29) target = $region8
    $region5: #{tpu_custom_call.1} parent=1 // loop_body
      %s33 = ssub.s32 %s28, 1
      %s34 = ssub.s32 %s28, 2
      %s35 = sadd.s32 %s28, 1
      %s36 = ssub.s32 %s28, %s35
      %p37 = scmp.eq.s32.totalorder %s36, 0
      %s39 = sadd.s32 %s38, 1
      %s40 = scalar_select %p37, %s38, %s39
      %p43 = pneg %p37
      %p44 = scmp.eq.s32.totalorder %s28, 1
      %p45 = por %p43, %p44
      %p46 = scmp.ne.s32.totalorder %s38, %s41
      %p47 = scmp.eq.s32.totalorder %s28, 0
      %p48 = por %p46, %p47
      %p49 = scmp.ne.s32.totalorder %s38, %s41
      %p50 = scmp.eq.s32.totalorder %s33, 1
      %p51 = por %p49, %p50
      %p52 = scmp.ne.s32.totalorder %s41, %s42
      %p53 = scmp.eq.s32.totalorder %s33, 0
      %p54 = por %p52, %p53
      %p55 = scmp.ne.s32.totalorder %s41, %s42
      %p56 = scmp.eq.s32.totalorder %s34, 1
      %p57 = por %p55, %p56
      %p59 = scmp.ne.s32.totalorder %s42, %s58
      %p60 = scmp.eq.s32.totalorder %s34, 0
      %p61 = por %p59, %p60
      %s63 = sadd.s32 %s62, 1
      %p66 = scmp.eq.s32.totalorder %s28, 1
      %p67 = scmp.ne.s32.totalorder %s62, %s64
      %p68 = scmp.eq.s32.totalorder %s28, 0
      %p69 = por %p67, %p68
      %p70 = scmp.ne.s32.totalorder %s62, %s64
      %p71 = scmp.eq.s32.totalorder %s33, 1
      %p72 = por %p70, %p71
      %p73 = scmp.ne.s32.totalorder %s64, %s65
      %p74 = scmp.eq.s32.totalorder %s33, 0
      %p75 = por %p73, %p74
      %p76 = scmp.ne.s32.totalorder %s64, %s65
      %p77 = scmp.eq.s32.totalorder %s34, 1
      %p78 = por %p76, %p77
      %p80 = scmp.ne.s32.totalorder %s65, %s79
      %p81 = scmp.eq.s32.totalorder %s34, 0
      %p82 = por %p80, %p81
      %s84 = sadd.s32 %s83, 1
      %p87 = scmp.eq.s32.totalorder %s28, 1
      %p88 = scmp.ne.s32.totalorder %s83, %s85
      %p89 = scmp.eq.s32.totalorder %s28, 0
      %p90 = por %p88, %p89
      %p91 = scmp.ne.s32.totalorder %s83, %s85
      %p92 = scmp.eq.s32.totalorder %s33, 1
      %p93 = por %p91, %p92
      %p94 = scmp.ne.s32.totalorder %s85, %s86
      %p95 = scmp.eq.s32.totalorder %s33, 0
      %p96 = por %p94, %p95
      %p97 = scmp.ne.s32.totalorder %s85, %s86
      %p98 = scmp.eq.s32.totalorder %s34, 1
      %p99 = por %p97, %p98
      %p101 = scmp.ne.s32.totalorder %s86, %s100
      %p102 = scmp.eq.s32.totalorder %s34, 0
      %p103 = por %p101, %p102
      %s105 = sadd.s32 %s104, 1
      %p108 = scmp.eq.s32.totalorder %s28, 1
      %p109 = scmp.ne.s32.totalorder %s104, %s106
      %p110 = scmp.eq.s32.totalorder %s28, 0
      %p111 = por %p109, %p110
      %p112 = scmp.ne.s32.totalorder %s104, %s106
      %p113 = scmp.eq.s32.totalorder %s33, 1
      %p114 = por %p112, %p113
      %p115 = scmp.ne.s32.totalorder %s106, %s107
      %p116 = scmp.eq.s32.totalorder %s33, 0
      %p117 = por %p115, %p116
      %p118 = scmp.ne.s32.totalorder %s106, %s107
      %p119 = scmp.eq.s32.totalorder %s34, 1
      %p120 = por %p118, %p119
      %p122 = scmp.ne.s32.totalorder %s107, %s121
      %p123 = scmp.eq.s32.totalorder %s34, 0
      %p124 = por %p122, %p123
      %s126 = sadd.s32 %s125, 1
      %p129 = scmp.eq.s32.totalorder %s28, 1
      %p130 = scmp.ne.s32.totalorder %s125, %s127
      %p131 = scmp.eq.s32.totalorder %s28, 0
      %p132 = por %p130, %p131
      %p133 = scmp.ne.s32.totalorder %s125, %s127
      %p134 = scmp.eq.s32.totalorder %s33, 1
      %p135 = por %p133, %p134
      %p136 = scmp.ne.s32.totalorder %s127, %s128
      %p137 = scmp.eq.s32.totalorder %s33, 0
      %p138 = por %p136, %p137
      %p139 = scmp.ne.s32.totalorder %s127, %s128
      %p140 = scmp.eq.s32.totalorder %s34, 1
      %p141 = por %p139, %p140
      %p143 = scmp.ne.s32.totalorder %s128, %s142
      %p144 = scmp.eq.s32.totalorder %s34, 0
      %p145 = por %p143, %p144
      %s146 = ssub.s32 %s28, %s35
      %p147 = scmp.eq.s32.totalorder %s146, 0
      %s149 = sadd.s32 %s148, 1
      %s150 = scalar_select %p147, %s148, %s149
      %p153 = pneg %p147
      %p154 = scmp.eq.s32.totalorder %s28, 1
      %p155 = por %p153, %p154
      %p156 = scmp.ne.s32.totalorder %s148, %s151
      %p157 = scmp.eq.s32.totalorder %s28, 0
      %p158 = por %p156, %p157
      %p159 = scmp.ne.s32.totalorder %s148, %s151
      %p160 = scmp.eq.s32.totalorder %s33, 1
      %p161 = por %p159, %p160
      %p162 = scmp.ne.s32.totalorder %s151, %s152
      %p163 = scmp.eq.s32.totalorder %s33, 0
      %p164 = por %p162, %p163
      %p165 = scmp.ne.s32.totalorder %s151, %s152
      %p166 = scmp.eq.s32.totalorder %s34, 1
      %p167 = por %p165, %p166
      %p169 = scmp.ne.s32.totalorder %s152, %s168
      %p170 = scmp.eq.s32.totalorder %s34, 0
      %p171 = por %p169, %p170
      %s172 = ssub.s32 %s28, %s35
      %p173 = scmp.eq.s32.totalorder %s172, 0
      %s175 = sadd.s32 %s174, 1
      %s176 = scalar_select %p173, %s174, %s175
      %p179 = pneg %p173
      %p180 = scmp.eq.s32.totalorder %s28, 1
      %p181 = por %p179, %p180
      %p182 = scmp.ne.s32.totalorder %s174, %s177
      %p183 = scmp.eq.s32.totalorder %s28, 0
      %p184 = por %p182, %p183
      %p185 = scmp.ne.s32.totalorder %s174, %s177
      %p186 = scmp.eq.s32.totalorder %s33, 1
      %p187 = por %p185, %p186
      %p188 = scmp.ne.s32.totalorder %s177, %s178
      %p189 = scmp.eq.s32.totalorder %s33, 0
      %p190 = por %p188, %p189
      %p191 = scmp.ne.s32.totalorder %s177, %s178
      %p192 = scmp.eq.s32.totalorder %s34, 1
      %p193 = por %p191, %p192
      %p195 = scmp.ne.s32.totalorder %s178, %s194
      %p196 = scmp.eq.s32.totalorder %s34, 0
      %p197 = por %p195, %p196
      %s198 = ssub.s32 %s28, %s35
      %p199 = scmp.eq.s32.totalorder %s198, 0
      %s201 = sadd.s32 %s200, 1
      %s202 = scalar_select %p199, %s200, %s201
      %p205 = pneg %p199
      %p206 = scmp.eq.s32.totalorder %s28, 1
      %p207 = por %p205, %p206
      %p208 = scmp.ne.s32.totalorder %s200, %s203
      %p209 = scmp.eq.s32.totalorder %s28, 0
      %p210 = por %p208, %p209
      %p211 = scmp.ne.s32.totalorder %s200, %s203
      %p212 = scmp.eq.s32.totalorder %s33, 1
      %p213 = por %p211, %p212
      %p214 = scmp.ne.s32.totalorder %s203, %s204
      %p215 = scmp.eq.s32.totalorder %s33, 0
      %p216 = por %p214, %p215
      %p217 = scmp.ne.s32.totalorder %s203, %s204
      %p218 = scmp.eq.s32.totalorder %s34, 1
      %p219 = por %p217, %p218
      %p221 = scmp.ne.s32.totalorder %s204, %s220
      %p222 = scmp.eq.s32.totalorder %s34, 0
      %p223 = por %p221, %p222
      %s224 = ssub.s32 %s28, %s35
      %p225 = scmp.eq.s32.totalorder %s224, 0
      %s227 = sadd.s32 %s226, 1
      %s228 = scalar_select %p225, %s226, %s227
      %p231 = pneg %p225
      %p232 = scmp.eq.s32.totalorder %s28, 1
      %p233 = por %p231, %p232
      %p234 = scmp.ne.s32.totalorder %s226, %s229
      %p235 = scmp.eq.s32.totalorder %s28, 0
      %p236 = por %p234, %p235
      %p237 = scmp.ne.s32.totalorder %s226, %s229
      %p238 = scmp.eq.s32.totalorder %s33, 1
      %p239 = por %p237, %p238
      %p240 = scmp.ne.s32.totalorder %s229, %s230
      %p241 = scmp.eq.s32.totalorder %s33, 0
      %p242 = por %p240, %p241
      %p243 = scmp.ne.s32.totalorder %s229, %s230
      %p244 = scmp.eq.s32.totalorder %s34, 1
      %p245 = por %p243, %p244
      %p247 = scmp.ne.s32.totalorder %s230, %s246
      %p248 = scmp.eq.s32.totalorder %s34, 0
      %p249 = por %p247, %p248
      %p250 = scmp.le.s32.totalorder 1, %s28
      %p251 = scmp.lt.s32.totalorder %s28, 3
      %p252 = pnand %p250, %p251
      %p253 = pneg %p252
      // Predicated region
      $region9: #{tpu_custom_call.1} parent=5 // pred_check
        _
      $region10: #{tpu_custom_call.1} parent=5 // pred_check_branch
        %255 = sbr.rel (%p252) target = $region12
      $region11: #{tpu_custom_call.1} parent=5 // pred_region
        %s256 = ssub.s32 %s28, 1
        // Predicated region
        $region13: #{tpu_custom_call.1} parent=11 // pred_check
          %p257 = pneg %p75
        $region14: #{tpu_custom_call.1} parent=11 // pred_check_branch
          %259 = sbr.rel (%p257) target = $region16
        $region15: #{tpu_custom_call.1} parent=11 // pred_region
          _
        $region16: #{tpu_custom_call.1} parent=11 // pred_fallthru
          _
        // Predicated region
        $region17: #{tpu_custom_call.1} parent=11 // pred_check
          %p260 = pneg %p96
        $region18: #{tpu_custom_call.1} parent=11 // pred_check_branch
          %262 = sbr.rel (%p260) target = $region20
        $region19: #{tpu_custom_call.1} parent=11 // pred_region
          _
        $region20: #{tpu_custom_call.1} parent=11 // pred_fallthru
          _
        // Predicated region
        $region21: #{tpu_custom_call.1} parent=11 // pred_check
          %p263 = pneg %p117
        $region22: #{tpu_custom_call.1} parent=11 // pred_check_branch
          %265 = sbr.rel (%p263) target = $region24
        $region23: #{tpu_custom_call.1} parent=11 // pred_region
          %s267 = ssub.s32 9216, 9216
          %268 = vsyncadd [#allocation7], %s267
          %s269 = sshll.u32 [#allocation6], 4
          %s270 = int_to_ptr.vmem [resolvable:$true] %s269
          %275 = dma.hbm_to_vmem [thread:$0]  %s3, 9216, %s270, [#allocation7], 64, 64, 4
        $region24: #{tpu_custom_call.1} parent=11 // pred_fallthru
          _
        // Predicated region
        $region25: #{tpu_custom_call.1} parent=11 // pred_check
          %p276 = pneg %p138
        $region26: #{tpu_custom_call.1} parent=11 // pred_check_branch
          %278 = sbr.rel (%p276) target = $region28
        $region27: #{tpu_custom_call.1} parent=11 // pred_region
          %s280 = ssub.s32 1024, 1024
          %281 = vsyncadd [#allocation7], %s280
          %s282 = sshll.u32 [#allocation8], 4
          %s283 = int_to_ptr.vmem [resolvable:$true] %s282
          %288 = dma.hbm_to_vmem [thread:$0]  %s4, 1024, %s283, [#allocation7], 64, 64, 4
        $region28: #{tpu_custom_call.1} parent=11 // pred_fallthru
          _
      $region12: #{tpu_custom_call.1} parent=5 // pred_fallthru
        _
      %p289 = scmp.lt.s32.totalorder %s28, 2
      // Predicated region
      $region29: #{tpu_custom_call.1} parent=5 // pred_check
        %p290 = pneg %p289
      $region30: #{tpu_custom_call.1} parent=5 // pred_check_branch
        %292 = sbr.rel (%p290) target = $region32
      $region31: #{tpu_custom_call.1} parent=5 // pred_region
        // Predicated region
        $region33: #{tpu_custom_call.1} parent=31 // pred_check
          %p293 = pneg %p48
        $region34: #{tpu_custom_call.1} parent=31 // pred_check_branch
          %295 = sbr.rel (%p293) target = $region36
        $region35: #{tpu_custom_call.1} parent=31 // pred_region
          %s296 = sand.u32 %s38, 1
          %s297 = scalar_lea.sflag [#allocation4], %s296
          %s298 = sand.u32 %s38, 1
          %s299 = smul.addr %s298, 128
          %s300 = scalar_lea.vmem [#allocation3], %s299
          %s302 = ssub.s32 2048, 2048
          %303 = vsyncadd %s297, %s302
          %s304 = smul.addr %s28, 32
          %s305 = smul.addr %s304, 64
          %s306 = scalar_lea.hbm %s0, %s305
          %s307 = sshll.u32 %s300, 4
          %s308 = int_to_ptr.vmem [resolvable:$true] %s307
          %313 = dma.hbm_to_vmem [thread:$0]  %s306, 2048, %s308, %s297, 64, 64, 4
        $region36: #{tpu_custom_call.1} parent=31 // pred_fallthru
          _
      $region32: #{tpu_custom_call.1} parent=5 // pred_fallthru
        _
      %p314 = scmp.le.s32.totalorder 1, %s28
      %p315 = scmp.lt.s32.totalorder %s28, 3
      %p316 = pnand %p314, %p315
      %p317 = pneg %p316
      // Predicated region
      $region37: #{tpu_custom_call.1} parent=5 // pred_check
        _
      $region38: #{tpu_custom_call.1} parent=5 // pred_check_branch
        %319 = sbr.rel (%p316) target = $region40
      $region39: #{tpu_custom_call.1} parent=5 // pred_region
        %s320 = ssub.s32 %s28, 1
        %s321 = sand.u32 %s41, 1
        %s322 = scalar_lea.sflag [#allocation4], %s321
        %s323 = sand.u32 %s41, 1
        %s324 = smul.addr %s323, 128
        %s325 = scalar_lea.vmem [#allocation3], %s324
        // Predicated region
        $region41: #{tpu_custom_call.1} parent=39 // pred_check
          %p326 = pneg %p54
        $region42: #{tpu_custom_call.1} parent=39 // pred_check_branch
          %328 = sbr.rel (%p326) target = $region44
        $region43: #{tpu_custom_call.1} parent=39 // pred_region
          %329 = dma.done %s322, 2048
        $region44: #{tpu_custom_call.1} parent=39 // pred_fallthru
          _
        // Predicated region
        $region45: #{tpu_custom_call.1} parent=39 // pred_check
          %p330 = pneg %p117
        $region46: #{tpu_custom_call.1} parent=39 // pred_check_branch
          %332 = sbr.rel (%p330) target = $region48
        $region47: #{tpu_custom_call.1} parent=39 // pred_region
          %333 = dma.done [#allocation7], 9216
        $region48: #{tpu_custom_call.1} parent=39 // pred_fallthru
          _
        // Predicated region
        $region49: #{tpu_custom_call.1} parent=39 // pred_check
          %p334 = pneg %p138
        $region50: #{tpu_custom_call.1} parent=39 // pred_check_branch
          %336 = sbr.rel (%p334) target = $region52
        $region51: #{tpu_custom_call.1} parent=39 // pred_region
          %337 = dma.done [#allocation7], 1024
        $region52: #{tpu_custom_call.1} parent=39 // pred_fallthru
          _
        %s338 = sand.u32 %s41, 1
        %s339 = scalar_lea.sflag [#allocation4], %s338
        %s340 = sand.u32 %s41, 1
        %s341 = smul.addr %s340, 128
        %s342 = scalar_lea.vmem [#allocation3], %s341
        %p343 = pneg %p54
        %p344 = pneg %p51
        %p345 = pneg %p75
        %p346 = pneg %p72
        %p347 = pneg %p96
        %p348 = pneg %p93
        %p349 = pneg %p117
        %p350 = pneg %p114
        %p351 = pneg %p138
        %p352 = pneg %p135
        %p353 = pneg %p164
        %p354 = pneg %p161
        %s355 = sand.u32 %s151, 1
        %s356 = scalar_lea.sflag [#allocation5], %s355
        %s357 = sand.u32 %s151, 1
        %s358 = smul.addr %s357, 128
        %s359 = scalar_lea.vmem [#allocation9], %s358
        %p360 = pneg %p190
        %p361 = pneg %p187
        %s362 = sand.u32 %s33, 1
        %s363 = scalar_lea.sflag [#allocation11], %s362
        %s364 = sand.u32 %s177, 1
        %s365 = smul.addr %s364, 128
        %s366 = scalar_lea.vmem [#allocation10], %s365
        %p367 = pneg %p216
        %p368 = pneg %p213
        %s369 = sand.u32 %s33, 1
        %s370 = scalar_lea.sflag [#allocation11], %s369
        %s371 = sand.u32 %s203, 1
        %s372 = scalar_lea.vmem [#allocation12], %s371
        %p373 = pneg %p242
        %p374 = pneg %p239
        %s375 = sand.u32 %s229, 1
        %s376 = scalar_lea.sflag [#allocation14], %s375
        %s377 = sand.u32 %s229, 1
        %s378 = scalar_lea.vmem [#allocation13], %s377
        %v380 = vld [vmem:[%s325] sm:$0xf]
        %v381 = vld [vmem:[%s325 + $0x4] sm:$0xf]
        %v382 = vld [vmem:[%s325 + $0x8] sm:$0xf]
        %v383 = vld [vmem:[%s325 + $0xc] sm:$0xf]
        %v384 = vld [vmem:[%s325 + $0x10] sm:$0xf]
        %v385 = vld [vmem:[%s325 + $0x14] sm:$0xf]
        %v386 = vld [vmem:[%s325 + $0x18] sm:$0xf]
        %v387 = vld [vmem:[%s325 + $0x1c] sm:$0xf]
        %v388 = vld [vmem:[%s325 + $0x20] sm:$0xf]
        %v389 = vld [vmem:[%s325 + $0x24] sm:$0xf]
        %v390 = vld [vmem:[%s325 + $0x28] sm:$0xf]
        %v391 = vld [vmem:[%s325 + $0x2c] sm:$0xf]
        %v392 = vld [vmem:[%s325 + $0x30] sm:$0xf]
        %v393 = vld [vmem:[%s325 + $0x34] sm:$0xf]
        %v394 = vld [vmem:[%s325 + $0x38] sm:$0xf]
        %v395 = vld [vmem:[%s325 + $0x3c] sm:$0xf]
        %v396 = vld [vmem:[%s325 + $0x40] sm:$0xf]
        %v397 = vld [vmem:[%s325 + $0x44] sm:$0xf]
        %v398 = vld [vmem:[%s325 + $0x48] sm:$0xf]
        %v399 = vld [vmem:[%s325 + $0x4c] sm:$0xf]
        %v400 = vld [vmem:[%s325 + $0x50] sm:$0xf]
        %v401 = vld [vmem:[%s325 + $0x54] sm:$0xf]
        %v402 = vld [vmem:[%s325 + $0x58] sm:$0xf]
        %v403 = vld [vmem:[%s325 + $0x5c] sm:$0xf]
        %v404 = vld [vmem:[%s325 + $0x60] sm:$0xf]
        %v405 = vld [vmem:[%s325 + $0x64] sm:$0xf]
        %v406 = vld [vmem:[%s325 + $0x68] sm:$0xf]
        %v407 = vld [vmem:[%s325 + $0x6c] sm:$0xf]
        %v408 = vld [vmem:[%s325 + $0x70] sm:$0xf]
        %v409 = vld [vmem:[%s325 + $0x74] sm:$0xf]
        %v410 = vld [vmem:[%s325 + $0x78] sm:$0xf]
        %v411 = vld [vmem:[%s325 + $0x7c] sm:$0xf]
        %v412 = vunpack.c.l.bf16 %v380
        %v413 = vunpack.c.l.bf16 %v381
        %v414 = vunpack.c.l.bf16 %v382
        %v415 = vunpack.c.l.bf16 %v383
        %v416 = vunpack.c.l.bf16 %v384
        %v417 = vunpack.c.l.bf16 %v385
        %v418 = vunpack.c.l.bf16 %v386
        %v419 = vunpack.c.l.bf16 %v387
        %v420 = vunpack.c.l.bf16 %v388
        %v421 = vunpack.c.l.bf16 %v389
        %v422 = vunpack.c.l.bf16 %v390
        %v423 = vunpack.c.l.bf16 %v391
        %v424 = vunpack.c.l.bf16 %v392
        %v425 = vunpack.c.l.bf16 %v393
        %v426 = vunpack.c.l.bf16 %v394
        %v427 = vunpack.c.l.bf16 %v395
        %v428 = vunpack.c.l.bf16 %v396
        %v429 = vunpack.c.l.bf16 %v397
        %v430 = vunpack.c.l.bf16 %v398
        %v431 = vunpack.c.l.bf16 %v399
        %v432 = vunpack.c.l.bf16 %v400
        %v433 = vunpack.c.l.bf16 %v401
        %v434 = vunpack.c.l.bf16 %v402
        %v435 = vunpack.c.l.bf16 %v403
        %v436 = vunpack.c.l.bf16 %v404
        %v437 = vunpack.c.l.bf16 %v405
        %v438 = vunpack.c.l.bf16 %v406
        %v439 = vunpack.c.l.bf16 %v407
        %v440 = vunpack.c.l.bf16 %v408
        %v441 = vunpack.c.l.bf16 %v409
        %v442 = vunpack.c.l.bf16 %v410
        %v443 = vunpack.c.l.bf16 %v411
        %v444 = vld [vmem:[%s1] sm:$0x1]
        %v446 = vlaneseq
        %v447 = vshrl.u32 %v446, 7
        %v448 = vsub.s32 0, %v447
        %v449 = vrot.slane %v444, %v448
        %v451 = vmul.f32 %v412, %v449
        %v452 = vmul.f32 %v413, %v449
        %v453 = vmul.f32 %v414, %v449
        %v454 = vmul.f32 %v415, %v449
        %v455 = vmul.f32 %v416, %v449
        %v456 = vmul.f32 %v417, %v449
        %v457 = vmul.f32 %v418, %v449
        %v458 = vmul.f32 %v419, %v449
        %v459 = vmul.f32 %v420, %v449
        %v460 = vmul.f32 %v421, %v449
        %v461 = vmul.f32 %v422, %v449
        %v462 = vmul.f32 %v423, %v449
        %v463 = vmul.f32 %v424, %v449
        %v464 = vmul.f32 %v425, %v449
        %v465 = vmul.f32 %v426, %v449
        %v466 = vmul.f32 %v427, %v449
        %v467 = vmul.f32 %v428, %v449
        %v468 = vmul.f32 %v429, %v449
        %v469 = vmul.f32 %v430, %v449
        %v470 = vmul.f32 %v431, %v449
        %v471 = vmul.f32 %v432, %v449
        %v472 = vmul.f32 %v433, %v449
        %v473 = vmul.f32 %v434, %v449
        %v474 = vmul.f32 %v435, %v449
        %v475 = vmul.f32 %v436, %v449
        %v476 = vmul.f32 %v437, %v449
        %v477 = vmul.f32 %v438, %v449
        %v478 = vmul.f32 %v439, %v449
        %v479 = vmul.f32 %v440, %v449
        %v480 = vmul.f32 %v441, %v449
        %v481 = vmul.f32 %v442, %v449
        %v482 = vmul.f32 %v443, %v449
        %v483 = vld [vmem:[%s2] sm:$0x1]
        %v485 = vlaneseq
        %v486 = vshrl.u32 %v485, 7
        %v487 = vsub.s32 0, %v486
        %v488 = vrot.slane %v483, %v487
        %v490 = vadd.f32 %v451, %v488
        %v491 = vadd.f32 %v452, %v488
        %v492 = vadd.f32 %v453, %v488
        %v493 = vadd.f32 %v454, %v488
        %v494 = vadd.f32 %v455, %v488
        %v495 = vadd.f32 %v456, %v488
        %v496 = vadd.f32 %v457, %v488
        %v497 = vadd.f32 %v458, %v488
        %v498 = vadd.f32 %v459, %v488
        %v499 = vadd.f32 %v460, %v488
        %v500 = vadd.f32 %v461, %v488
        %v501 = vadd.f32 %v462, %v488
        %v502 = vadd.f32 %v463, %v488
        %v503 = vadd.f32 %v464, %v488
        %v504 = vadd.f32 %v465, %v488
        %v505 = vadd.f32 %v466, %v488
        %v506 = vadd.f32 %v467, %v488
        %v507 = vadd.f32 %v468, %v488
        %v508 = vadd.f32 %v469, %v488
        %v509 = vadd.f32 %v470, %v488
        %v510 = vadd.f32 %v471, %v488
        %v511 = vadd.f32 %v472, %v488
        %v512 = vadd.f32 %v473, %v488
        %v513 = vadd.f32 %v474, %v488
        %v514 = vadd.f32 %v475, %v488
        %v515 = vadd.f32 %v476, %v488
        %v516 = vadd.f32 %v477, %v488
        %v517 = vadd.f32 %v478, %v488
        %v518 = vadd.f32 %v479, %v488
        %v519 = vadd.f32 %v480, %v488
        %v520 = vadd.f32 %v481, %v488
        %v521 = vadd.f32 %v482, %v488
        %v522 = vmax.f32 %v490, 0.0
        %v523 = vmax.f32 %v491, 0.0
        %v524 = vmax.f32 %v492, 0.0
        %v525 = vmax.f32 %v493, 0.0
        %v526 = vmax.f32 %v494, 0.0
        %v527 = vmax.f32 %v495, 0.0
        %v528 = vmax.f32 %v496, 0.0
        %v529 = vmax.f32 %v497, 0.0
        %v530 = vmax.f32 %v498, 0.0
        %v531 = vmax.f32 %v499, 0.0
        %v532 = vmax.f32 %v500, 0.0
        %v533 = vmax.f32 %v501, 0.0
        %v534 = vmax.f32 %v502, 0.0
        %v535 = vmax.f32 %v503, 0.0
        %v536 = vmax.f32 %v504, 0.0
        %v537 = vmax.f32 %v505, 0.0
        %v538 = vmax.f32 %v506, 0.0
        %v539 = vmax.f32 %v507, 0.0
        %v540 = vmax.f32 %v508, 0.0
        %v541 = vmax.f32 %v509, 0.0
        %v542 = vmax.f32 %v510, 0.0
        %v543 = vmax.f32 %v511, 0.0
        %v544 = vmax.f32 %v512, 0.0
        %v545 = vmax.f32 %v513, 0.0
        %v546 = vmax.f32 %v514, 0.0
        %v547 = vmax.f32 %v515, 0.0
        %v548 = vmax.f32 %v516, 0.0
        %v549 = vmax.f32 %v517, 0.0
        %v550 = vmax.f32 %v518, 0.0
        %v551 = vmax.f32 %v519, 0.0
        %v552 = vmax.f32 %v520, 0.0
        %v553 = vmax.f32 %v521, 0.0
        %v554 = vpack.c.bf16 %v523, %v522
        %v555 = vpack.c.bf16 %v525, %v524
        %v556 = vpack.c.bf16 %v527, %v526
        %v557 = vpack.c.bf16 %v529, %v528
        %v558 = vpack.c.bf16 %v531, %v530
        %v559 = vpack.c.bf16 %v533, %v532
        %v560 = vpack.c.bf16 %v535, %v534
        %v561 = vpack.c.bf16 %v537, %v536
        %v562 = vpack.c.bf16 %v539, %v538
        %v563 = vpack.c.bf16 %v541, %v540
        %v564 = vpack.c.bf16 %v543, %v542
        %v565 = vpack.c.bf16 %v545, %v544
        %v566 = vpack.c.bf16 %v547, %v546
        %v567 = vpack.c.bf16 %v549, %v548
        %v568 = vpack.c.bf16 %v551, %v550
        %v569 = vpack.c.bf16 %v553, %v552
        %570 = vst [vmem:[#allocation2] sm:$0xf] 0
        %571 = vst [vmem:[#allocation2 + $0x4] sm:$0xf] 0
        %572 = vst [vmem:[#allocation2 + $0x8] sm:$0x1] 0
        %s573 = scalar_lea.vmem [#allocation2], 204
        %574 = vst [vmem:[%s573] sm:$0xf] 0
        %575 = vst [vmem:[%s573 + $0x4] sm:$0xf] 0
        %576 = vst [vmem:[%s573 + $0x8] sm:$0x1] 0
        %vm577 = vcmask 1040384
        %vm578 = vsmask.f32 256
        %vm579 = vmand %vm577, %vm578
        %v580 = vld [vmem:[#allocation2] sm:$0x1]
        %v581 = vsel %vm579, 0, %v580
        %582 = vst [vmem:[#allocation2] sm:$0x1] %v581
        %v583 = vld [vmem:[#allocation2 + $0xc] sm:$0x1]
        %v584 = vsel %vm579, 0, %v583
        %585 = vst [vmem:[#allocation2 + $0xc] sm:$0x1] %v584
        %v586 = vld [vmem:[#allocation2 + $0x18] sm:$0x1]
        %v587 = vsel %vm579, 0, %v586
        %588 = vst [vmem:[#allocation2 + $0x18] sm:$0x1] %v587
        %v589 = vld [vmem:[#allocation2 + $0x24] sm:$0x1]
        %v590 = vsel %vm579, 0, %v589
        %591 = vst [vmem:[#allocation2 + $0x24] sm:$0x1] %v590
        %v592 = vld [vmem:[#allocation2 + $0x30] sm:$0x1]
        %v593 = vsel %vm579, 0, %v592
        %594 = vst [vmem:[#allocation2 + $0x30] sm:$0x1] %v593
        %v595 = vld [vmem:[#allocation2 + $0x3c] sm:$0x1]
        %v596 = vsel %vm579, 0, %v595
        %597 = vst [vmem:[#allocation2 + $0x3c] sm:$0x1] %v596
        %v598 = vld [vmem:[#allocation2 + $0x48] sm:$0x1]
        %v599 = vsel %vm579, 0, %v598
        %600 = vst [vmem:[#allocation2 + $0x48] sm:$0x1] %v599
        %v601 = vld [vmem:[#allocation2 + $0x54] sm:$0x1]
        %v602 = vsel %vm579, 0, %v601
        %603 = vst [vmem:[#allocation2 + $0x54] sm:$0x1] %v602
        %v604 = vld [vmem:[#allocation2 + $0x60] sm:$0x1]
        %v605 = vsel %vm579, 0, %v604
        %606 = vst [vmem:[#allocation2 + $0x60] sm:$0x1] %v605
        %v607 = vld [vmem:[#allocation2 + $0x6c] sm:$0x1]
        %v608 = vsel %vm579, 0, %v607
        %609 = vst [vmem:[#allocation2 + $0x6c] sm:$0x1] %v608
        %v610 = vld [vmem:[#allocation2 + $0x78] sm:$0x1]
        %v611 = vsel %vm579, 0, %v610
        %612 = vst [vmem:[#allocation2 + $0x78] sm:$0x1] %v611
        %v613 = vld [vmem:[#allocation2 + $0x84] sm:$0x1]
        %v614 = vsel %vm579, 0, %v613
        %615 = vst [vmem:[#allocation2 + $0x84] sm:$0x1] %v614
        %v616 = vld [vmem:[#allocation2 + $0x90] sm:$0x1]
        %v617 = vsel %vm579, 0, %v616
        %618 = vst [vmem:[#allocation2 + $0x90] sm:$0x1] %v617
        %v619 = vld [vmem:[#allocation2 + $0x9c] sm:$0x1]
        %v620 = vsel %vm579, 0, %v619
        %621 = vst [vmem:[#allocation2 + $0x9c] sm:$0x1] %v620
        %v622 = vld [vmem:[#allocation2 + $0xa8] sm:$0x1]
        %v623 = vsel %vm579, 0, %v622
        %624 = vst [vmem:[#allocation2 + $0xa8] sm:$0x1] %v623
        %v625 = vld [vmem:[#allocation2 + $0xb4] sm:$0x1]
        %v626 = vsel %vm579, 0, %v625
        %627 = vst [vmem:[#allocation2 + $0xb4] sm:$0x1] %v626
        %v628 = vld [vmem:[#allocation2 + $0xc0] sm:$0x1]
        %v629 = vsel %vm579, 0, %v628
        %630 = vst [vmem:[#allocation2 + $0xc0] sm:$0x1] %v629
        %v631 = vld [vmem:[#allocation2 + $0xcc] sm:$0x1]
        %v632 = vsel %vm579, 0, %v631
        %633 = vst [vmem:[#allocation2 + $0xcc] sm:$0x1] %v632
        %vm634 = vsmask.f32 7938
        %vm635 = vmand %vm577, %vm634
        %v636 = vld [vmem:[#allocation2 + $0x8] sm:$0x1]
        %v637 = vsel %vm635, 0, %v636
        %638 = vst [vmem:[#allocation2 + $0x8] sm:$0x1] %v637
        %v639 = vld [vmem:[#allocation2 + $0x14] sm:$0x1]
        %v640 = vsel %vm635, 0, %v639
        %641 = vst [vmem:[#allocation2 + $0x14] sm:$0x1] %v640
        %v642 = vld [vmem:[#allocation2 + $0x20] sm:$0x1]
        %v643 = vsel %vm635, 0, %v642
        %644 = vst [vmem:[#allocation2 + $0x20] sm:$0x1] %v643
        %v645 = vld [vmem:[#allocation2 + $0x2c] sm:$0x1]
        %v646 = vsel %vm635, 0, %v645
        %647 = vst [vmem:[#allocation2 + $0x2c] sm:$0x1] %v646
        %v648 = vld [vmem:[#allocation2 + $0x38] sm:$0x1]
        %v649 = vsel %vm635, 0, %v648
        %650 = vst [vmem:[#allocation2 + $0x38] sm:$0x1] %v649
        %v651 = vld [vmem:[#allocation2 + $0x44] sm:$0x1]
        %v652 = vsel %vm635, 0, %v651
        %653 = vst [vmem:[#allocation2 + $0x44] sm:$0x1] %v652
        %v654 = vld [vmem:[#allocation2 + $0x50] sm:$0x1]
        %v655 = vsel %vm635, 0, %v654
        %656 = vst [vmem:[#allocation2 + $0x50] sm:$0x1] %v655
        %v657 = vld [vmem:[#allocation2 + $0x5c] sm:$0x1]
        %v658 = vsel %vm635, 0, %v657
        %659 = vst [vmem:[#allocation2 + $0x5c] sm:$0x1] %v658
        %v660 = vld [vmem:[#allocation2 + $0x68] sm:$0x1]
        %v661 = vsel %vm635, 0, %v660
        %662 = vst [vmem:[#allocation2 + $0x68] sm:$0x1] %v661
        %v663 = vld [vmem:[#allocation2 + $0x74] sm:$0x1]
        %v664 = vsel %vm635, 0, %v663
        %665 = vst [vmem:[#allocation2 + $0x74] sm:$0x1] %v664
        %v666 = vld [vmem:[#allocation2 + $0x80] sm:$0x1]
        %v667 = vsel %vm635, 0, %v666
        %668 = vst [vmem:[#allocation2 + $0x80] sm:$0x1] %v667
        %v669 = vld [vmem:[#allocation2 + $0x8c] sm:$0x1]
        %v670 = vsel %vm635, 0, %v669
        %671 = vst [vmem:[#allocation2 + $0x8c] sm:$0x1] %v670
        %v672 = vld [vmem:[#allocation2 + $0x98] sm:$0x1]
        %v673 = vsel %vm635, 0, %v672
        %674 = vst [vmem:[#allocation2 + $0x98] sm:$0x1] %v673
        %v675 = vld [vmem:[#allocation2 + $0xa4] sm:$0x1]
        %v676 = vsel %vm635, 0, %v675
        %677 = vst [vmem:[#allocation2 + $0xa4] sm:$0x1] %v676
        %v678 = vld [vmem:[#allocation2 + $0xb0] sm:$0x1]
        %v679 = vsel %vm635, 0, %v678
        %680 = vst [vmem:[#allocation2 + $0xb0] sm:$0x1] %v679
        %v681 = vld [vmem:[#allocation2 + $0xbc] sm:$0x1]
        %v682 = vsel %vm635, 0, %v681
        %683 = vst [vmem:[#allocation2 + $0xbc] sm:$0x1] %v682
        %v684 = vld [vmem:[#allocation2 + $0xc8] sm:$0x1]
        %v685 = vsel %vm635, 0, %v684
        %686 = vst [vmem:[#allocation2 + $0xc8] sm:$0x1] %v685
        %v687 = vld [vmem:[#allocation2 + $0xd4] sm:$0x1]
        %v688 = vsel %vm635, 0, %v687
        %689 = vst [vmem:[#allocation2 + $0xd4] sm:$0x1] %v688
        %v706 = vunpack.c.l.b16 %v554
        %v707 = vunpack.c.h.b16 %v554
        %v708 = vunpack.c.l.b16 %v555
        %v709 = vunpack.c.h.b16 %v555
        %v710 = vunpack.c.l.b16 %v556
        %v711 = vunpack.c.h.b16 %v556
        %v712 = vunpack.c.l.b16 %v557
        %v713 = vunpack.c.h.b16 %v557
        %v714 = vunpack.c.l.b16 %v558
        %v715 = vunpack.c.h.b16 %v558
        %v716 = vunpack.c.l.b16 %v559
        %v717 = vunpack.c.h.b16 %v559
        %v718 = vunpack.c.l.b16 %v560
        %v719 = vunpack.c.h.b16 %v560
        %v720 = vunpack.c.l.b16 %v561
        %v721 = vunpack.c.h.b16 %v561
        %v722 = vunpack.c.l.b16 %v562
        %v723 = vunpack.c.h.b16 %v562
        %v724 = vunpack.c.l.b16 %v563
        %v725 = vunpack.c.h.b16 %v563
        %v726 = vunpack.c.l.b16 %v564
        %v727 = vunpack.c.h.b16 %v564
        %v728 = vunpack.c.l.b16 %v565
        %v729 = vunpack.c.h.b16 %v565
        %v730 = vunpack.c.l.b16 %v566
        %v731 = vunpack.c.h.b16 %v566
        %v732 = vunpack.c.l.b16 %v567
        %v733 = vunpack.c.h.b16 %v567
        %v734 = vunpack.c.l.b16 %v568
        %v735 = vunpack.c.h.b16 %v568
        %v736 = vunpack.c.l.b16 %v569
        %v737 = vunpack.c.h.b16 %v569
        %v738 = vpack.c.b16 %v706, %v706
        %v739 = vpack.c.b16 %v707, %v707
        %v740 = vpack.c.b16 %v708, %v708
        %v741 = vpack.c.b16 %v709, %v709
        %v742 = vpack.c.b16 %v710, %v710
        %v743 = vpack.c.b16 %v711, %v711
        %v744 = vpack.c.b16 %v712, %v712
        %v745 = vpack.c.b16 %v713, %v713
        %v746 = vpack.c.b16 %v714, %v714
        %v747 = vpack.c.b16 %v715, %v715
        %v748 = vpack.c.b16 %v716, %v716
        %v749 = vpack.c.b16 %v717, %v717
        %v750 = vpack.c.b16 %v718, %v718
        %v751 = vpack.c.b16 %v719, %v719
        %v752 = vpack.c.b16 %v720, %v720
        %v753 = vpack.c.b16 %v721, %v721
        %v754 = vpack.c.b16 %v722, %v722
        %v755 = vpack.c.b16 %v723, %v723
        %v756 = vpack.c.b16 %v724, %v724
        %v757 = vpack.c.b16 %v725, %v725
        %v758 = vpack.c.b16 %v726, %v726
        %v759 = vpack.c.b16 %v727, %v727
        %v760 = vpack.c.b16 %v728, %v728
        %v761 = vpack.c.b16 %v729, %v729
        %v762 = vpack.c.b16 %v730, %v730
        %v763 = vpack.c.b16 %v731, %v731
        %v764 = vpack.c.b16 %v732, %v732
        %v765 = vpack.c.b16 %v733, %v733
        %v766 = vpack.c.b16 %v734, %v734
        %v767 = vpack.c.b16 %v735, %v735
        %v768 = vpack.c.b16 %v736, %v736
        %v769 = vpack.c.b16 %v737, %v737
        %vm770 = vsmask.f32 4368
        %vm771 = vmor %vm578, %vm770
        %v773 = vshrl.u32 %v738, 16
        %v775 = vrot.slane %v773, 7
        %v776 = vshll.u32 %v738, 16
        %v778 = vor.u32 %v775, %v776
        %v779 = vrot.slane %v775, 4
        %v781 = vshrl.u32 %v739, 16
        %v783 = vrot.slane %v781, 7
        %v784 = vshll.u32 %v739, 16
        %v786 = vor.u32 %v783, %v784
        %v787 = vsel %vm771, %v779, %v786
        %v788 = vrot.slane %v783, 4
        %v790 = vshrl.u32 %v740, 16
        %v792 = vrot.slane %v790, 7
        %v793 = vshll.u32 %v740, 16
        %v795 = vor.u32 %v792, %v793
        %v796 = vrot.slane %v792, 4
        %v798 = vshrl.u32 %v741, 16
        %v800 = vrot.slane %v798, 7
        %v801 = vshll.u32 %v741, 16
        %v803 = vor.u32 %v800, %v801
        %v804 = vsel %vm771, %v796, %v803
        %v805 = vrot.slane %v800, 4
        %v807 = vshrl.u32 %v742, 16
        %v809 = vrot.slane %v807, 7
        %v810 = vshll.u32 %v742, 16
        %v812 = vor.u32 %v809, %v810
        %v813 = vrot.slane %v809, 4
        %v815 = vshrl.u32 %v743, 16
        %v817 = vrot.slane %v815, 7
        %v818 = vshll.u32 %v743, 16
        %v820 = vor.u32 %v817, %v818
        %v821 = vsel %vm771, %v813, %v820
        %v822 = vrot.slane %v817, 4
        %v824 = vshrl.u32 %v744, 16
        %v826 = vrot.slane %v824, 7
        %v827 = vshll.u32 %v744, 16
        %v829 = vor.u32 %v826, %v827
        %v830 = vrot.slane %v826, 4
        %v832 = vshrl.u32 %v745, 16
        %v834 = vrot.slane %v832, 7
        %v835 = vshll.u32 %v745, 16
        %v837 = vor.u32 %v834, %v835
        %v838 = vsel %vm771, %v830, %v837
        %v839 = vrot.slane %v834, 4
        %v841 = vshrl.u32 %v746, 16
        %v843 = vrot.slane %v841, 7
        %v844 = vshll.u32 %v746, 16
        %v846 = vor.u32 %v843, %v844
        %v847 = vrot.slane %v843, 4
        %v849 = vshrl.u32 %v747, 16
        %v851 = vrot.slane %v849, 7
        %v852 = vshll.u32 %v747, 16
        %v854 = vor.u32 %v851, %v852
        %v855 = vsel %vm771, %v847, %v854
        %v856 = vrot.slane %v851, 4
        %v858 = vshrl.u32 %v748, 16
        %v860 = vrot.slane %v858, 7
        %v861 = vshll.u32 %v748, 16
        %v863 = vor.u32 %v860, %v861
        %v864 = vrot.slane %v860, 4
        %v866 = vshrl.u32 %v749, 16
        %v868 = vrot.slane %v866, 7
        %v869 = vshll.u32 %v749, 16
        %v871 = vor.u32 %v868, %v869
        %v872 = vsel %vm771, %v864, %v871
        %v873 = vrot.slane %v868, 4
        %v875 = vshrl.u32 %v750, 16
        %v877 = vrot.slane %v875, 7
        %v878 = vshll.u32 %v750, 16
        %v880 = vor.u32 %v877, %v878
        %v881 = vrot.slane %v877, 4
        %v883 = vshrl.u32 %v751, 16
        %v885 = vrot.slane %v883, 7
        %v886 = vshll.u32 %v751, 16
        %v888 = vor.u32 %v885, %v886
        %v889 = vsel %vm771, %v881, %v888
        %v890 = vrot.slane %v885, 4
        %v892 = vshrl.u32 %v752, 16
        %v894 = vrot.slane %v892, 7
        %v895 = vshll.u32 %v752, 16
        %v897 = vor.u32 %v894, %v895
        %v898 = vrot.slane %v894, 4
        %v900 = vshrl.u32 %v753, 16
        %v902 = vrot.slane %v900, 7
        %v903 = vshll.u32 %v753, 16
        %v905 = vor.u32 %v902, %v903
        %v906 = vsel %vm771, %v898, %v905
        %v907 = vrot.slane %v902, 4
        %v909 = vshrl.u32 %v754, 16
        %v911 = vrot.slane %v909, 7
        %v912 = vshll.u32 %v754, 16
        %v914 = vor.u32 %v911, %v912
        %v915 = vrot.slane %v911, 4
        %v917 = vshrl.u32 %v755, 16
        %v919 = vrot.slane %v917, 7
        %v920 = vshll.u32 %v755, 16
        %v922 = vor.u32 %v919, %v920
        %v923 = vsel %vm771, %v915, %v922
        %v924 = vrot.slane %v919, 4
        %v926 = vshrl.u32 %v756, 16
        %v928 = vrot.slane %v926, 7
        %v929 = vshll.u32 %v756, 16
        %v931 = vor.u32 %v928, %v929
        %v932 = vrot.slane %v928, 4
        %v934 = vshrl.u32 %v757, 16
        %v936 = vrot.slane %v934, 7
        %v937 = vshll.u32 %v757, 16
        %v939 = vor.u32 %v936, %v937
        %v940 = vsel %vm771, %v932, %v939
        %v941 = vrot.slane %v936, 4
        %v943 = vshrl.u32 %v758, 16
        %v945 = vrot.slane %v943, 7
        %v946 = vshll.u32 %v758, 16
        %v948 = vor.u32 %v945, %v946
        %v949 = vrot.slane %v945, 4
        %v951 = vshrl.u32 %v759, 16
        %v953 = vrot.slane %v951, 7
        %v954 = vshll.u32 %v759, 16
        %v956 = vor.u32 %v953, %v954
        %v957 = vsel %vm771, %v949, %v956
        %v958 = vrot.slane %v953, 4
        %v960 = vshrl.u32 %v760, 16
        %v962 = vrot.slane %v960, 7
        %v963 = vshll.u32 %v760, 16
        %v965 = vor.u32 %v962, %v963
        %v966 = vrot.slane %v962, 4
        %v968 = vshrl.u32 %v761, 16
        %v970 = vrot.slane %v968, 7
        %v971 = vshll.u32 %v761, 16
        %v973 = vor.u32 %v970, %v971
        %v974 = vsel %vm771, %v966, %v973
        %v975 = vrot.slane %v970, 4
        %v977 = vshrl.u32 %v762, 16
        %v979 = vrot.slane %v977, 7
        %v980 = vshll.u32 %v762, 16
        %v982 = vor.u32 %v979, %v980
        %v983 = vrot.slane %v979, 4
        %v985 = vshrl.u32 %v763, 16
        %v987 = vrot.slane %v985, 7
        %v988 = vshll.u32 %v763, 16
        %v990 = vor.u32 %v987, %v988
        %v991 = vsel %vm771, %v983, %v990
        %v992 = vrot.slane %v987, 4
        %v994 = vshrl.u32 %v764, 16
        %v996 = vrot.slane %v994, 7
        %v997 = vshll.u32 %v764, 16
        %v999 = vor.u32 %v996, %v997
        %v1000 = vrot.slane %v996, 4
        %v1002 = vshrl.u32 %v765, 16
        %v1004 = vrot.slane %v1002, 7
        %v1005 = vshll.u32 %v765, 16
        %v1007 = vor.u32 %v1004, %v1005
        %v1008 = vsel %vm771, %v1000, %v1007
        %v1009 = vrot.slane %v1004, 4
        %v1011 = vshrl.u32 %v766, 16
        %v1013 = vrot.slane %v1011, 7
        %v1014 = vshll.u32 %v766, 16
        %v1016 = vor.u32 %v1013, %v1014
        %v1017 = vrot.slane %v1013, 4
        %v1019 = vshrl.u32 %v767, 16
        %v1021 = vrot.slane %v1019, 7
        %v1022 = vshll.u32 %v767, 16
        %v1024 = vor.u32 %v1021, %v1022
        %v1025 = vsel %vm771, %v1017, %v1024
        %v1026 = vrot.slane %v1021, 4
        %v1028 = vshrl.u32 %v768, 16
        %v1030 = vrot.slane %v1028, 7
        %v1031 = vshll.u32 %v768, 16
        %v1033 = vor.u32 %v1030, %v1031
        %v1034 = vrot.slane %v1030, 4
        %v1036 = vshrl.u32 %v769, 16
        %v1038 = vrot.slane %v1036, 7
        %v1039 = vshll.u32 %v769, 16
        %v1041 = vor.u32 %v1038, %v1039
        %v1042 = vsel %vm771, %v1034, %v1041
        %v1043 = vrot.slane %v1038, 4
        %s1092 = scalar_lea.vmem [#allocation2], 12
        %vm1093 = vcmask 1043456
        %vm1094 = vmand %vm1093, %vm634
        %v1095 = vld [vmem:[%s1092] sm:$0xf]
        %v1096 = vsel %vm1094, %v778, %v1095
        %1097 = vst [vmem:[%s1092] sm:$0xf] %v1096
        %1098 = vst [vmem:[%s1092 + $0x4] sm:$0xf] %v787
        %v1099 = vld [vmem:[%s1092 + $0x8] sm:$0x1]
        %v1100 = vsel %vm579, %v788, %v1099
        %1101 = vst [vmem:[%s1092 + $0x8] sm:$0x1] %v1100
        %v1102 = vld [vmem:[%s1092 + $0xc] sm:$0xf]
        %v1103 = vsel %vm1094, %v795, %v1102
        %1104 = vst [vmem:[%s1092 + $0xc] sm:$0xf] %v1103
        %1105 = vst [vmem:[%s1092 + $0x10] sm:$0xf] %v804
        %v1106 = vld [vmem:[%s1092 + $0x14] sm:$0x1]
        %v1107 = vsel %vm579, %v805, %v1106
        %1108 = vst [vmem:[%s1092 + $0x14] sm:$0x1] %v1107
        %v1109 = vld [vmem:[%s1092 + $0x18] sm:$0xf]
        %v1110 = vsel %vm1094, %v812, %v1109
        %1111 = vst [vmem:[%s1092 + $0x18] sm:$0xf] %v1110
        %1112 = vst [vmem:[%s1092 + $0x1c] sm:$0xf] %v821
        %v1113 = vld [vmem:[%s1092 + $0x20] sm:$0x1]
        %v1114 = vsel %vm579, %v822, %v1113
        %1115 = vst [vmem:[%s1092 + $0x20] sm:$0x1] %v1114
        %v1116 = vld [vmem:[%s1092 + $0x24] sm:$0xf]
        %v1117 = vsel %vm1094, %v829, %v1116
        %1118 = vst [vmem:[%s1092 + $0x24] sm:$0xf] %v1117
        %1119 = vst [vmem:[%s1092 + $0x28] sm:$0xf] %v838
        %v1120 = vld [vmem:[%s1092 + $0x2c] sm:$0x1]
        %v1121 = vsel %vm579, %v839, %v1120
        %1122 = vst [vmem:[%s1092 + $0x2c] sm:$0x1] %v1121
        %v1123 = vld [vmem:[%s1092 + $0x30] sm:$0xf]
        %v1124 = vsel %vm1094, %v846, %v1123
        %1125 = vst [vmem:[%s1092 + $0x30] sm:$0xf] %v1124
        %1126 = vst [vmem:[%s1092 + $0x34] sm:$0xf] %v855
        %v1127 = vld [vmem:[%s1092 + $0x38] sm:$0x1]
        %v1128 = vsel %vm579, %v856, %v1127
        %1129 = vst [vmem:[%s1092 + $0x38] sm:$0x1] %v1128
        %v1130 = vld [vmem:[%s1092 + $0x3c] sm:$0xf]
        %v1131 = vsel %vm1094, %v863, %v1130
        %1132 = vst [vmem:[%s1092 + $0x3c] sm:$0xf] %v1131
        %1133 = vst [vmem:[%s1092 + $0x40] sm:$0xf] %v872
        %v1134 = vld [vmem:[%s1092 + $0x44] sm:$0x1]
        %v1135 = vsel %vm579, %v873, %v1134
        %1136 = vst [vmem:[%s1092 + $0x44] sm:$0x1] %v1135
        %v1137 = vld [vmem:[%s1092 + $0x48] sm:$0xf]
        %v1138 = vsel %vm1094, %v880, %v1137
        %1139 = vst [vmem:[%s1092 + $0x48] sm:$0xf] %v1138
        %1140 = vst [vmem:[%s1092 + $0x4c] sm:$0xf] %v889
        %v1141 = vld [vmem:[%s1092 + $0x50] sm:$0x1]
        %v1142 = vsel %vm579, %v890, %v1141
        %1143 = vst [vmem:[%s1092 + $0x50] sm:$0x1] %v1142
        %v1144 = vld [vmem:[%s1092 + $0x54] sm:$0xf]
        %v1145 = vsel %vm1094, %v897, %v1144
        %1146 = vst [vmem:[%s1092 + $0x54] sm:$0xf] %v1145
        %1147 = vst [vmem:[%s1092 + $0x58] sm:$0xf] %v906
        %v1148 = vld [vmem:[%s1092 + $0x5c] sm:$0x1]
        %v1149 = vsel %vm579, %v907, %v1148
        %1150 = vst [vmem:[%s1092 + $0x5c] sm:$0x1] %v1149
        %v1151 = vld [vmem:[%s1092 + $0x60] sm:$0xf]
        %v1152 = vsel %vm1094, %v914, %v1151
        %1153 = vst [vmem:[%s1092 + $0x60] sm:$0xf] %v1152
        %1154 = vst [vmem:[%s1092 + $0x64] sm:$0xf] %v923
        %v1155 = vld [vmem:[%s1092 + $0x68] sm:$0x1]
        %v1156 = vsel %vm579, %v924, %v1155
        %1157 = vst [vmem:[%s1092 + $0x68] sm:$0x1] %v1156
        %v1158 = vld [vmem:[%s1092 + $0x6c] sm:$0xf]
        %v1159 = vsel %vm1094, %v931, %v1158
        %1160 = vst [vmem:[%s1092 + $0x6c] sm:$0xf] %v1159
        %1161 = vst [vmem:[%s1092 + $0x70] sm:$0xf] %v940
        %v1162 = vld [vmem:[%s1092 + $0x74] sm:$0x1]
        %v1163 = vsel %vm579, %v941, %v1162
        %1164 = vst [vmem:[%s1092 + $0x74] sm:$0x1] %v1163
        %v1165 = vld [vmem:[%s1092 + $0x78] sm:$0xf]
        %v1166 = vsel %vm1094, %v948, %v1165
        %1167 = vst [vmem:[%s1092 + $0x78] sm:$0xf] %v1166
        %1168 = vst [vmem:[%s1092 + $0x7c] sm:$0xf] %v957
        %v1169 = vld [vmem:[%s1092 + $0x80] sm:$0x1]
        %v1170 = vsel %vm579, %v958, %v1169
        %1171 = vst [vmem:[%s1092 + $0x80] sm:$0x1] %v1170
        %v1172 = vld [vmem:[%s1092 + $0x84] sm:$0xf]
        %v1173 = vsel %vm1094, %v965, %v1172
        %1174 = vst [vmem:[%s1092 + $0x84] sm:$0xf] %v1173
        %1175 = vst [vmem:[%s1092 + $0x88] sm:$0xf] %v974
        %v1176 = vld [vmem:[%s1092 + $0x8c] sm:$0x1]
        %v1177 = vsel %vm579, %v975, %v1176
        %1178 = vst [vmem:[%s1092 + $0x8c] sm:$0x1] %v1177
        %v1179 = vld [vmem:[%s1092 + $0x90] sm:$0xf]
        %v1180 = vsel %vm1094, %v982, %v1179
        %1181 = vst [vmem:[%s1092 + $0x90] sm:$0xf] %v1180
        %1182 = vst [vmem:[%s1092 + $0x94] sm:$0xf] %v991
        %v1183 = vld [vmem:[%s1092 + $0x98] sm:$0x1]
        %v1184 = vsel %vm579, %v992, %v1183
        %1185 = vst [vmem:[%s1092 + $0x98] sm:$0x1] %v1184
        %v1186 = vld [vmem:[%s1092 + $0x9c] sm:$0xf]
        %v1187 = vsel %vm1094, %v999, %v1186
        %1188 = vst [vmem:[%s1092 + $0x9c] sm:$0xf] %v1187
        %1189 = vst [vmem:[%s1092 + $0xa0] sm:$0xf] %v1008
        %v1190 = vld [vmem:[%s1092 + $0xa4] sm:$0x1]
        %v1191 = vsel %vm579, %v1009, %v1190
        %1192 = vst [vmem:[%s1092 + $0xa4] sm:$0x1] %v1191
        %v1193 = vld [vmem:[%s1092 + $0xa8] sm:$0xf]
        %v1194 = vsel %vm1094, %v1016, %v1193
        %1195 = vst [vmem:[%s1092 + $0xa8] sm:$0xf] %v1194
        %1196 = vst [vmem:[%s1092 + $0xac] sm:$0xf] %v1025
        %v1197 = vld [vmem:[%s1092 + $0xb0] sm:$0x1]
        %v1198 = vsel %vm579, %v1026, %v1197
        %1199 = vst [vmem:[%s1092 + $0xb0] sm:$0x1] %v1198
        %v1200 = vld [vmem:[%s1092 + $0xb4] sm:$0xf]
        %v1201 = vsel %vm1094, %v1033, %v1200
        %1202 = vst [vmem:[%s1092 + $0xb4] sm:$0xf] %v1201
        %1203 = vst [vmem:[%s1092 + $0xb8] sm:$0xf] %v1042
        %v1204 = vld [vmem:[%s1092 + $0xbc] sm:$0x1]
        %v1205 = vsel %vm579, %v1043, %v1204
        %1206 = vst [vmem:[%s1092 + $0xbc] sm:$0x1] %v1205
        %v1207 = vld [vmem:[#allocation8] sm:$0xf]
        %v1208 = vld [vmem:[#allocation8 + $0x4] sm:$0xf]
        %v1209 = vld [vmem:[#allocation8 + $0x8] sm:$0xf]
        %v1210 = vld [vmem:[#allocation8 + $0xc] sm:$0xf]
        %v1211 = vld [vmem:[#allocation8 + $0x10] sm:$0xf]
        %v1212 = vld [vmem:[#allocation8 + $0x14] sm:$0xf]
        %v1213 = vld [vmem:[#allocation8 + $0x18] sm:$0xf]
        %v1214 = vld [vmem:[#allocation8 + $0x1c] sm:$0xf]
        %v1215 = vld [vmem:[#allocation8 + $0x20] sm:$0xf]
        %v1216 = vld [vmem:[#allocation8 + $0x24] sm:$0xf]
        %v1217 = vld [vmem:[#allocation8 + $0x28] sm:$0xf]
        %v1218 = vld [vmem:[#allocation8 + $0x2c] sm:$0xf]
        %v1219 = vld [vmem:[#allocation8 + $0x30] sm:$0xf]
        %v1220 = vld [vmem:[#allocation8 + $0x34] sm:$0xf]
        %v1221 = vld [vmem:[#allocation8 + $0x38] sm:$0xf]
        %v1222 = vld [vmem:[#allocation8 + $0x3c] sm:$0xf]
        %v1239 = vunpack.c.l.b16 %v1207
        %v1240 = vunpack.c.l.b16 %v1208
        %v1241 = vunpack.c.l.b16 %v1209
        %v1242 = vunpack.c.l.b16 %v1210
        %v1243 = vunpack.c.l.b16 %v1211
        %v1244 = vunpack.c.l.b16 %v1212
        %v1245 = vunpack.c.l.b16 %v1213
        %v1246 = vunpack.c.l.b16 %v1214
        %v1247 = vunpack.c.l.b16 %v1215
        %v1248 = vunpack.c.l.b16 %v1216
        %v1249 = vunpack.c.l.b16 %v1217
        %v1250 = vunpack.c.l.b16 %v1218
        %v1251 = vunpack.c.l.b16 %v1219
        %v1252 = vunpack.c.l.b16 %v1220
        %v1253 = vunpack.c.l.b16 %v1221
        %v1254 = vunpack.c.l.b16 %v1222
        %v1255 = vpack.c.b16 %v1240, %v1239
        %v1256 = vpack.c.b16 %v1242, %v1241
        %v1257 = vpack.c.b16 %v1244, %v1243
        %v1258 = vpack.c.b16 %v1246, %v1245
        %v1259 = vpack.c.b16 %v1248, %v1247
        %v1260 = vpack.c.b16 %v1250, %v1249
        %v1261 = vpack.c.b16 %v1252, %v1251
        %v1262 = vpack.c.b16 %v1254, %v1253
        %1271 = vmatprep.subr.bf16.mxu0 0
        %1272 = vmatpush1.bf16.msra.mxu0 %v1255
        %1273 = vmatprep.subr.bf16.mxu0 0
        %1274 = vmatpush1.bf16.msra.mxu0 %v1256
        %1275 = vmatprep.subr.bf16.mxu0 0
        %1276 = vmatpush1.bf16.msra.mxu0 %v1257
        %1277 = vmatprep.subr.bf16.mxu0 0
        %1278 = vmatpush1.bf16.msra.mxu0 %v1258
        %1279 = vmatprep.subr.bf16.mxu0 0
        %1280 = vmatpush1.bf16.msra.mxu0 %v1259
        %1281 = vmatprep.subr.bf16.mxu0 0
        %1282 = vmatpush1.bf16.msra.mxu0 %v1260
        %1283 = vmatprep.subr.bf16.mxu0 0
        %1284 = vmatpush1.bf16.msra.mxu0 %v1261
        %1285 = vmatprep.subr.bf16.mxu0 0
        %1286 = vmatpush1.bf16.msra.mxu0 %v1262
        %1287 = vmatprep.subr.bf16.mxu0 0
        %1288 = vmatpush1.bf16.msra.mxu0 0
        %1289 = vmatprep.subr.bf16.mxu0 0
        %1290 = vmatpush1.bf16.msra.mxu0 0
        %1291 = vmatprep.subr.bf16.mxu0 0
        %1292 = vmatpush1.bf16.msra.mxu0 0
        %1293 = vmatprep.subr.bf16.mxu0 0
        %1294 = vmatpush1.bf16.msra.mxu0 0
        %1295 = vmatprep.subr.bf16.mxu0 0
        %1296 = vmatpush1.bf16.msra.mxu0 0
        %1297 = vmatprep.subr.bf16.mxu0 0
        %1298 = vmatpush1.bf16.msra.mxu0 0
        %1299 = vmatprep.subr.bf16.mxu0 0
        %1300 = vmatpush1.bf16.msra.mxu0 0
        %1301 = vmatprep.subr.bf16.mxu0 0
        %1302 = vmatpush1.bf16.msra.mxu0 0
        %1303 = vmatprep.mubr.bf16.mxu0 0
        %1304 = vmatmul.mubr.bf16.gmra.mrb[0].mxu0 %v554
        %v1305 = vpop.f32.mrb[0].mxu0
        %v1306 = vadd.f32 0.0, %v1305
        %v1307 = vpop.f32.mrb[0].mxu0
        %v1308 = vpop.f32.mrb[0].mxu0
        %v1309 = vadd.f32 0.0, %v1308
        %v1310 = vpop.f32.mrb[0].mxu0
        %1311 = vmatprep.mubr.bf16.mxu0 0
        %1312 = vmatmul.mubr.bf16.gmra.mrb[0].mxu0 %v555
        %v1313 = vpop.f32.mrb[0].mxu0
        %v1314 = vadd.f32 0.0, %v1313
        %v1315 = vpop.f32.mrb[0].mxu0
        %v1316 = vpop.f32.mrb[0].mxu0
        %v1317 = vadd.f32 0.0, %v1316
        %v1318 = vpop.f32.mrb[0].mxu0
        %1319 = vmatprep.mubr.bf16.mxu0 0
        %1320 = vmatmul.mubr.bf16.gmra.mrb[0].mxu0 %v556
        %v1321 = vpop.f32.mrb[0].mxu0
        %v1322 = vadd.f32 0.0, %v1321
        %v1323 = vpop.f32.mrb[0].mxu0
        %v1324 = vpop.f32.mrb[0].mxu0
        %v1325 = vadd.f32 0.0, %v1324
        %v1326 = vpop.f32.mrb[0].mxu0
        %1327 = vmatprep.mubr.bf16.mxu0 0
        %1328 = vmatmul.mubr.bf16.gmra.mrb[0].mxu0 %v557
        %v1329 = vpop.f32.mrb[0].mxu0
        %v1330 = vadd.f32 0.0, %v1329
        %v1331 = vpop.f32.mrb[0].mxu0
        %v1332 = vpop.f32.mrb[0].mxu0
        %v1333 = vadd.f32 0.0, %v1332
        %v1334 = vpop.f32.mrb[0].mxu0
        %1335 = vmatprep.mubr.bf16.mxu0 0
        %1336 = vmatmul.mubr.bf16.gmra.mrb[0].mxu0 %v558
        %v1337 = vpop.f32.mrb[0].mxu0
        %v1338 = vadd.f32 0.0, %v1337
        %v1339 = vpop.f32.mrb[0].mxu0
        %v1340 = vpop.f32.mrb[0].mxu0
        %v1341 = vadd.f32 0.0, %v1340
        %v1342 = vpop.f32.mrb[0].mxu0
        %1343 = vmatprep.mubr.bf16.mxu0 0
        %1344 = vmatmul.mubr.bf16.gmra.mrb[0].mxu0 %v559
        %v1345 = vpop.f32.mrb[0].mxu0
        %v1346 = vadd.f32 0.0, %v1345
        %v1347 = vpop.f32.mrb[0].mxu0
        %v1348 = vpop.f32.mrb[0].mxu0
        %v1349 = vadd.f32 0.0, %v1348
        %v1350 = vpop.f32.mrb[0].mxu0
        %1351 = vmatprep.mubr.bf16.mxu0 0
        %1352 = vmatmul.mubr.bf16.gmra.mrb[0].mxu0 %v560
        %v1353 = vpop.f32.mrb[0].mxu0
        %v1354 = vadd.f32 0.0, %v1353
        %v1355 = vpop.f32.mrb[0].mxu0
        %v1356 = vpop.f32.mrb[0].mxu0
        %v1357 = vadd.f32 0.0, %v1356
        %v1358 = vpop.f32.mrb[0].mxu0
        %1359 = vmatprep.mubr.bf16.mxu0 0
        %1360 = vmatmul.mubr.bf16.gmra.mrb[0].mxu0 %v561
        %v1361 = vpop.f32.mrb[0].mxu0
        %v1362 = vadd.f32 0.0, %v1361
        %v1363 = vpop.f32.mrb[0].mxu0
        %v1364 = vpop.f32.mrb[0].mxu0
        %v1365 = vadd.f32 0.0, %v1364
        %v1366 = vpop.f32.mrb[0].mxu0
        %1367 = vmatprep.mubr.bf16.mxu0 0
        %1368 = vmatmul.mubr.bf16.gmra.mrb[0].mxu0 %v562
        %v1369 = vpop.f32.mrb[0].mxu0
        %v1370 = vadd.f32 0.0, %v1369
        %v1371 = vpop.f32.mrb[0].mxu0
        %v1372 = vpop.f32.mrb[0].mxu0
        %v1373 = vadd.f32 0.0, %v1372
        %v1374 = vpop.f32.mrb[0].mxu0
        %1375 = vmatprep.mubr.bf16.mxu0 0
        %1376 = vmatmul.mubr.bf16.gmra.mrb[0].mxu0 %v563
        %v1377 = vpop.f32.mrb[0].mxu0
        %v1378 = vadd.f32 0.0, %v1377
        %v1379 = vpop.f32.mrb[0].mxu0
        %v1380 = vpop.f32.mrb[0].mxu0
        %v1381 = vadd.f32 0.0, %v1380
        %v1382 = vpop.f32.mrb[0].mxu0
        %1383 = vmatprep.mubr.bf16.mxu0 0
        %1384 = vmatmul.mubr.bf16.gmra.mrb[0].mxu0 %v564
        %v1385 = vpop.f32.mrb[0].mxu0
        %v1386 = vadd.f32 0.0, %v1385
        %v1387 = vpop.f32.mrb[0].mxu0
        %v1388 = vpop.f32.mrb[0].mxu0
        %v1389 = vadd.f32 0.0, %v1388
        %v1390 = vpop.f32.mrb[0].mxu0
        %1391 = vmatprep.mubr.bf16.mxu0 0
        %1392 = vmatmul.mubr.bf16.gmra.mrb[0].mxu0 %v565
        %v1393 = vpop.f32.mrb[0].mxu0
        %v1394 = vadd.f32 0.0, %v1393
        %v1395 = vpop.f32.mrb[0].mxu0
        %v1396 = vpop.f32.mrb[0].mxu0
        %v1397 = vadd.f32 0.0, %v1396
        %v1398 = vpop.f32.mrb[0].mxu0
        %1399 = vmatprep.mubr.bf16.mxu0 0
        %1400 = vmatmul.mubr.bf16.gmra.mrb[0].mxu0 %v566
        %v1401 = vpop.f32.mrb[0].mxu0
        %v1402 = vadd.f32 0.0, %v1401
        %v1403 = vpop.f32.mrb[0].mxu0
        %v1404 = vpop.f32.mrb[0].mxu0
        %v1405 = vadd.f32 0.0, %v1404
        %v1406 = vpop.f32.mrb[0].mxu0
        %1407 = vmatprep.mubr.bf16.mxu0 0
        %1408 = vmatmul.mubr.bf16.gmra.mrb[0].mxu0 %v567
        %v1409 = vpop.f32.mrb[0].mxu0
        %v1410 = vadd.f32 0.0, %v1409
        %v1411 = vpop.f32.mrb[0].mxu0
        %v1412 = vpop.f32.mrb[0].mxu0
        %v1413 = vadd.f32 0.0, %v1412
        %v1414 = vpop.f32.mrb[0].mxu0
        %1415 = vmatprep.mubr.bf16.mxu0 0
        %1416 = vmatmul.mubr.bf16.gmra.mrb[0].mxu0 %v568
        %v1417 = vpop.f32.mrb[0].mxu0
        %v1418 = vadd.f32 0.0, %v1417
        %v1419 = vpop.f32.mrb[0].mxu0
        %v1420 = vpop.f32.mrb[0].mxu0
        %v1421 = vadd.f32 0.0, %v1420
        %v1422 = vpop.f32.mrb[0].mxu0
        %1423 = vmatprep.mubr.bf16.mxu0 0
        %1424 = vmatmul.mubr.bf16.gmra.mrb[0].mxu0 %v569
        %v1425 = vpop.f32.mrb[0].mxu0
        %v1426 = vadd.f32 0.0, %v1425
        %v1427 = vpop.f32.mrb[0].mxu0
        %v1428 = vpop.f32.mrb[0].mxu0
        %v1429 = vadd.f32 0.0, %v1428
        %v1430 = vpop.f32.mrb[0].mxu0
        %1431 = vdwg.mxu0
        %v1432 = vpack.c.bf16 %v1309, %v1306
        %v1433 = vpack.c.bf16 %v1317, %v1314
        %v1434 = vpack.c.bf16 %v1325, %v1322
        %v1435 = vpack.c.bf16 %v1333, %v1330
        %v1436 = vpack.c.bf16 %v1341, %v1338
        %v1437 = vpack.c.bf16 %v1349, %v1346
        %v1438 = vpack.c.bf16 %v1357, %v1354
        %v1439 = vpack.c.bf16 %v1365, %v1362
        %v1440 = vpack.c.bf16 %v1373, %v1370
        %v1441 = vpack.c.bf16 %v1381, %v1378
        %v1442 = vpack.c.bf16 %v1389, %v1386
        %v1443 = vpack.c.bf16 %v1397, %v1394
        %v1444 = vpack.c.bf16 %v1405, %v1402
        %v1445 = vpack.c.bf16 %v1413, %v1410
        %v1446 = vpack.c.bf16 %v1421, %v1418
        %v1447 = vpack.c.bf16 %v1429, %v1426
        %v1464 = vunpack.c.l.b16 %v1432
        %v1465 = vunpack.c.h.b16 %v1432
        %v1466 = vunpack.c.l.b16 %v1433
        %v1467 = vunpack.c.h.b16 %v1433
        %v1468 = vunpack.c.l.b16 %v1434
        %v1469 = vunpack.c.h.b16 %v1434
        %v1470 = vunpack.c.l.b16 %v1435
        %v1471 = vunpack.c.h.b16 %v1435
        %v1472 = vunpack.c.l.b16 %v1436
        %v1473 = vunpack.c.h.b16 %v1436
        %v1474 = vunpack.c.l.b16 %v1437
        %v1475 = vunpack.c.h.b16 %v1437
        %v1476 = vunpack.c.l.b16 %v1438
        %v1477 = vunpack.c.h.b16 %v1438
        %v1478 = vunpack.c.l.b16 %v1439
        %v1479 = vunpack.c.h.b16 %v1439
        %v1480 = vunpack.c.l.b16 %v1440
        %v1481 = vunpack.c.h.b16 %v1440
        %v1482 = vunpack.c.l.b16 %v1441
        %v1483 = vunpack.c.h.b16 %v1441
        %v1484 = vunpack.c.l.b16 %v1442
        %v1485 = vunpack.c.h.b16 %v1442
        %v1486 = vunpack.c.l.b16 %v1443
        %v1487 = vunpack.c.h.b16 %v1443
        %v1488 = vunpack.c.l.b16 %v1444
        %v1489 = vunpack.c.h.b16 %v1444
        %v1490 = vunpack.c.l.b16 %v1445
        %v1491 = vunpack.c.h.b16 %v1445
        %v1492 = vunpack.c.l.b16 %v1446
        %v1493 = vunpack.c.h.b16 %v1446
        %v1494 = vunpack.c.l.b16 %v1447
        %v1495 = vunpack.c.h.b16 %v1447
        %v1496 = vpack.c.b16 %v1464, %v1464
        %v1497 = vpack.c.b16 %v1465, %v1465
        %v1498 = vpack.c.b16 %v1466, %v1466
        %v1499 = vpack.c.b16 %v1467, %v1467
        %v1500 = vpack.c.b16 %v1468, %v1468
        %v1501 = vpack.c.b16 %v1469, %v1469
        %v1502 = vpack.c.b16 %v1470, %v1470
        %v1503 = vpack.c.b16 %v1471, %v1471
        %v1504 = vpack.c.b16 %v1472, %v1472
        %v1505 = vpack.c.b16 %v1473, %v1473
        %v1506 = vpack.c.b16 %v1474, %v1474
        %v1507 = vpack.c.b16 %v1475, %v1475
        %v1508 = vpack.c.b16 %v1476, %v1476
        %v1509 = vpack.c.b16 %v1477, %v1477
        %v1510 = vpack.c.b16 %v1478, %v1478
        %v1511 = vpack.c.b16 %v1479, %v1479
        %v1512 = vpack.c.b16 %v1480, %v1480
        %v1513 = vpack.c.b16 %v1481, %v1481
        %v1514 = vpack.c.b16 %v1482, %v1482
        %v1515 = vpack.c.b16 %v1483, %v1483
        %v1516 = vpack.c.b16 %v1484, %v1484
        %v1517 = vpack.c.b16 %v1485, %v1485
        %v1518 = vpack.c.b16 %v1486, %v1486
        %v1519 = vpack.c.b16 %v1487, %v1487
        %v1520 = vpack.c.b16 %v1488, %v1488
        %v1521 = vpack.c.b16 %v1489, %v1489
        %v1522 = vpack.c.b16 %v1490, %v1490
        %v1523 = vpack.c.b16 %v1491, %v1491
        %v1524 = vpack.c.b16 %v1492, %v1492
        %v1525 = vpack.c.b16 %v1493, %v1493
        %v1526 = vpack.c.b16 %v1494, %v1494
        %v1527 = vpack.c.b16 %v1495, %v1495
        %1560 = vst [vmem:[%s366] sm:$0xf] %v1496
        %1561 = vst [vmem:[%s366 + $0x4] sm:$0xf] %v1497
        %1562 = vst [vmem:[%s366 + $0x8] sm:$0xf] %v1498
        %1563 = vst [vmem:[%s366 + $0xc] sm:$0xf] %v1499
        %1564 = vst [vmem:[%s366 + $0x10] sm:$0xf] %v1500
        %1565 = vst [vmem:[%s366 + $0x14] sm:$0xf] %v1501
        %1566 = vst [vmem:[%s366 + $0x18] sm:$0xf] %v1502
        %1567 = vst [vmem:[%s366 + $0x1c] sm:$0xf] %v1503
        %1568 = vst [vmem:[%s366 + $0x20] sm:$0xf] %v1504
        %1569 = vst [vmem:[%s366 + $0x24] sm:$0xf] %v1505
        %1570 = vst [vmem:[%s366 + $0x28] sm:$0xf] %v1506
        %1571 = vst [vmem:[%s366 + $0x2c] sm:$0xf] %v1507
        %1572 = vst [vmem:[%s366 + $0x30] sm:$0xf] %v1508
        %1573 = vst [vmem:[%s366 + $0x34] sm:$0xf] %v1509
        %1574 = vst [vmem:[%s366 + $0x38] sm:$0xf] %v1510
        %1575 = vst [vmem:[%s366 + $0x3c] sm:$0xf] %v1511
        %1576 = vst [vmem:[%s366 + $0x40] sm:$0xf] %v1512
        %1577 = vst [vmem:[%s366 + $0x44] sm:$0xf] %v1513
        %1578 = vst [vmem:[%s366 + $0x48] sm:$0xf] %v1514
        %1579 = vst [vmem:[%s366 + $0x4c] sm:$0xf] %v1515
        %1580 = vst [vmem:[%s366 + $0x50] sm:$0xf] %v1516
        %1581 = vst [vmem:[%s366 + $0x54] sm:$0xf] %v1517
        %1582 = vst [vmem:[%s366 + $0x58] sm:$0xf] %v1518
        %1583 = vst [vmem:[%s366 + $0x5c] sm:$0xf] %v1519
        %1584 = vst [vmem:[%s366 + $0x60] sm:$0xf] %v1520
        %1585 = vst [vmem:[%s366 + $0x64] sm:$0xf] %v1521
        %1586 = vst [vmem:[%s366 + $0x68] sm:$0xf] %v1522
        %1587 = vst [vmem:[%s366 + $0x6c] sm:$0xf] %v1523
        %1588 = vst [vmem:[%s366 + $0x70] sm:$0xf] %v1524
        %1589 = vst [vmem:[%s366 + $0x74] sm:$0xf] %v1525
        %1590 = vst [vmem:[%s366 + $0x78] sm:$0xf] %v1526
        %1591 = vst [vmem:[%s366 + $0x7c] sm:$0xf] %v1527
        %v1592 = vld [vmem:[#allocation2] sm:$0xf]
        %v1593 = vld [vmem:[#allocation2 + $0x4] sm:$0xf]
        %v1594 = vld [vmem:[#allocation2 + $0xc] sm:$0xf]
        %v1595 = vld [vmem:[#allocation2 + $0x10] sm:$0xf]
        %v1596 = vld [vmem:[#allocation2 + $0x18] sm:$0xf]
        %v1597 = vld [vmem:[#allocation2 + $0x1c] sm:$0xf]
        %v1598 = vld [vmem:[#allocation2 + $0x24] sm:$0xf]
        %v1599 = vld [vmem:[#allocation2 + $0x28] sm:$0xf]
        %v1600 = vld [vmem:[#allocation2 + $0x30] sm:$0xf]
        %v1601 = vld [vmem:[#allocation2 + $0x34] sm:$0xf]
        %v1602 = vld [vmem:[#allocation2 + $0x3c] sm:$0xf]
        %v1603 = vld [vmem:[#allocation2 + $0x40] sm:$0xf]
        %v1604 = vld [vmem:[#allocation2 + $0x48] sm:$0xf]
        %v1605 = vld [vmem:[#allocation2 + $0x4c] sm:$0xf]
        %v1606 = vld [vmem:[#allocation2 + $0x54] sm:$0xf]
        %v1607 = vld [vmem:[#allocation2 + $0x58] sm:$0xf]
        %v1608 = vld [vmem:[#allocation2 + $0x60] sm:$0xf]
        %v1609 = vld [vmem:[#allocation2 + $0x64] sm:$0xf]
        %v1610 = vld [vmem:[#allocation2 + $0x6c] sm:$0xf]
        %v1611 = vld [vmem:[#allocation2 + $0x70] sm:$0xf]
        %v1612 = vld [vmem:[#allocation2 + $0x78] sm:$0xf]
        %v1613 = vld [vmem:[#allocation2 + $0x7c] sm:$0xf]
        %v1614 = vld [vmem:[#allocation2 + $0x84] sm:$0xf]
        %v1615 = vld [vmem:[#allocation2 + $0x88] sm:$0xf]
        %v1616 = vld [vmem:[#allocation2 + $0x90] sm:$0xf]
        %v1617 = vld [vmem:[#allocation2 + $0x94] sm:$0xf]
        %v1618 = vld [vmem:[#allocation2 + $0x9c] sm:$0xf]
        %v1619 = vld [vmem:[#allocation2 + $0xa0] sm:$0xf]
        %v1620 = vld [vmem:[#allocation2 + $0xa8] sm:$0xf]
        %v1621 = vld [vmem:[#allocation2 + $0xac] sm:$0xf]
        %v1622 = vld [vmem:[#allocation2 + $0xb4] sm:$0xf]
        %v1623 = vld [vmem:[#allocation2 + $0xb8] sm:$0xf]
        %v1624 = vld [vmem:[#allocation6] sm:$0xf]
        %v1625 = vld [vmem:[#allocation6 + $0x4] sm:$0xf]
        %v1626 = vld [vmem:[#allocation6 + $0x8] sm:$0xf]
        %v1627 = vld [vmem:[#allocation6 + $0xc] sm:$0xf]
        %v1628 = vld [vmem:[#allocation6 + $0x10] sm:$0xf]
        %v1629 = vld [vmem:[#allocation6 + $0x14] sm:$0xf]
        %v1630 = vld [vmem:[#allocation6 + $0x18] sm:$0xf]
        %v1631 = vld [vmem:[#allocation6 + $0x1c] sm:$0xf]
        %v1632 = vld [vmem:[#allocation6 + $0x20] sm:$0xf]
        %v1633 = vld [vmem:[#allocation6 + $0x24] sm:$0xf]
        %v1634 = vld [vmem:[#allocation6 + $0x28] sm:$0xf]
        %v1635 = vld [vmem:[#allocation6 + $0x2c] sm:$0xf]
        %v1636 = vld [vmem:[#allocation6 + $0x30] sm:$0xf]
        %v1637 = vld [vmem:[#allocation6 + $0x34] sm:$0xf]
        %v1638 = vld [vmem:[#allocation6 + $0x38] sm:$0xf]
        %v1639 = vld [vmem:[#allocation6 + $0x3c] sm:$0xf]
        %v1640 = vld [vmem:[#allocation2 + $0x8] sm:$0x1]
        %v1641 = vld [vmem:[#allocation2 + $0x14] sm:$0x1]
        %v1642 = vld [vmem:[#allocation2 + $0x20] sm:$0x1]
        %v1643 = vld [vmem:[#allocation2 + $0x2c] sm:$0x1]
        %v1644 = vld [vmem:[#allocation2 + $0x38] sm:$0x1]
        %v1645 = vld [vmem:[#allocation2 + $0x44] sm:$0x1]
        %v1646 = vld [vmem:[#allocation2 + $0x50] sm:$0x1]
        %v1647 = vld [vmem:[#allocation2 + $0x5c] sm:$0x1]
        %v1648 = vld [vmem:[#allocation2 + $0x68] sm:$0x1]
        %v1649 = vld [vmem:[#allocation2 + $0x74] sm:$0x1]
        %v1650 = vld [vmem:[#allocation2 + $0x80] sm:$0x1]
        %v1651 = vld [vmem:[#allocation2 + $0x8c] sm:$0x1]
        %v1652 = vld [vmem:[#allocation2 + $0x98] sm:$0x1]
        %v1653 = vld [vmem:[#allocation2 + $0xa4] sm:$0x1]
        %v1654 = vld [vmem:[#allocation2 + $0xb0] sm:$0x1]
        %v1655 = vld [vmem:[#allocation2 + $0xbc] sm:$0x1]
        %vm1656 = vsmask.f32 3328
        %vm1657 = vsmask.f32 7440
        %vm1658 = vmor %vm1656, %vm1657
        %v1660 = vshrl.u32 %v1592, 16
        %v1662 = vrot.slane %v1660, 4
        %v1663 = vshll.u32 %v1592, 16
        %v1665 = vrot.slane %v1663, 5
        %v1666 = vor.u32 %v1662, %v1665
        %v1667 = vrot.slane %v1666, 4
        %v1669 = vshll.u32 %v1593, 16
        %v1671 = vrot.slane %v1669, 5
        %v1672 = vsel %vm1658, %v1667, %v1671
        %v1673 = vshrl.u32 %v1593, 16
        %v1675 = vrot.slane %v1673, 4
        %v1676 = vor.u32 %v1675, %v1671
        %v1677 = vrot.slane %v1676, 4
        %v1679 = vshll.u32 %v1640, 16
        %v1681 = vrot.slane %v1679, 5
        %v1682 = vsel %vm1658, %v1677, %v1681
        %v1684 = vshrl.u32 %v1594, 16
        %v1686 = vrot.slane %v1684, 4
        %v1687 = vshll.u32 %v1594, 16
        %v1689 = vrot.slane %v1687, 5
        %v1690 = vor.u32 %v1686, %v1689
        %v1691 = vrot.slane %v1690, 4
        %v1693 = vshll.u32 %v1595, 16
        %v1695 = vrot.slane %v1693, 5
        %v1696 = vsel %vm1658, %v1691, %v1695
        %v1697 = vshrl.u32 %v1595, 16
        %v1699 = vrot.slane %v1697, 4
        %v1700 = vor.u32 %v1699, %v1695
        %v1701 = vrot.slane %v1700, 4
        %v1703 = vshll.u32 %v1641, 16
        %v1705 = vrot.slane %v1703, 5
        %v1706 = vsel %vm1658, %v1701, %v1705
        %v1708 = vshrl.u32 %v1596, 16
        %v1710 = vrot.slane %v1708, 4
        %v1711 = vshll.u32 %v1596, 16
        %v1713 = vrot.slane %v1711, 5
        %v1714 = vor.u32 %v1710, %v1713
        %v1715 = vrot.slane %v1714, 4
        %v1717 = vshll.u32 %v1597, 16
        %v1719 = vrot.slane %v1717, 5
        %v1720 = vsel %vm1658, %v1715, %v1719
        %v1721 = vshrl.u32 %v1597, 16
        %v1723 = vrot.slane %v1721, 4
        %v1724 = vor.u32 %v1723, %v1719
        %v1725 = vrot.slane %v1724, 4
        %v1727 = vshll.u32 %v1642, 16
        %v1729 = vrot.slane %v1727, 5
        %v1730 = vsel %vm1658, %v1725, %v1729
        %v1732 = vshrl.u32 %v1598, 16
        %v1734 = vrot.slane %v1732, 4
        %v1735 = vshll.u32 %v1598, 16
        %v1737 = vrot.slane %v1735, 5
        %v1738 = vor.u32 %v1734, %v1737
        %v1739 = vrot.slane %v1738, 4
        %v1741 = vshll.u32 %v1599, 16
        %v1743 = vrot.slane %v1741, 5
        %v1744 = vsel %vm1658, %v1739, %v1743
        %v1745 = vshrl.u32 %v1599, 16
        %v1747 = vrot.slane %v1745, 4
        %v1748 = vor.u32 %v1747, %v1743
        %v1749 = vrot.slane %v1748, 4
        %v1751 = vshll.u32 %v1643, 16
        %v1753 = vrot.slane %v1751, 5
        %v1754 = vsel %vm1658, %v1749, %v1753
        %v1756 = vshrl.u32 %v1600, 16
        %v1758 = vrot.slane %v1756, 4
        %v1759 = vshll.u32 %v1600, 16
        %v1761 = vrot.slane %v1759, 5
        %v1762 = vor.u32 %v1758, %v1761
        %v1763 = vrot.slane %v1762, 4
        %v1765 = vshll.u32 %v1601, 16
        %v1767 = vrot.slane %v1765, 5
        %v1768 = vsel %vm1658, %v1763, %v1767
        %v1769 = vshrl.u32 %v1601, 16
        %v1771 = vrot.slane %v1769, 4
        %v1772 = vor.u32 %v1771, %v1767
        %v1773 = vrot.slane %v1772, 4
        %v1775 = vshll.u32 %v1644, 16
        %v1777 = vrot.slane %v1775, 5
        %v1778 = vsel %vm1658, %v1773, %v1777
        %v1780 = vshrl.u32 %v1602, 16
        %v1782 = vrot.slane %v1780, 4
        %v1783 = vshll.u32 %v1602, 16
        %v1785 = vrot.slane %v1783, 5
        %v1786 = vor.u32 %v1782, %v1785
        %v1787 = vrot.slane %v1786, 4
        %v1789 = vshll.u32 %v1603, 16
        %v1791 = vrot.slane %v1789, 5
        %v1792 = vsel %vm1658, %v1787, %v1791
        %v1793 = vshrl.u32 %v1603, 16
        %v1795 = vrot.slane %v1793, 4
        %v1796 = vor.u32 %v1795, %v1791
        %v1797 = vrot.slane %v1796, 4
        %v1799 = vshll.u32 %v1645, 16
        %v1801 = vrot.slane %v1799, 5
        %v1802 = vsel %vm1658, %v1797, %v1801
        %v1804 = vshrl.u32 %v1604, 16
        %v1806 = vrot.slane %v1804, 4
        %v1807 = vshll.u32 %v1604, 16
        %v1809 = vrot.slane %v1807, 5
        %v1810 = vor.u32 %v1806, %v1809
        %v1811 = vrot.slane %v1810, 4
        %v1813 = vshll.u32 %v1605, 16
        %v1815 = vrot.slane %v1813, 5
        %v1816 = vsel %vm1658, %v1811, %v1815
        %v1817 = vshrl.u32 %v1605, 16
        %v1819 = vrot.slane %v1817, 4
        %v1820 = vor.u32 %v1819, %v1815
        %v1821 = vrot.slane %v1820, 4
        %v1823 = vshll.u32 %v1646, 16
        %v1825 = vrot.slane %v1823, 5
        %v1826 = vsel %vm1658, %v1821, %v1825
        %v1828 = vshrl.u32 %v1606, 16
        %v1830 = vrot.slane %v1828, 4
        %v1831 = vshll.u32 %v1606, 16
        %v1833 = vrot.slane %v1831, 5
        %v1834 = vor.u32 %v1830, %v1833
        %v1835 = vrot.slane %v1834, 4
        %v1837 = vshll.u32 %v1607, 16
        %v1839 = vrot.slane %v1837, 5
        %v1840 = vsel %vm1658, %v1835, %v1839
        %v1841 = vshrl.u32 %v1607, 16
        %v1843 = vrot.slane %v1841, 4
        %v1844 = vor.u32 %v1843, %v1839
        %v1845 = vrot.slane %v1844, 4
        %v1847 = vshll.u32 %v1647, 16
        %v1849 = vrot.slane %v1847, 5
        %v1850 = vsel %vm1658, %v1845, %v1849
        %v1852 = vshrl.u32 %v1608, 16
        %v1854 = vrot.slane %v1852, 4
        %v1855 = vshll.u32 %v1608, 16
        %v1857 = vrot.slane %v1855, 5
        %v1858 = vor.u32 %v1854, %v1857
        %v1859 = vrot.slane %v1858, 4
        %v1861 = vshll.u32 %v1609, 16
        %v1863 = vrot.slane %v1861, 5
        %v1864 = vsel %vm1658, %v1859, %v1863
        %v1865 = vshrl.u32 %v1609, 16
        %v1867 = vrot.slane %v1865, 4
        %v1868 = vor.u32 %v1867, %v1863
        %v1869 = vrot.slane %v1868, 4
        %v1871 = vshll.u32 %v1648, 16
        %v1873 = vrot.slane %v1871, 5
        %v1874 = vsel %vm1658, %v1869, %v1873
        %v1876 = vshrl.u32 %v1610, 16
        %v1878 = vrot.slane %v1876, 4
        %v1879 = vshll.u32 %v1610, 16
        %v1881 = vrot.slane %v1879, 5
        %v1882 = vor.u32 %v1878, %v1881
        %v1883 = vrot.slane %v1882, 4
        %v1885 = vshll.u32 %v1611, 16
        %v1887 = vrot.slane %v1885, 5
        %v1888 = vsel %vm1658, %v1883, %v1887
        %v1889 = vshrl.u32 %v1611, 16
        %v1891 = vrot.slane %v1889, 4
        %v1892 = vor.u32 %v1891, %v1887
        %v1893 = vrot.slane %v1892, 4
        %v1895 = vshll.u32 %v1649, 16
        %v1897 = vrot.slane %v1895, 5
        %v1898 = vsel %vm1658, %v1893, %v1897
        %v1900 = vshrl.u32 %v1612, 16
        %v1902 = vrot.slane %v1900, 4
        %v1903 = vshll.u32 %v1612, 16
        %v1905 = vrot.slane %v1903, 5
        %v1906 = vor.u32 %v1902, %v1905
        %v1907 = vrot.slane %v1906, 4
        %v1909 = vshll.u32 %v1613, 16
        %v1911 = vrot.slane %v1909, 5
        %v1912 = vsel %vm1658, %v1907, %v1911
        %v1913 = vshrl.u32 %v1613, 16
        %v1915 = vrot.slane %v1913, 4
        %v1916 = vor.u32 %v1915, %v1911
        %v1917 = vrot.slane %v1916, 4
        %v1919 = vshll.u32 %v1650, 16
        %v1921 = vrot.slane %v1919, 5
        %v1922 = vsel %vm1658, %v1917, %v1921
        %v1924 = vshrl.u32 %v1614, 16
        %v1926 = vrot.slane %v1924, 4
        %v1927 = vshll.u32 %v1614, 16
        %v1929 = vrot.slane %v1927, 5
        %v1930 = vor.u32 %v1926, %v1929
        %v1931 = vrot.slane %v1930, 4
        %v1933 = vshll.u32 %v1615, 16
        %v1935 = vrot.slane %v1933, 5
        %v1936 = vsel %vm1658, %v1931, %v1935
        %v1937 = vshrl.u32 %v1615, 16
        %v1939 = vrot.slane %v1937, 4
        %v1940 = vor.u32 %v1939, %v1935
        %v1941 = vrot.slane %v1940, 4
        %v1943 = vshll.u32 %v1651, 16
        %v1945 = vrot.slane %v1943, 5
        %v1946 = vsel %vm1658, %v1941, %v1945
        %v1948 = vshrl.u32 %v1616, 16
        %v1950 = vrot.slane %v1948, 4
        %v1951 = vshll.u32 %v1616, 16
        %v1953 = vrot.slane %v1951, 5
        %v1954 = vor.u32 %v1950, %v1953
        %v1955 = vrot.slane %v1954, 4
        %v1957 = vshll.u32 %v1617, 16
        %v1959 = vrot.slane %v1957, 5
        %v1960 = vsel %vm1658, %v1955, %v1959
        %v1961 = vshrl.u32 %v1617, 16
        %v1963 = vrot.slane %v1961, 4
        %v1964 = vor.u32 %v1963, %v1959
        %v1965 = vrot.slane %v1964, 4
        %v1967 = vshll.u32 %v1652, 16
        %v1969 = vrot.slane %v1967, 5
        %v1970 = vsel %vm1658, %v1965, %v1969
        %v1972 = vshrl.u32 %v1618, 16
        %v1974 = vrot.slane %v1972, 4
        %v1975 = vshll.u32 %v1618, 16
        %v1977 = vrot.slane %v1975, 5
        %v1978 = vor.u32 %v1974, %v1977
        %v1979 = vrot.slane %v1978, 4
        %v1981 = vshll.u32 %v1619, 16
        %v1983 = vrot.slane %v1981, 5
        %v1984 = vsel %vm1658, %v1979, %v1983
        %v1985 = vshrl.u32 %v1619, 16
        %v1987 = vrot.slane %v1985, 4
        %v1988 = vor.u32 %v1987, %v1983
        %v1989 = vrot.slane %v1988, 4
        %v1991 = vshll.u32 %v1653, 16
        %v1993 = vrot.slane %v1991, 5
        %v1994 = vsel %vm1658, %v1989, %v1993
        %v1996 = vshrl.u32 %v1620, 16
        %v1998 = vrot.slane %v1996, 4
        %v1999 = vshll.u32 %v1620, 16
        %v2001 = vrot.slane %v1999, 5
        %v2002 = vor.u32 %v1998, %v2001
        %v2003 = vrot.slane %v2002, 4
        %v2005 = vshll.u32 %v1621, 16
        %v2007 = vrot.slane %v2005, 5
        %v2008 = vsel %vm1658, %v2003, %v2007
        %v2009 = vshrl.u32 %v1621, 16
        %v2011 = vrot.slane %v2009, 4
        %v2012 = vor.u32 %v2011, %v2007
        %v2013 = vrot.slane %v2012, 4
        %v2015 = vshll.u32 %v1654, 16
        %v2017 = vrot.slane %v2015, 5
        %v2018 = vsel %vm1658, %v2013, %v2017
        %v2020 = vshrl.u32 %v1622, 16
        %v2022 = vrot.slane %v2020, 4
        %v2023 = vshll.u32 %v1622, 16
        %v2025 = vrot.slane %v2023, 5
        %v2026 = vor.u32 %v2022, %v2025
        %v2027 = vrot.slane %v2026, 4
        %v2029 = vshll.u32 %v1623, 16
        %v2031 = vrot.slane %v2029, 5
        %v2032 = vsel %vm1658, %v2027, %v2031
        %v2033 = vshrl.u32 %v1623, 16
        %v2035 = vrot.slane %v2033, 4
        %v2036 = vor.u32 %v2035, %v2031
        %v2037 = vrot.slane %v2036, 4
        %v2039 = vshll.u32 %v1655, 16
        %v2041 = vrot.slane %v2039, 5
        %v2042 = vsel %vm1658, %v2037, %v2041
        %s2043 = scalar_lea.vmem [#allocation6], 64
        %v2044 = vld [vmem:[%s2043] sm:$0xf]
        %v2045 = vld [vmem:[%s2043 + $0x4] sm:$0xf]
        %v2046 = vld [vmem:[%s2043 + $0x8] sm:$0xf]
        %v2047 = vld [vmem:[%s2043 + $0xc] sm:$0xf]
        %v2048 = vld [vmem:[%s2043 + $0x10] sm:$0xf]
        %v2049 = vld [vmem:[%s2043 + $0x14] sm:$0xf]
        %v2050 = vld [vmem:[%s2043 + $0x18] sm:$0xf]
        %v2051 = vld [vmem:[%s2043 + $0x1c] sm:$0xf]
        %v2052 = vld [vmem:[%s2043 + $0x20] sm:$0xf]
        %v2053 = vld [vmem:[%s2043 + $0x24] sm:$0xf]
        %v2054 = vld [vmem:[%s2043 + $0x28] sm:$0xf]
        %v2055 = vld [vmem:[%s2043 + $0x2c] sm:$0xf]
        %v2056 = vld [vmem:[%s2043 + $0x30] sm:$0xf]
        %v2057 = vld [vmem:[%s2043 + $0x34] sm:$0xf]
        %v2058 = vld [vmem:[%s2043 + $0x38] sm:$0xf]
        %v2059 = vld [vmem:[%s2043 + $0x3c] sm:$0xf]
        %v2060 = vunpack.c.l.b16 %v1672
        %v2061 = vunpack.c.l.b16 %v1682
        %v2062 = vunpack.c.l.b16 %v1696
        %v2063 = vunpack.c.l.b16 %v1706
        %v2064 = vunpack.c.l.b16 %v1720
        %v2065 = vunpack.c.l.b16 %v1730
        %v2066 = vunpack.c.l.b16 %v1744
        %v2067 = vunpack.c.l.b16 %v1754
        %v2068 = vunpack.c.l.b16 %v1768
        %v2069 = vunpack.c.l.b16 %v1778
        %v2070 = vunpack.c.l.b16 %v1792
        %v2071 = vunpack.c.l.b16 %v1802
        %v2072 = vunpack.c.l.b16 %v1816
        %v2073 = vunpack.c.l.b16 %v1826
        %v2074 = vunpack.c.l.b16 %v1840
        %v2075 = vunpack.c.l.b16 %v1850
        %v2076 = vunpack.c.l.b16 %v1864
        %v2077 = vunpack.c.l.b16 %v1874
        %v2078 = vunpack.c.l.b16 %v1888
        %v2079 = vunpack.c.l.b16 %v1898
        %v2080 = vunpack.c.l.b16 %v1912
        %v2081 = vunpack.c.l.b16 %v1922
        %v2082 = vunpack.c.l.b16 %v1936
        %v2083 = vunpack.c.l.b16 %v1946
        %v2084 = vunpack.c.l.b16 %v1960
        %v2085 = vunpack.c.l.b16 %v1970
        %v2086 = vunpack.c.l.b16 %v1984
        %v2087 = vunpack.c.l.b16 %v1994
        %v2088 = vunpack.c.l.b16 %v2008
        %v2089 = vunpack.c.l.b16 %v2018
        %v2090 = vunpack.c.l.b16 %v2032
        %v2091 = vunpack.c.l.b16 %v2042
        %v2092 = vpack.c.b16 %v2061, %v2060
        %v2093 = vpack.c.b16 %v2063, %v2062
        %v2094 = vpack.c.b16 %v2065, %v2064
        %v2095 = vpack.c.b16 %v2067, %v2066
        %v2096 = vpack.c.b16 %v2069, %v2068
        %v2097 = vpack.c.b16 %v2071, %v2070
        %v2098 = vpack.c.b16 %v2073, %v2072
        %v2099 = vpack.c.b16 %v2075, %v2074
        %v2100 = vpack.c.b16 %v2077, %v2076
        %v2101 = vpack.c.b16 %v2079, %v2078
        %v2102 = vpack.c.b16 %v2081, %v2080
        %v2103 = vpack.c.b16 %v2083, %v2082
        %v2104 = vpack.c.b16 %v2085, %v2084
        %v2105 = vpack.c.b16 %v2087, %v2086
        %v2106 = vpack.c.b16 %v2089, %v2088
        %v2107 = vpack.c.b16 %v2091, %v2090
        %v2140 = vunpack.c.l.b16 %v2044
        %v2141 = vunpack.c.l.b16 %v2045
        %v2142 = vunpack.c.l.b16 %v2046
        %v2143 = vunpack.c.l.b16 %v2047
        %v2144 = vunpack.c.l.b16 %v2048
        %v2145 = vunpack.c.l.b16 %v2049
        %v2146 = vunpack.c.l.b16 %v2050
        %v2147 = vunpack.c.l.b16 %v2051
        %v2148 = vunpack.c.l.b16 %v2052
        %v2149 = vunpack.c.l.b16 %v2053
        %v2150 = vunpack.c.l.b16 %v2054
        %v2151 = vunpack.c.l.b16 %v2055
        %v2152 = vunpack.c.l.b16 %v2056
        %v2153 = vunpack.c.l.b16 %v2057
        %v2154 = vunpack.c.l.b16 %v2058
        %v2155 = vunpack.c.l.b16 %v2059
        %v2156 = vpack.c.b16 %v2141, %v2140
        %v2157 = vpack.c.b16 %v2143, %v2142
        %v2158 = vpack.c.b16 %v2145, %v2144
        %v2159 = vpack.c.b16 %v2147, %v2146
        %v2160 = vpack.c.b16 %v2149, %v2148
        %v2161 = vpack.c.b16 %v2151, %v2150
        %v2162 = vpack.c.b16 %v2153, %v2152
        %v2163 = vpack.c.b16 %v2155, %v2154
        %2172 = vmatprep.subr.bf16.mxu0 0
        %2173 = vmatpush1.bf16.msra.mxu0 %v2156
        %2174 = vmatprep.subr.bf16.mxu0 0
        %2175 = vmatpush1.bf16.msra.mxu0 %v2157
        %2176 = vmatprep.subr.bf16.mxu0 0
        %2177 = vmatpush1.bf16.msra.mxu0 %v2158
        %2178 = vmatprep.subr.bf16.mxu0 0
        %2179 = vmatpush1.bf16.msra.mxu0 %v2159
        %2180 = vmatprep.subr.bf16.mxu0 0
        %2181 = vmatpush1.bf16.msra.mxu0 %v2160
        %2182 = vmatprep.subr.bf16.mxu0 0
        %2183 = vmatpush1.bf16.msra.mxu0 %v2161
        %2184 = vmatprep.subr.bf16.mxu0 0
        %2185 = vmatpush1.bf16.msra.mxu0 %v2162
        %2186 = vmatprep.subr.bf16.mxu0 0
        %2187 = vmatpush1.bf16.msra.mxu0 %v2163
        %2188 = vmatprep.subr.bf16.mxu0 0
        %2189 = vmatpush1.bf16.msra.mxu0 0
        %2190 = vmatprep.subr.bf16.mxu0 0
        %2191 = vmatpush1.bf16.msra.mxu0 0
        %2192 = vmatprep.subr.bf16.mxu0 0
        %2193 = vmatpush1.bf16.msra.mxu0 0
        %2194 = vmatprep.subr.bf16.mxu0 0
        %2195 = vmatpush1.bf16.msra.mxu0 0
        %2196 = vmatprep.subr.bf16.mxu0 0
        %2197 = vmatpush1.bf16.msra.mxu0 0
        %2198 = vmatprep.subr.bf16.mxu0 0
        %2199 = vmatpush1.bf16.msra.mxu0 0
        %2200 = vmatprep.subr.bf16.mxu0 0
        %2201 = vmatpush1.bf16.msra.mxu0 0
        %2202 = vmatprep.subr.bf16.mxu0 0
        %2203 = vmatpush1.bf16.msra.mxu0 0
        %2204 = vmatprep.mubr.bf16.mxu0 0
        %2205 = vmatmul.mubr.bf16.gmra.mrb[0].mxu0 %v2092
        %v2206 = vpop.f32.mrb[0].mxu0
        %v2207 = vadd.f32 0.0, %v2206
        %v2208 = vpop.f32.mrb[0].mxu0
        %v2209 = vpop.f32.mrb[0].mxu0
        %v2210 = vadd.f32 0.0, %v2209
        %v2211 = vpop.f32.mrb[0].mxu0
        %2212 = vmatprep.mubr.bf16.mxu0 0
        %2213 = vmatmul.mubr.bf16.gmra.mrb[0].mxu0 %v2093
        %v2214 = vpop.f32.mrb[0].mxu0
        %v2215 = vadd.f32 0.0, %v2214
        %v2216 = vpop.f32.mrb[0].mxu0
        %v2217 = vpop.f32.mrb[0].mxu0
        %v2218 = vadd.f32 0.0, %v2217
        %v2219 = vpop.f32.mrb[0].mxu0
        %2220 = vmatprep.mubr.bf16.mxu0 0
        %2221 = vmatmul.mubr.bf16.gmra.mrb[0].mxu0 %v2094
        %v2222 = vpop.f32.mrb[0].mxu0
        %v2223 = vadd.f32 0.0, %v2222
        %v2224 = vpop.f32.mrb[0].mxu0
        %v2225 = vpop.f32.mrb[0].mxu0
        %v2226 = vadd.f32 0.0, %v2225
        %v2227 = vpop.f32.mrb[0].mxu0
        %2228 = vmatprep.mubr.bf16.mxu0 0
        %2229 = vmatmul.mubr.bf16.gmra.mrb[0].mxu0 %v2095
        %v2230 = vpop.f32.mrb[0].mxu0
        %v2231 = vadd.f32 0.0, %v2230
        %v2232 = vpop.f32.mrb[0].mxu0
        %v2233 = vpop.f32.mrb[0].mxu0
        %v2234 = vadd.f32 0.0, %v2233
        %v2235 = vpop.f32.mrb[0].mxu0
        %2236 = vmatprep.mubr.bf16.mxu0 0
        %2237 = vmatmul.mubr.bf16.gmra.mrb[0].mxu0 %v2096
        %v2238 = vpop.f32.mrb[0].mxu0
        %v2239 = vadd.f32 0.0, %v2238
        %v2240 = vpop.f32.mrb[0].mxu0
        %v2241 = vpop.f32.mrb[0].mxu0
        %v2242 = vadd.f32 0.0, %v2241
        %v2243 = vpop.f32.mrb[0].mxu0
        %2244 = vmatprep.mubr.bf16.mxu0 0
        %2245 = vmatmul.mubr.bf16.gmra.mrb[0].mxu0 %v2097
        %v2246 = vpop.f32.mrb[0].mxu0
        %v2247 = vadd.f32 0.0, %v2246
        %v2248 = vpop.f32.mrb[0].mxu0
        %v2249 = vpop.f32.mrb[0].mxu0
        %v2250 = vadd.f32 0.0, %v2249
        %v2251 = vpop.f32.mrb[0].mxu0
        %2252 = vmatprep.mubr.bf16.mxu0 0
        %2253 = vmatmul.mubr.bf16.gmra.mrb[0].mxu0 %v2098
        %v2254 = vpop.f32.mrb[0].mxu0
        %v2255 = vadd.f32 0.0, %v2254
        %v2256 = vpop.f32.mrb[0].mxu0
        %v2257 = vpop.f32.mrb[0].mxu0
        %v2258 = vadd.f32 0.0, %v2257
        %v2259 = vpop.f32.mrb[0].mxu0
        %2260 = vmatprep.mubr.bf16.mxu0 0
        %2261 = vmatmul.mubr.bf16.gmra.mrb[0].mxu0 %v2099
        %v2262 = vpop.f32.mrb[0].mxu0
        %v2263 = vadd.f32 0.0, %v2262
        %v2264 = vpop.f32.mrb[0].mxu0
        %v2265 = vpop.f32.mrb[0].mxu0
        %v2266 = vadd.f32 0.0, %v2265
        %v2267 = vpop.f32.mrb[0].mxu0
        %2268 = vmatprep.mubr.bf16.mxu0 0
        %2269 = vmatmul.mubr.bf16.gmra.mrb[0].mxu0 %v2100
        %v2270 = vpop.f32.mrb[0].mxu0
        %v2271 = vadd.f32 0.0, %v2270
        %v2272 = vpop.f32.mrb[0].mxu0
        %v2273 = vpop.f32.mrb[0].mxu0
        %v2274 = vadd.f32 0.0, %v2273
        %v2275 = vpop.f32.mrb[0].mxu0
        %2276 = vmatprep.mubr.bf16.mxu0 0
        %2277 = vmatmul.mubr.bf16.gmra.mrb[0].mxu0 %v2101
        %v2278 = vpop.f32.mrb[0].mxu0
        %v2279 = vadd.f32 0.0, %v2278
        %v2280 = vpop.f32.mrb[0].mxu0
        %v2281 = vpop.f32.mrb[0].mxu0
        %v2282 = vadd.f32 0.0, %v2281
        %v2283 = vpop.f32.mrb[0].mxu0
        %2284 = vmatprep.mubr.bf16.mxu0 0
        %2285 = vmatmul.mubr.bf16.gmra.mrb[0].mxu0 %v2102
        %v2286 = vpop.f32.mrb[0].mxu0
        %v2287 = vadd.f32 0.0, %v2286
        %v2288 = vpop.f32.mrb[0].mxu0
        %v2289 = vpop.f32.mrb[0].mxu0
        %v2290 = vadd.f32 0.0, %v2289
        %v2291 = vpop.f32.mrb[0].mxu0
        %2292 = vmatprep.mubr.bf16.mxu0 0
        %2293 = vmatmul.mubr.bf16.gmra.mrb[0].mxu0 %v2103
        %v2294 = vpop.f32.mrb[0].mxu0
        %v2295 = vadd.f32 0.0, %v2294
        %v2296 = vpop.f32.mrb[0].mxu0
        %v2297 = vpop.f32.mrb[0].mxu0
        %v2298 = vadd.f32 0.0, %v2297
        %v2299 = vpop.f32.mrb[0].mxu0
        %2300 = vmatprep.mubr.bf16.mxu0 0
        %2301 = vmatmul.mubr.bf16.gmra.mrb[0].mxu0 %v2104
        %v2302 = vpop.f32.mrb[0].mxu0
        %v2303 = vadd.f32 0.0, %v2302
        %v2304 = vpop.f32.mrb[0].mxu0
        %v2305 = vpop.f32.mrb[0].mxu0
        %v2306 = vadd.f32 0.0, %v2305
        %v2307 = vpop.f32.mrb[0].mxu0
        %2308 = vmatprep.mubr.bf16.mxu0 0
        %2309 = vmatmul.mubr.bf16.gmra.mrb[0].mxu0 %v2105
        %v2310 = vpop.f32.mrb[0].mxu0
        %v2311 = vadd.f32 0.0, %v2310
        %v2312 = vpop.f32.mrb[0].mxu0
        %v2313 = vpop.f32.mrb[0].mxu0
        %v2314 = vadd.f32 0.0, %v2313
        %v2315 = vpop.f32.mrb[0].mxu0
        %2316 = vmatprep.mubr.bf16.mxu0 0
        %2317 = vmatmul.mubr.bf16.gmra.mrb[0].mxu0 %v2106
        %v2318 = vpop.f32.mrb[0].mxu0
        %v2319 = vadd.f32 0.0, %v2318
        %v2320 = vpop.f32.mrb[0].mxu0
        %v2321 = vpop.f32.mrb[0].mxu0
        %v2322 = vadd.f32 0.0, %v2321
        %v2323 = vpop.f32.mrb[0].mxu0
        %2324 = vmatprep.mubr.bf16.mxu0 0
        %2325 = vmatmul.mubr.bf16.gmra.mrb[0].mxu0 %v2107
        %v2326 = vpop.f32.mrb[0].mxu0
        %v2327 = vadd.f32 0.0, %v2326
        %v2328 = vpop.f32.mrb[0].mxu0
        %v2329 = vpop.f32.mrb[0].mxu0
        %v2330 = vadd.f32 0.0, %v2329
        %v2331 = vpop.f32.mrb[0].mxu0
        %2332 = vdwg.mxu0
        %v2365 = vunpack.c.l.b16 %v1592
        %v2366 = vunpack.c.l.b16 %v1593
        %v2367 = vunpack.c.l.b16 %v1594
        %v2368 = vunpack.c.l.b16 %v1595
        %v2369 = vunpack.c.l.b16 %v1596
        %v2370 = vunpack.c.l.b16 %v1597
        %v2371 = vunpack.c.l.b16 %v1598
        %v2372 = vunpack.c.l.b16 %v1599
        %v2373 = vunpack.c.l.b16 %v1600
        %v2374 = vunpack.c.l.b16 %v1601
        %v2375 = vunpack.c.l.b16 %v1602
        %v2376 = vunpack.c.l.b16 %v1603
        %v2377 = vunpack.c.l.b16 %v1604
        %v2378 = vunpack.c.l.b16 %v1605
        %v2379 = vunpack.c.l.b16 %v1606
        %v2380 = vunpack.c.l.b16 %v1607
        %v2381 = vunpack.c.l.b16 %v1608
        %v2382 = vunpack.c.l.b16 %v1609
        %v2383 = vunpack.c.l.b16 %v1610
        %v2384 = vunpack.c.l.b16 %v1611
        %v2385 = vunpack.c.l.b16 %v1612
        %v2386 = vunpack.c.l.b16 %v1613
        %v2387 = vunpack.c.l.b16 %v1614
        %v2388 = vunpack.c.l.b16 %v1615
        %v2389 = vunpack.c.l.b16 %v1616
        %v2390 = vunpack.c.l.b16 %v1617
        %v2391 = vunpack.c.l.b16 %v1618
        %v2392 = vunpack.c.l.b16 %v1619
        %v2393 = vunpack.c.l.b16 %v1620
        %v2394 = vunpack.c.l.b16 %v1621
        %v2395 = vunpack.c.l.b16 %v1622
        %v2396 = vunpack.c.l.b16 %v1623
        %v2397 = vpack.c.b16 %v2366, %v2365
        %v2398 = vpack.c.b16 %v2368, %v2367
        %v2399 = vpack.c.b16 %v2370, %v2369
        %v2400 = vpack.c.b16 %v2372, %v2371
        %v2401 = vpack.c.b16 %v2374, %v2373
        %v2402 = vpack.c.b16 %v2376, %v2375
        %v2403 = vpack.c.b16 %v2378, %v2377
        %v2404 = vpack.c.b16 %v2380, %v2379
        %v2405 = vpack.c.b16 %v2382, %v2381
        %v2406 = vpack.c.b16 %v2384, %v2383
        %v2407 = vpack.c.b16 %v2386, %v2385
        %v2408 = vpack.c.b16 %v2388, %v2387
        %v2409 = vpack.c.b16 %v2390, %v2389
        %v2410 = vpack.c.b16 %v2392, %v2391
        %v2411 = vpack.c.b16 %v2394, %v2393
        %v2412 = vpack.c.b16 %v2396, %v2395
        %v2445 = vunpack.c.l.b16 %v1624
        %v2446 = vunpack.c.l.b16 %v1625
        %v2447 = vunpack.c.l.b16 %v1626
        %v2448 = vunpack.c.l.b16 %v1627
        %v2449 = vunpack.c.l.b16 %v1628
        %v2450 = vunpack.c.l.b16 %v1629
        %v2451 = vunpack.c.l.b16 %v1630
        %v2452 = vunpack.c.l.b16 %v1631
        %v2453 = vunpack.c.l.b16 %v1632
        %v2454 = vunpack.c.l.b16 %v1633
        %v2455 = vunpack.c.l.b16 %v1634
        %v2456 = vunpack.c.l.b16 %v1635
        %v2457 = vunpack.c.l.b16 %v1636
        %v2458 = vunpack.c.l.b16 %v1637
        %v2459 = vunpack.c.l.b16 %v1638
        %v2460 = vunpack.c.l.b16 %v1639
        %v2461 = vpack.c.b16 %v2446, %v2445
        %v2462 = vpack.c.b16 %v2448, %v2447
        %v2463 = vpack.c.b16 %v2450, %v2449
        %v2464 = vpack.c.b16 %v2452, %v2451
        %v2465 = vpack.c.b16 %v2454, %v2453
        %v2466 = vpack.c.b16 %v2456, %v2455
        %v2467 = vpack.c.b16 %v2458, %v2457
        %v2468 = vpack.c.b16 %v2460, %v2459
        %2477 = vmatprep.subr.bf16.mxu0 0
        %2478 = vmatpush1.bf16.msra.mxu0 %v2461
        %2479 = vmatprep.subr.bf16.mxu0 0
        %2480 = vmatpush1.bf16.msra.mxu0 %v2462
        %2481 = vmatprep.subr.bf16.mxu0 0
        %2482 = vmatpush1.bf16.msra.mxu0 %v2463
        %2483 = vmatprep.subr.bf16.mxu0 0
        %2484 = vmatpush1.bf16.msra.mxu0 %v2464
        %2485 = vmatprep.subr.bf16.mxu0 0
        %2486 = vmatpush1.bf16.msra.mxu0 %v2465
        %2487 = vmatprep.subr.bf16.mxu0 0
        %2488 = vmatpush1.bf16.msra.mxu0 %v2466
        %2489 = vmatprep.subr.bf16.mxu0 0
        %2490 = vmatpush1.bf16.msra.mxu0 %v2467
        %2491 = vmatprep.subr.bf16.mxu0 0
        %2492 = vmatpush1.bf16.msra.mxu0 %v2468
        %2493 = vmatprep.subr.bf16.mxu0 0
        %2494 = vmatpush1.bf16.msra.mxu0 0
        %2495 = vmatprep.subr.bf16.mxu0 0
        %2496 = vmatpush1.bf16.msra.mxu0 0
        %2497 = vmatprep.subr.bf16.mxu0 0
        %2498 = vmatpush1.bf16.msra.mxu0 0
        %2499 = vmatprep.subr.bf16.mxu0 0
        %2500 = vmatpush1.bf16.msra.mxu0 0
        %2501 = vmatprep.subr.bf16.mxu0 0
        %2502 = vmatpush1.bf16.msra.mxu0 0
        %2503 = vmatprep.subr.bf16.mxu0 0
        %2504 = vmatpush1.bf16.msra.mxu0 0
        %2505 = vmatprep.subr.bf16.mxu0 0
        %2506 = vmatpush1.bf16.msra.mxu0 0
        %2507 = vmatprep.subr.bf16.mxu0 0
        %2508 = vmatpush1.bf16.msra.mxu0 0
        %2509 = vmatprep.mubr.bf16.mxu0 0
        %2510 = vmatmul.mubr.bf16.gmra.mrb[0].mxu0 %v2397
        %v2511 = vpop.f32.mrb[0].mxu0
        %v2512 = vadd.f32 %v2207, %v2511
        %v2513 = vpop.f32.mrb[0].mxu0
        %v2514 = vpop.f32.mrb[0].mxu0
        %v2515 = vadd.f32 %v2210, %v2514
        %v2516 = vpop.f32.mrb[0].mxu0
        %2517 = vmatprep.mubr.bf16.mxu0 0
        %2518 = vmatmul.mubr.bf16.gmra.mrb[0].mxu0 %v2398
        %v2519 = vpop.f32.mrb[0].mxu0
        %v2520 = vadd.f32 %v2215, %v2519
        %v2521 = vpop.f32.mrb[0].mxu0
        %v2522 = vpop.f32.mrb[0].mxu0
        %v2523 = vadd.f32 %v2218, %v2522
        %v2524 = vpop.f32.mrb[0].mxu0
        %2525 = vmatprep.mubr.bf16.mxu0 0
        %2526 = vmatmul.mubr.bf16.gmra.mrb[0].mxu0 %v2399
        %v2527 = vpop.f32.mrb[0].mxu0
        %v2528 = vadd.f32 %v2223, %v2527
        %v2529 = vpop.f32.mrb[0].mxu0
        %v2530 = vpop.f32.mrb[0].mxu0
        %v2531 = vadd.f32 %v2226, %v2530
        %v2532 = vpop.f32.mrb[0].mxu0
        %2533 = vmatprep.mubr.bf16.mxu0 0
        %2534 = vmatmul.mubr.bf16.gmra.mrb[0].mxu0 %v2400
        %v2535 = vpop.f32.mrb[0].mxu0
        %v2536 = vadd.f32 %v2231, %v2535
        %v2537 = vpop.f32.mrb[0].mxu0
        %v2538 = vpop.f32.mrb[0].mxu0
        %v2539 = vadd.f32 %v2234, %v2538
        %v2540 = vpop.f32.mrb[0].mxu0
        %2541 = vmatprep.mubr.bf16.mxu0 0
        %2542 = vmatmul.mubr.bf16.gmra.mrb[0].mxu0 %v2401
        %v2543 = vpop.f32.mrb[0].mxu0
        %v2544 = vadd.f32 %v2239, %v2543
        %v2545 = vpop.f32.mrb[0].mxu0
        %v2546 = vpop.f32.mrb[0].mxu0
        %v2547 = vadd.f32 %v2242, %v2546
        %v2548 = vpop.f32.mrb[0].mxu0
        %2549 = vmatprep.mubr.bf16.mxu0 0
        %2550 = vmatmul.mubr.bf16.gmra.mrb[0].mxu0 %v2402
        %v2551 = vpop.f32.mrb[0].mxu0
        %v2552 = vadd.f32 %v2247, %v2551
        %v2553 = vpop.f32.mrb[0].mxu0
        %v2554 = vpop.f32.mrb[0].mxu0
        %v2555 = vadd.f32 %v2250, %v2554
        %v2556 = vpop.f32.mrb[0].mxu0
        %2557 = vmatprep.mubr.bf16.mxu0 0
        %2558 = vmatmul.mubr.bf16.gmra.mrb[0].mxu0 %v2403
        %v2559 = vpop.f32.mrb[0].mxu0
        %v2560 = vadd.f32 %v2255, %v2559
        %v2561 = vpop.f32.mrb[0].mxu0
        %v2562 = vpop.f32.mrb[0].mxu0
        %v2563 = vadd.f32 %v2258, %v2562
        %v2564 = vpop.f32.mrb[0].mxu0
        %2565 = vmatprep.mubr.bf16.mxu0 0
        %2566 = vmatmul.mubr.bf16.gmra.mrb[0].mxu0 %v2404
        %v2567 = vpop.f32.mrb[0].mxu0
        %v2568 = vadd.f32 %v2263, %v2567
        %v2569 = vpop.f32.mrb[0].mxu0
        %v2570 = vpop.f32.mrb[0].mxu0
        %v2571 = vadd.f32 %v2266, %v2570
        %v2572 = vpop.f32.mrb[0].mxu0
        %2573 = vmatprep.mubr.bf16.mxu0 0
        %2574 = vmatmul.mubr.bf16.gmra.mrb[0].mxu0 %v2405
        %v2575 = vpop.f32.mrb[0].mxu0
        %v2576 = vadd.f32 %v2271, %v2575
        %v2577 = vpop.f32.mrb[0].mxu0
        %v2578 = vpop.f32.mrb[0].mxu0
        %v2579 = vadd.f32 %v2274, %v2578
        %v2580 = vpop.f32.mrb[0].mxu0
        %2581 = vmatprep.mubr.bf16.mxu0 0
        %2582 = vmatmul.mubr.bf16.gmra.mrb[0].mxu0 %v2406
        %v2583 = vpop.f32.mrb[0].mxu0
        %v2584 = vadd.f32 %v2279, %v2583
        %v2585 = vpop.f32.mrb[0].mxu0
        %v2586 = vpop.f32.mrb[0].mxu0
        %v2587 = vadd.f32 %v2282, %v2586
        %v2588 = vpop.f32.mrb[0].mxu0
        %2589 = vmatprep.mubr.bf16.mxu0 0
        %2590 = vmatmul.mubr.bf16.gmra.mrb[0].mxu0 %v2407
        %v2591 = vpop.f32.mrb[0].mxu0
        %v2592 = vadd.f32 %v2287, %v2591
        %v2593 = vpop.f32.mrb[0].mxu0
        %v2594 = vpop.f32.mrb[0].mxu0
        %v2595 = vadd.f32 %v2290, %v2594
        %v2596 = vpop.f32.mrb[0].mxu0
        %2597 = vmatprep.mubr.bf16.mxu0 0
        %2598 = vmatmul.mubr.bf16.gmra.mrb[0].mxu0 %v2408
        %v2599 = vpop.f32.mrb[0].mxu0
        %v2600 = vadd.f32 %v2295, %v2599
        %v2601 = vpop.f32.mrb[0].mxu0
        %v2602 = vpop.f32.mrb[0].mxu0
        %v2603 = vadd.f32 %v2298, %v2602
        %v2604 = vpop.f32.mrb[0].mxu0
        %2605 = vmatprep.mubr.bf16.mxu0 0
        %2606 = vmatmul.mubr.bf16.gmra.mrb[0].mxu0 %v2409
        %v2607 = vpop.f32.mrb[0].mxu0
        %v2608 = vadd.f32 %v2303, %v2607
        %v2609 = vpop.f32.mrb[0].mxu0
        %v2610 = vpop.f32.mrb[0].mxu0
        %v2611 = vadd.f32 %v2306, %v2610
        %v2612 = vpop.f32.mrb[0].mxu0
        %2613 = vmatprep.mubr.bf16.mxu0 0
        %2614 = vmatmul.mubr.bf16.gmra.mrb[0].mxu0 %v2410
        %v2615 = vpop.f32.mrb[0].mxu0
        %v2616 = vadd.f32 %v2311, %v2615
        %v2617 = vpop.f32.mrb[0].mxu0
        %v2618 = vpop.f32.mrb[0].mxu0
        %v2619 = vadd.f32 %v2314, %v2618
        %v2620 = vpop.f32.mrb[0].mxu0
        %2621 = vmatprep.mubr.bf16.mxu0 0
        %2622 = vmatmul.mubr.bf16.gmra.mrb[0].mxu0 %v2411
        %v2623 = vpop.f32.mrb[0].mxu0
        %v2624 = vadd.f32 %v2319, %v2623
        %v2625 = vpop.f32.mrb[0].mxu0
        %v2626 = vpop.f32.mrb[0].mxu0
        %v2627 = vadd.f32 %v2322, %v2626
        %v2628 = vpop.f32.mrb[0].mxu0
        %2629 = vmatprep.mubr.bf16.mxu0 0
        %2630 = vmatmul.mubr.bf16.gmra.mrb[0].mxu0 %v2412
        %v2631 = vpop.f32.mrb[0].mxu0
        %v2632 = vadd.f32 %v2327, %v2631
        %v2633 = vpop.f32.mrb[0].mxu0
        %v2634 = vpop.f32.mrb[0].mxu0
        %v2635 = vadd.f32 %v2330, %v2634
        %v2636 = vpop.f32.mrb[0].mxu0
        %2637 = vdwg.mxu0
        %v2638 = vld [vmem:[#allocation2] sm:$0xe]
        %v2639 = vld [vmem:[#allocation2 + $0xc] sm:$0xe]
        %v2640 = vld [vmem:[#allocation2 + $0x18] sm:$0xe]
        %v2641 = vld [vmem:[#allocation2 + $0x24] sm:$0xe]
        %v2642 = vld [vmem:[#allocation2 + $0x30] sm:$0xe]
        %v2643 = vld [vmem:[#allocation2 + $0x3c] sm:$0xe]
        %v2644 = vld [vmem:[#allocation2 + $0x48] sm:$0xe]
        %v2645 = vld [vmem:[#allocation2 + $0x54] sm:$0xe]
        %v2646 = vld [vmem:[#allocation2 + $0x60] sm:$0xe]
        %v2647 = vld [vmem:[#allocation2 + $0x6c] sm:$0xe]
        %v2648 = vld [vmem:[#allocation2 + $0x78] sm:$0xe]
        %v2649 = vld [vmem:[#allocation2 + $0x84] sm:$0xe]
        %v2650 = vld [vmem:[#allocation2 + $0x90] sm:$0xe]
        %v2651 = vld [vmem:[#allocation2 + $0x9c] sm:$0xe]
        %v2652 = vld [vmem:[#allocation2 + $0xa8] sm:$0xe]
        %v2653 = vld [vmem:[#allocation2 + $0xb4] sm:$0xe]
        %vm2686 = vcmask 1042432
        %vm2687 = vcmask 1046532
        %vm2688 = vmor %vm2686, %vm2687
        %v2689 = vrot.slane %v2638, 5
        %v2690 = vrot.slane %v2689, 4
        %v2691 = vrot.slane %v1593, 5
        %v2692 = vsel %vm2688, %v2690, %v2691
        %v2693 = vrot.slane %v2691, 4
        %v2694 = vrot.slane %v1640, 5
        %v2695 = vsel %vm2688, %v2693, %v2694
        %v2696 = vrot.slane %v2639, 5
        %v2697 = vrot.slane %v2696, 4
        %v2698 = vrot.slane %v1595, 5
        %v2699 = vsel %vm2688, %v2697, %v2698
        %v2700 = vrot.slane %v2698, 4
        %v2701 = vrot.slane %v1641, 5
        %v2702 = vsel %vm2688, %v2700, %v2701
        %v2703 = vrot.slane %v2640, 5
        %v2704 = vrot.slane %v2703, 4
        %v2705 = vrot.slane %v1597, 5
        %v2706 = vsel %vm2688, %v2704, %v2705
        %v2707 = vrot.slane %v2705, 4
        %v2708 = vrot.slane %v1642, 5
        %v2709 = vsel %vm2688, %v2707, %v2708
        %v2710 = vrot.slane %v2641, 5
        %v2711 = vrot.slane %v2710, 4
        %v2712 = vrot.slane %v1599, 5
        %v2713 = vsel %vm2688, %v2711, %v2712
        %v2714 = vrot.slane %v2712, 4
        %v2715 = vrot.slane %v1643, 5
        %v2716 = vsel %vm2688, %v2714, %v2715
        %v2717 = vrot.slane %v2642, 5
        %v2718 = vrot.slane %v2717, 4
        %v2719 = vrot.slane %v1601, 5
        %v2720 = vsel %vm2688, %v2718, %v2719
        %v2721 = vrot.slane %v2719, 4
        %v2722 = vrot.slane %v1644, 5
        %v2723 = vsel %vm2688, %v2721, %v2722
        %v2724 = vrot.slane %v2643, 5
        %v2725 = vrot.slane %v2724, 4
        %v2726 = vrot.slane %v1603, 5
        %v2727 = vsel %vm2688, %v2725, %v2726
        %v2728 = vrot.slane %v2726, 4
        %v2729 = vrot.slane %v1645, 5
        %v2730 = vsel %vm2688, %v2728, %v2729
        %v2731 = vrot.slane %v2644, 5
        %v2732 = vrot.slane %v2731, 4
        %v2733 = vrot.slane %v1605, 5
        %v2734 = vsel %vm2688, %v2732, %v2733
        %v2735 = vrot.slane %v2733, 4
        %v2736 = vrot.slane %v1646, 5
        %v2737 = vsel %vm2688, %v2735, %v2736
        %v2738 = vrot.slane %v2645, 5
        %v2739 = vrot.slane %v2738, 4
        %v2740 = vrot.slane %v1607, 5
        %v2741 = vsel %vm2688, %v2739, %v2740
        %v2742 = vrot.slane %v2740, 4
        %v2743 = vrot.slane %v1647, 5
        %v2744 = vsel %vm2688, %v2742, %v2743
        %v2745 = vrot.slane %v2646, 5
        %v2746 = vrot.slane %v2745, 4
        %v2747 = vrot.slane %v1609, 5
        %v2748 = vsel %vm2688, %v2746, %v2747
        %v2749 = vrot.slane %v2747, 4
        %v2750 = vrot.slane %v1648, 5
        %v2751 = vsel %vm2688, %v2749, %v2750
        %v2752 = vrot.slane %v2647, 5
        %v2753 = vrot.slane %v2752, 4
        %v2754 = vrot.slane %v1611, 5
        %v2755 = vsel %vm2688, %v2753, %v2754
        %v2756 = vrot.slane %v2754, 4
        %v2757 = vrot.slane %v1649, 5
        %v2758 = vsel %vm2688, %v2756, %v2757
        %v2759 = vrot.slane %v2648, 5
        %v2760 = vrot.slane %v2759, 4
        %v2761 = vrot.slane %v1613, 5
        %v2762 = vsel %vm2688, %v2760, %v2761
        %v2763 = vrot.slane %v2761, 4
        %v2764 = vrot.slane %v1650, 5
        %v2765 = vsel %vm2688, %v2763, %v2764
        %v2766 = vrot.slane %v2649, 5
        %v2767 = vrot.slane %v2766, 4
        %v2768 = vrot.slane %v1615, 5
        %v2769 = vsel %vm2688, %v2767, %v2768
        %v2770 = vrot.slane %v2768, 4
        %v2771 = vrot.slane %v1651, 5
        %v2772 = vsel %vm2688, %v2770, %v2771
        %v2773 = vrot.slane %v2650, 5
        %v2774 = vrot.slane %v2773, 4
        %v2775 = vrot.slane %v1617, 5
        %v2776 = vsel %vm2688, %v2774, %v2775
        %v2777 = vrot.slane %v2775, 4
        %v2778 = vrot.slane %v1652, 5
        %v2779 = vsel %vm2688, %v2777, %v2778
        %v2780 = vrot.slane %v2651, 5
        %v2781 = vrot.slane %v2780, 4
        %v2782 = vrot.slane %v1619, 5
        %v2783 = vsel %vm2688, %v2781, %v2782
        %v2784 = vrot.slane %v2782, 4
        %v2785 = vrot.slane %v1653, 5
        %v2786 = vsel %vm2688, %v2784, %v2785
        %v2787 = vrot.slane %v2652, 5
        %v2788 = vrot.slane %v2787, 4
        %v2789 = vrot.slane %v1621, 5
        %v2790 = vsel %vm2688, %v2788, %v2789
        %v2791 = vrot.slane %v2789, 4
        %v2792 = vrot.slane %v1654, 5
        %v2793 = vsel %vm2688, %v2791, %v2792
        %v2794 = vrot.slane %v2653, 5
        %v2795 = vrot.slane %v2794, 4
        %v2796 = vrot.slane %v1623, 5
        %v2797 = vsel %vm2688, %v2795, %v2796
        %v2798 = vrot.slane %v2796, 4
        %v2799 = vrot.slane %v1655, 5
        %v2800 = vsel %vm2688, %v2798, %v2799
        %s2801 = scalar_lea.vmem [#allocation6], 128
        %v2802 = vld [vmem:[%s2801] sm:$0xf]
        %v2803 = vld [vmem:[%s2801 + $0x4] sm:$0xf]
        %v2804 = vld [vmem:[%s2801 + $0x8] sm:$0xf]
        %v2805 = vld [vmem:[%s2801 + $0xc] sm:$0xf]
        %v2806 = vld [vmem:[%s2801 + $0x10] sm:$0xf]
        %v2807 = vld [vmem:[%s2801 + $0x14] sm:$0xf]
        %v2808 = vld [vmem:[%s2801 + $0x18] sm:$0xf]
        %v2809 = vld [vmem:[%s2801 + $0x1c] sm:$0xf]
        %v2810 = vld [vmem:[%s2801 + $0x20] sm:$0xf]
        %v2811 = vld [vmem:[%s2801 + $0x24] sm:$0xf]
        %v2812 = vld [vmem:[%s2801 + $0x28] sm:$0xf]
        %v2813 = vld [vmem:[%s2801 + $0x2c] sm:$0xf]
        %v2814 = vld [vmem:[%s2801 + $0x30] sm:$0xf]
        %v2815 = vld [vmem:[%s2801 + $0x34] sm:$0xf]
        %v2816 = vld [vmem:[%s2801 + $0x38] sm:$0xf]
        %v2817 = vld [vmem:[%s2801 + $0x3c] sm:$0xf]
        %v2818 = vunpack.c.l.b16 %v2692
        %v2819 = vunpack.c.l.b16 %v2695
        %v2820 = vunpack.c.l.b16 %v2699
        %v2821 = vunpack.c.l.b16 %v2702
        %v2822 = vunpack.c.l.b16 %v2706
        %v2823 = vunpack.c.l.b16 %v2709
        %v2824 = vunpack.c.l.b16 %v2713
        %v2825 = vunpack.c.l.b16 %v2716
        %v2826 = vunpack.c.l.b16 %v2720
        %v2827 = vunpack.c.l.b16 %v2723
        %v2828 = vunpack.c.l.b16 %v2727
        %v2829 = vunpack.c.l.b16 %v2730
        %v2830 = vunpack.c.l.b16 %v2734
        %v2831 = vunpack.c.l.b16 %v2737
        %v2832 = vunpack.c.l.b16 %v2741
        %v2833 = vunpack.c.l.b16 %v2744
        %v2834 = vunpack.c.l.b16 %v2748
        %v2835 = vunpack.c.l.b16 %v2751
        %v2836 = vunpack.c.l.b16 %v2755
        %v2837 = vunpack.c.l.b16 %v2758
        %v2838 = vunpack.c.l.b16 %v2762
        %v2839 = vunpack.c.l.b16 %v2765
        %v2840 = vunpack.c.l.b16 %v2769
        %v2841 = vunpack.c.l.b16 %v2772
        %v2842 = vunpack.c.l.b16 %v2776
        %v2843 = vunpack.c.l.b16 %v2779
        %v2844 = vunpack.c.l.b16 %v2783
        %v2845 = vunpack.c.l.b16 %v2786
        %v2846 = vunpack.c.l.b16 %v2790
        %v2847 = vunpack.c.l.b16 %v2793
        %v2848 = vunpack.c.l.b16 %v2797
        %v2849 = vunpack.c.l.b16 %v2800
        %v2850 = vpack.c.b16 %v2819, %v2818
        %v2851 = vpack.c.b16 %v2821, %v2820
        %v2852 = vpack.c.b16 %v2823, %v2822
        %v2853 = vpack.c.b16 %v2825, %v2824
        %v2854 = vpack.c.b16 %v2827, %v2826
        %v2855 = vpack.c.b16 %v2829, %v2828
        %v2856 = vpack.c.b16 %v2831, %v2830
        %v2857 = vpack.c.b16 %v2833, %v2832
        %v2858 = vpack.c.b16 %v2835, %v2834
        %v2859 = vpack.c.b16 %v2837, %v2836
        %v2860 = vpack.c.b16 %v2839, %v2838
        %v2861 = vpack.c.b16 %v2841, %v2840
        %v2862 = vpack.c.b16 %v2843, %v2842
        %v2863 = vpack.c.b16 %v2845, %v2844
        %v2864 = vpack.c.b16 %v2847, %v2846
        %v2865 = vpack.c.b16 %v2849, %v2848
        %v2898 = vunpack.c.l.b16 %v2802
        %v2899 = vunpack.c.l.b16 %v2803
        %v2900 = vunpack.c.l.b16 %v2804
        %v2901 = vunpack.c.l.b16 %v2805
        %v2902 = vunpack.c.l.b16 %v2806
        %v2903 = vunpack.c.l.b16 %v2807
        %v2904 = vunpack.c.l.b16 %v2808
        %v2905 = vunpack.c.l.b16 %v2809
        %v2906 = vunpack.c.l.b16 %v2810
        %v2907 = vunpack.c.l.b16 %v2811
        %v2908 = vunpack.c.l.b16 %v2812
        %v2909 = vunpack.c.l.b16 %v2813
        %v2910 = vunpack.c.l.b16 %v2814
        %v2911 = vunpack.c.l.b16 %v2815
        %v2912 = vunpack.c.l.b16 %v2816
        %v2913 = vunpack.c.l.b16 %v2817
        %v2914 = vpack.c.b16 %v2899, %v2898
        %v2915 = vpack.c.b16 %v2901, %v2900
        %v2916 = vpack.c.b16 %v2903, %v2902
        %v2917 = vpack.c.b16 %v2905, %v2904
        %v2918 = vpack.c.b16 %v2907, %v2906
        %v2919 = vpack.c.b16 %v2909, %v2908
        %v2920 = vpack.c.b16 %v2911, %v2910
        %v2921 = vpack.c.b16 %v2913, %v2912
        %2930 = vmatprep.subr.bf16.mxu0 0
        %2931 = vmatpush1.bf16.msra.mxu0 %v2914
        %2932 = vmatprep.subr.bf16.mxu0 0
        %2933 = vmatpush1.bf16.msra.mxu0 %v2915
        %2934 = vmatprep.subr.bf16.mxu0 0
        %2935 = vmatpush1.bf16.msra.mxu0 %v2916
        %2936 = vmatprep.subr.bf16.mxu0 0
        %2937 = vmatpush1.bf16.msra.mxu0 %v2917
        %2938 = vmatprep.subr.bf16.mxu0 0
        %2939 = vmatpush1.bf16.msra.mxu0 %v2918
        %2940 = vmatprep.subr.bf16.mxu0 0
        %2941 = vmatpush1.bf16.msra.mxu0 %v2919
        %2942 = vmatprep.subr.bf16.mxu0 0
        %2943 = vmatpush1.bf16.msra.mxu0 %v2920
        %2944 = vmatprep.subr.bf16.mxu0 0
        %2945 = vmatpush1.bf16.msra.mxu0 %v2921
        %2946 = vmatprep.subr.bf16.mxu0 0
        %2947 = vmatpush1.bf16.msra.mxu0 0
        %2948 = vmatprep.subr.bf16.mxu0 0
        %2949 = vmatpush1.bf16.msra.mxu0 0
        %2950 = vmatprep.subr.bf16.mxu0 0
        %2951 = vmatpush1.bf16.msra.mxu0 0
        %2952 = vmatprep.subr.bf16.mxu0 0
        %2953 = vmatpush1.bf16.msra.mxu0 0
        %2954 = vmatprep.subr.bf16.mxu0 0
        %2955 = vmatpush1.bf16.msra.mxu0 0
        %2956 = vmatprep.subr.bf16.mxu0 0
        %2957 = vmatpush1.bf16.msra.mxu0 0
        %2958 = vmatprep.subr.bf16.mxu0 0
        %2959 = vmatpush1.bf16.msra.mxu0 0
        %2960 = vmatprep.subr.bf16.mxu0 0
        %2961 = vmatpush1.bf16.msra.mxu0 0
        %2962 = vmatprep.mubr.bf16.mxu0 0
        %2963 = vmatmul.mubr.bf16.gmra.mrb[0].mxu0 %v2850
        %v2964 = vpop.f32.mrb[0].mxu0
        %v2965 = vadd.f32 0.0, %v2964
        %v2966 = vpop.f32.mrb[0].mxu0
        %v2967 = vpop.f32.mrb[0].mxu0
        %v2968 = vadd.f32 0.0, %v2967
        %v2969 = vpop.f32.mrb[0].mxu0
        %2970 = vmatprep.mubr.bf16.mxu0 0
        %2971 = vmatmul.mubr.bf16.gmra.mrb[0].mxu0 %v2851
        %v2972 = vpop.f32.mrb[0].mxu0
        %v2973 = vadd.f32 0.0, %v2972
        %v2974 = vpop.f32.mrb[0].mxu0
        %v2975 = vpop.f32.mrb[0].mxu0
        %v2976 = vadd.f32 0.0, %v2975
        %v2977 = vpop.f32.mrb[0].mxu0
        %2978 = vmatprep.mubr.bf16.mxu0 0
        %2979 = vmatmul.mubr.bf16.gmra.mrb[0].mxu0 %v2852
        %v2980 = vpop.f32.mrb[0].mxu0
        %v2981 = vadd.f32 0.0, %v2980
        %v2982 = vpop.f32.mrb[0].mxu0
        %v2983 = vpop.f32.mrb[0].mxu0
        %v2984 = vadd.f32 0.0, %v2983
        %v2985 = vpop.f32.mrb[0].mxu0
        %2986 = vmatprep.mubr.bf16.mxu0 0
        %2987 = vmatmul.mubr.bf16.gmra.mrb[0].mxu0 %v2853
        %v2988 = vpop.f32.mrb[0].mxu0
        %v2989 = vadd.f32 0.0, %v2988
        %v2990 = vpop.f32.mrb[0].mxu0
        %v2991 = vpop.f32.mrb[0].mxu0
        %v2992 = vadd.f32 0.0, %v2991
        %v2993 = vpop.f32.mrb[0].mxu0
        %2994 = vmatprep.mubr.bf16.mxu0 0
        %2995 = vmatmul.mubr.bf16.gmra.mrb[0].mxu0 %v2854
        %v2996 = vpop.f32.mrb[0].mxu0
        %v2997 = vadd.f32 0.0, %v2996
        %v2998 = vpop.f32.mrb[0].mxu0
        %v2999 = vpop.f32.mrb[0].mxu0
        %v3000 = vadd.f32 0.0, %v2999
        %v3001 = vpop.f32.mrb[0].mxu0
        %3002 = vmatprep.mubr.bf16.mxu0 0
        %3003 = vmatmul.mubr.bf16.gmra.mrb[0].mxu0 %v2855
        %v3004 = vpop.f32.mrb[0].mxu0
        %v3005 = vadd.f32 0.0, %v3004
        %v3006 = vpop.f32.mrb[0].mxu0
        %v3007 = vpop.f32.mrb[0].mxu0
        %v3008 = vadd.f32 0.0, %v3007
        %v3009 = vpop.f32.mrb[0].mxu0
        %3010 = vmatprep.mubr.bf16.mxu0 0
        %3011 = vmatmul.mubr.bf16.gmra.mrb[0].mxu0 %v2856
        %v3012 = vpop.f32.mrb[0].mxu0
        %v3013 = vadd.f32 0.0, %v3012
        %v3014 = vpop.f32.mrb[0].mxu0
        %v3015 = vpop.f32.mrb[0].mxu0
        %v3016 = vadd.f32 0.0, %v3015
        %v3017 = vpop.f32.mrb[0].mxu0
        %3018 = vmatprep.mubr.bf16.mxu0 0
        %3019 = vmatmul.mubr.bf16.gmra.mrb[0].mxu0 %v2857
        %v3020 = vpop.f32.mrb[0].mxu0
        %v3021 = vadd.f32 0.0, %v3020
        %v3022 = vpop.f32.mrb[0].mxu0
        %v3023 = vpop.f32.mrb[0].mxu0
        %v3024 = vadd.f32 0.0, %v3023
        %v3025 = vpop.f32.mrb[0].mxu0
        %3026 = vmatprep.mubr.bf16.mxu0 0
        %3027 = vmatmul.mubr.bf16.gmra.mrb[0].mxu0 %v2858
        %v3028 = vpop.f32.mrb[0].mxu0
        %v3029 = vadd.f32 0.0, %v3028
        %v3030 = vpop.f32.mrb[0].mxu0
        %v3031 = vpop.f32.mrb[0].mxu0
        %v3032 = vadd.f32 0.0, %v3031
        %v3033 = vpop.f32.mrb[0].mxu0
        %3034 = vmatprep.mubr.bf16.mxu0 0
        %3035 = vmatmul.mubr.bf16.gmra.mrb[0].mxu0 %v2859
        %v3036 = vpop.f32.mrb[0].mxu0
        %v3037 = vadd.f32 0.0, %v3036
        %v3038 = vpop.f32.mrb[0].mxu0
        %v3039 = vpop.f32.mrb[0].mxu0
        %v3040 = vadd.f32 0.0, %v3039
        %v3041 = vpop.f32.mrb[0].mxu0
        %3042 = vmatprep.mubr.bf16.mxu0 0
        %3043 = vmatmul.mubr.bf16.gmra.mrb[0].mxu0 %v2860
        %v3044 = vpop.f32.mrb[0].mxu0
        %v3045 = vadd.f32 0.0, %v3044
        %v3046 = vpop.f32.mrb[0].mxu0
        %v3047 = vpop.f32.mrb[0].mxu0
        %v3048 = vadd.f32 0.0, %v3047
        %v3049 = vpop.f32.mrb[0].mxu0
        %3050 = vmatprep.mubr.bf16.mxu0 0
        %3051 = vmatmul.mubr.bf16.gmra.mrb[0].mxu0 %v2861
        %v3052 = vpop.f32.mrb[0].mxu0
        %v3053 = vadd.f32 0.0, %v3052
        %v3054 = vpop.f32.mrb[0].mxu0
        %v3055 = vpop.f32.mrb[0].mxu0
        %v3056 = vadd.f32 0.0, %v3055
        %v3057 = vpop.f32.mrb[0].mxu0
        %3058 = vmatprep.mubr.bf16.mxu0 0
        %3059 = vmatmul.mubr.bf16.gmra.mrb[0].mxu0 %v2862
        %v3060 = vpop.f32.mrb[0].mxu0
        %v3061 = vadd.f32 0.0, %v3060
        %v3062 = vpop.f32.mrb[0].mxu0
        %v3063 = vpop.f32.mrb[0].mxu0
        %v3064 = vadd.f32 0.0, %v3063
        %v3065 = vpop.f32.mrb[0].mxu0
        %3066 = vmatprep.mubr.bf16.mxu0 0
        %3067 = vmatmul.mubr.bf16.gmra.mrb[0].mxu0 %v2863
        %v3068 = vpop.f32.mrb[0].mxu0
        %v3069 = vadd.f32 0.0, %v3068
        %v3070 = vpop.f32.mrb[0].mxu0
        %v3071 = vpop.f32.mrb[0].mxu0
        %v3072 = vadd.f32 0.0, %v3071
        %v3073 = vpop.f32.mrb[0].mxu0
        %3074 = vmatprep.mubr.bf16.mxu0 0
        %3075 = vmatmul.mubr.bf16.gmra.mrb[0].mxu0 %v2864
        %v3076 = vpop.f32.mrb[0].mxu0
        %v3077 = vadd.f32 0.0, %v3076
        %v3078 = vpop.f32.mrb[0].mxu0
        %v3079 = vpop.f32.mrb[0].mxu0
        %v3080 = vadd.f32 0.0, %v3079
        %v3081 = vpop.f32.mrb[0].mxu0
        %3082 = vmatprep.mubr.bf16.mxu0 0
        %3083 = vmatmul.mubr.bf16.gmra.mrb[0].mxu0 %v2865
        %v3084 = vpop.f32.mrb[0].mxu0
        %v3085 = vadd.f32 0.0, %v3084
        %v3086 = vpop.f32.mrb[0].mxu0
        %v3087 = vpop.f32.mrb[0].mxu0
        %v3088 = vadd.f32 0.0, %v3087
        %v3089 = vpop.f32.mrb[0].mxu0
        %3090 = vdwg.mxu0
        %v3091 = vadd.f32 %v2512, %v2965
        %v3092 = vadd.f32 %v2515, %v2968
        %v3093 = vadd.f32 %v2520, %v2973
        %v3094 = vadd.f32 %v2523, %v2976
        %v3095 = vadd.f32 %v2528, %v2981
        %v3096 = vadd.f32 %v2531, %v2984
        %v3097 = vadd.f32 %v2536, %v2989
        %v3098 = vadd.f32 %v2539, %v2992
        %v3099 = vadd.f32 %v2544, %v2997
        %v3100 = vadd.f32 %v2547, %v3000
        %v3101 = vadd.f32 %v2552, %v3005
        %v3102 = vadd.f32 %v2555, %v3008
        %v3103 = vadd.f32 %v2560, %v3013
        %v3104 = vadd.f32 %v2563, %v3016
        %v3105 = vadd.f32 %v2568, %v3021
        %v3106 = vadd.f32 %v2571, %v3024
        %v3107 = vadd.f32 %v2576, %v3029
        %v3108 = vadd.f32 %v2579, %v3032
        %v3109 = vadd.f32 %v2584, %v3037
        %v3110 = vadd.f32 %v2587, %v3040
        %v3111 = vadd.f32 %v2592, %v3045
        %v3112 = vadd.f32 %v2595, %v3048
        %v3113 = vadd.f32 %v2600, %v3053
        %v3114 = vadd.f32 %v2603, %v3056
        %v3115 = vadd.f32 %v2608, %v3061
        %v3116 = vadd.f32 %v2611, %v3064
        %v3117 = vadd.f32 %v2616, %v3069
        %v3118 = vadd.f32 %v2619, %v3072
        %v3119 = vadd.f32 %v2624, %v3077
        %v3120 = vadd.f32 %v2627, %v3080
        %v3121 = vadd.f32 %v2632, %v3085
        %v3122 = vadd.f32 %v2635, %v3088
        %v3123 = vld [vmem:[%s1092] sm:$0xf]
        %v3124 = vld [vmem:[%s1092 + $0x4] sm:$0xf]
        %v3125 = vld [vmem:[%s1092 + $0xc] sm:$0xf]
        %v3126 = vld [vmem:[%s1092 + $0x10] sm:$0xf]
        %v3127 = vld [vmem:[%s1092 + $0x18] sm:$0xf]
        %v3128 = vld [vmem:[%s1092 + $0x1c] sm:$0xf]
        %v3129 = vld [vmem:[%s1092 + $0x24] sm:$0xf]
        %v3130 = vld [vmem:[%s1092 + $0x28] sm:$0xf]
        %v3131 = vld [vmem:[%s1092 + $0x30] sm:$0xf]
        %v3132 = vld [vmem:[%s1092 + $0x34] sm:$0xf]
        %v3133 = vld [vmem:[%s1092 + $0x3c] sm:$0xf]
        %v3134 = vld [vmem:[%s1092 + $0x40] sm:$0xf]
        %v3135 = vld [vmem:[%s1092 + $0x48] sm:$0xf]
        %v3136 = vld [vmem:[%s1092 + $0x4c] sm:$0xf]
        %v3137 = vld [vmem:[%s1092 + $0x54] sm:$0xf]
        %v3138 = vld [vmem:[%s1092 + $0x58] sm:$0xf]
        %v3139 = vld [vmem:[%s1092 + $0x60] sm:$0xf]
        %v3140 = vld [vmem:[%s1092 + $0x64] sm:$0xf]
        %v3141 = vld [vmem:[%s1092 + $0x6c] sm:$0xf]
        %v3142 = vld [vmem:[%s1092 + $0x70] sm:$0xf]
        %v3143 = vld [vmem:[%s1092 + $0x78] sm:$0xf]
        %v3144 = vld [vmem:[%s1092 + $0x7c] sm:$0xf]
        %v3145 = vld [vmem:[%s1092 + $0x84] sm:$0xf]
        %v3146 = vld [vmem:[%s1092 + $0x88] sm:$0xf]
        %v3147 = vld [vmem:[%s1092 + $0x90] sm:$0xf]
        %v3148 = vld [vmem:[%s1092 + $0x94] sm:$0xf]
        %v3149 = vld [vmem:[%s1092 + $0x9c] sm:$0xf]
        %v3150 = vld [vmem:[%s1092 + $0xa0] sm:$0xf]
        %v3151 = vld [vmem:[%s1092 + $0xa8] sm:$0xf]
        %v3152 = vld [vmem:[%s1092 + $0xac] sm:$0xf]
        %v3153 = vld [vmem:[%s1092 + $0xb4] sm:$0xf]
        %v3154 = vld [vmem:[%s1092 + $0xb8] sm:$0xf]
        %s3155 = scalar_lea.vmem [#allocation6], 192
        %v3156 = vld [vmem:[%s3155] sm:$0xf]
        %v3157 = vld [vmem:[%s3155 + $0x4] sm:$0xf]
        %v3158 = vld [vmem:[%s3155 + $0x8] sm:$0xf]
        %v3159 = vld [vmem:[%s3155 + $0xc] sm:$0xf]
        %v3160 = vld [vmem:[%s3155 + $0x10] sm:$0xf]
        %v3161 = vld [vmem:[%s3155 + $0x14] sm:$0xf]
        %v3162 = vld [vmem:[%s3155 + $0x18] sm:$0xf]
        %v3163 = vld [vmem:[%s3155 + $0x1c] sm:$0xf]
        %v3164 = vld [vmem:[%s3155 + $0x20] sm:$0xf]
        %v3165 = vld [vmem:[%s3155 + $0x24] sm:$0xf]
        %v3166 = vld [vmem:[%s3155 + $0x28] sm:$0xf]
        %v3167 = vld [vmem:[%s3155 + $0x2c] sm:$0xf]
        %v3168 = vld [vmem:[%s3155 + $0x30] sm:$0xf]
        %v3169 = vld [vmem:[%s3155 + $0x34] sm:$0xf]
        %v3170 = vld [vmem:[%s3155 + $0x38] sm:$0xf]
        %v3171 = vld [vmem:[%s3155 + $0x3c] sm:$0xf]
        %v3204 = vunpack.c.l.b16 %v3123
        %v3205 = vunpack.c.l.b16 %v3124
        %v3206 = vunpack.c.l.b16 %v3125
        %v3207 = vunpack.c.l.b16 %v3126
        %v3208 = vunpack.c.l.b16 %v3127
        %v3209 = vunpack.c.l.b16 %v3128
        %v3210 = vunpack.c.l.b16 %v3129
        %v3211 = vunpack.c.l.b16 %v3130
        %v3212 = vunpack.c.l.b16 %v3131
        %v3213 = vunpack.c.l.b16 %v3132
        %v3214 = vunpack.c.l.b16 %v3133
        %v3215 = vunpack.c.l.b16 %v3134
        %v3216 = vunpack.c.l.b16 %v3135
        %v3217 = vunpack.c.l.b16 %v3136
        %v3218 = vunpack.c.l.b16 %v3137
        %v3219 = vunpack.c.l.b16 %v3138
        %v3220 = vunpack.c.l.b16 %v3139
        %v3221 = vunpack.c.l.b16 %v3140
        %v3222 = vunpack.c.l.b16 %v3141
        %v3223 = vunpack.c.l.b16 %v3142
        %v3224 = vunpack.c.l.b16 %v3143
        %v3225 = vunpack.c.l.b16 %v3144
        %v3226 = vunpack.c.l.b16 %v3145
        %v3227 = vunpack.c.l.b16 %v3146
        %v3228 = vunpack.c.l.b16 %v3147
        %v3229 = vunpack.c.l.b16 %v3148
        %v3230 = vunpack.c.l.b16 %v3149
        %v3231 = vunpack.c.l.b16 %v3150
        %v3232 = vunpack.c.l.b16 %v3151
        %v3233 = vunpack.c.l.b16 %v3152
        %v3234 = vunpack.c.l.b16 %v3153
        %v3235 = vunpack.c.l.b16 %v3154
        %v3236 = vpack.c.b16 %v3205, %v3204
        %v3237 = vpack.c.b16 %v3207, %v3206
        %v3238 = vpack.c.b16 %v3209, %v3208
        %v3239 = vpack.c.b16 %v3211, %v3210
        %v3240 = vpack.c.b16 %v3213, %v3212
        %v3241 = vpack.c.b16 %v3215, %v3214
        %v3242 = vpack.c.b16 %v3217, %v3216
        %v3243 = vpack.c.b16 %v3219, %v3218
        %v3244 = vpack.c.b16 %v3221, %v3220
        %v3245 = vpack.c.b16 %v3223, %v3222
        %v3246 = vpack.c.b16 %v3225, %v3224
        %v3247 = vpack.c.b16 %v3227, %v3226
        %v3248 = vpack.c.b16 %v3229, %v3228
        %v3249 = vpack.c.b16 %v3231, %v3230
        %v3250 = vpack.c.b16 %v3233, %v3232
        %v3251 = vpack.c.b16 %v3235, %v3234
        %v3284 = vunpack.c.l.b16 %v3156
        %v3285 = vunpack.c.l.b16 %v3157
        %v3286 = vunpack.c.l.b16 %v3158
        %v3287 = vunpack.c.l.b16 %v3159
        %v3288 = vunpack.c.l.b16 %v3160
        %v3289 = vunpack.c.l.b16 %v3161
        %v3290 = vunpack.c.l.b16 %v3162
        %v3291 = vunpack.c.l.b16 %v3163
        %v3292 = vunpack.c.l.b16 %v3164
        %v3293 = vunpack.c.l.b16 %v3165
        %v3294 = vunpack.c.l.b16 %v3166
        %v3295 = vunpack.c.l.b16 %v3167
        %v3296 = vunpack.c.l.b16 %v3168
        %v3297 = vunpack.c.l.b16 %v3169
        %v3298 = vunpack.c.l.b16 %v3170
        %v3299 = vunpack.c.l.b16 %v3171
        %v3300 = vpack.c.b16 %v3285, %v3284
        %v3301 = vpack.c.b16 %v3287, %v3286
        %v3302 = vpack.c.b16 %v3289, %v3288
        %v3303 = vpack.c.b16 %v3291, %v3290
        %v3304 = vpack.c.b16 %v3293, %v3292
        %v3305 = vpack.c.b16 %v3295, %v3294
        %v3306 = vpack.c.b16 %v3297, %v3296
        %v3307 = vpack.c.b16 %v3299, %v3298
        %3316 = vmatprep.subr.bf16.mxu0 0
        %3317 = vmatpush1.bf16.msra.mxu0 %v3300
        %3318 = vmatprep.subr.bf16.mxu0 0
        %3319 = vmatpush1.bf16.msra.mxu0 %v3301
        %3320 = vmatprep.subr.bf16.mxu0 0
        %3321 = vmatpush1.bf16.msra.mxu0 %v3302
        %3322 = vmatprep.subr.bf16.mxu0 0
        %3323 = vmatpush1.bf16.msra.mxu0 %v3303
        %3324 = vmatprep.subr.bf16.mxu0 0
        %3325 = vmatpush1.bf16.msra.mxu0 %v3304
        %3326 = vmatprep.subr.bf16.mxu0 0
        %3327 = vmatpush1.bf16.msra.mxu0 %v3305
        %3328 = vmatprep.subr.bf16.mxu0 0
        %3329 = vmatpush1.bf16.msra.mxu0 %v3306
        %3330 = vmatprep.subr.bf16.mxu0 0
        %3331 = vmatpush1.bf16.msra.mxu0 %v3307
        %3332 = vmatprep.subr.bf16.mxu0 0
        %3333 = vmatpush1.bf16.msra.mxu0 0
        %3334 = vmatprep.subr.bf16.mxu0 0
        %3335 = vmatpush1.bf16.msra.mxu0 0
        %3336 = vmatprep.subr.bf16.mxu0 0
        %3337 = vmatpush1.bf16.msra.mxu0 0
        %3338 = vmatprep.subr.bf16.mxu0 0
        %3339 = vmatpush1.bf16.msra.mxu0 0
        %3340 = vmatprep.subr.bf16.mxu0 0
        %3341 = vmatpush1.bf16.msra.mxu0 0
        %3342 = vmatprep.subr.bf16.mxu0 0
        %3343 = vmatpush1.bf16.msra.mxu0 0
        %3344 = vmatprep.subr.bf16.mxu0 0
        %3345 = vmatpush1.bf16.msra.mxu0 0
        %3346 = vmatprep.subr.bf16.mxu0 0
        %3347 = vmatpush1.bf16.msra.mxu0 0
        %3348 = vmatprep.mubr.bf16.mxu0 0
        %3349 = vmatmul.mubr.bf16.gmra.mrb[0].mxu0 %v3236
        %v3350 = vpop.f32.mrb[0].mxu0
        %v3351 = vadd.f32 0.0, %v3350
        %v3352 = vpop.f32.mrb[0].mxu0
        %v3353 = vpop.f32.mrb[0].mxu0
        %v3354 = vadd.f32 0.0, %v3353
        %v3355 = vpop.f32.mrb[0].mxu0
        %3356 = vmatprep.mubr.bf16.mxu0 0
        %3357 = vmatmul.mubr.bf16.gmra.mrb[0].mxu0 %v3237
        %v3358 = vpop.f32.mrb[0].mxu0
        %v3359 = vadd.f32 0.0, %v3358
        %v3360 = vpop.f32.mrb[0].mxu0
        %v3361 = vpop.f32.mrb[0].mxu0
        %v3362 = vadd.f32 0.0, %v3361
        %v3363 = vpop.f32.mrb[0].mxu0
        %3364 = vmatprep.mubr.bf16.mxu0 0
        %3365 = vmatmul.mubr.bf16.gmra.mrb[0].mxu0 %v3238
        %v3366 = vpop.f32.mrb[0].mxu0
        %v3367 = vadd.f32 0.0, %v3366
        %v3368 = vpop.f32.mrb[0].mxu0
        %v3369 = vpop.f32.mrb[0].mxu0
        %v3370 = vadd.f32 0.0, %v3369
        %v3371 = vpop.f32.mrb[0].mxu0
        %3372 = vmatprep.mubr.bf16.mxu0 0
        %3373 = vmatmul.mubr.bf16.gmra.mrb[0].mxu0 %v3239
        %v3374 = vpop.f32.mrb[0].mxu0
        %v3375 = vadd.f32 0.0, %v3374
        %v3376 = vpop.f32.mrb[0].mxu0
        %v3377 = vpop.f32.mrb[0].mxu0
        %v3378 = vadd.f32 0.0, %v3377
        %v3379 = vpop.f32.mrb[0].mxu0
        %3380 = vmatprep.mubr.bf16.mxu0 0
        %3381 = vmatmul.mubr.bf16.gmra.mrb[0].mxu0 %v3240
        %v3382 = vpop.f32.mrb[0].mxu0
        %v3383 = vadd.f32 0.0, %v3382
        %v3384 = vpop.f32.mrb[0].mxu0
        %v3385 = vpop.f32.mrb[0].mxu0
        %v3386 = vadd.f32 0.0, %v3385
        %v3387 = vpop.f32.mrb[0].mxu0
        %3388 = vmatprep.mubr.bf16.mxu0 0
        %3389 = vmatmul.mubr.bf16.gmra.mrb[0].mxu0 %v3241
        %v3390 = vpop.f32.mrb[0].mxu0
        %v3391 = vadd.f32 0.0, %v3390
        %v3392 = vpop.f32.mrb[0].mxu0
        %v3393 = vpop.f32.mrb[0].mxu0
        %v3394 = vadd.f32 0.0, %v3393
        %v3395 = vpop.f32.mrb[0].mxu0
        %3396 = vmatprep.mubr.bf16.mxu0 0
        %3397 = vmatmul.mubr.bf16.gmra.mrb[0].mxu0 %v3242
        %v3398 = vpop.f32.mrb[0].mxu0
        %v3399 = vadd.f32 0.0, %v3398
        %v3400 = vpop.f32.mrb[0].mxu0
        %v3401 = vpop.f32.mrb[0].mxu0
        %v3402 = vadd.f32 0.0, %v3401
        %v3403 = vpop.f32.mrb[0].mxu0
        %3404 = vmatprep.mubr.bf16.mxu0 0
        %3405 = vmatmul.mubr.bf16.gmra.mrb[0].mxu0 %v3243
        %v3406 = vpop.f32.mrb[0].mxu0
        %v3407 = vadd.f32 0.0, %v3406
        %v3408 = vpop.f32.mrb[0].mxu0
        %v3409 = vpop.f32.mrb[0].mxu0
        %v3410 = vadd.f32 0.0, %v3409
        %v3411 = vpop.f32.mrb[0].mxu0
        %3412 = vmatprep.mubr.bf16.mxu0 0
        %3413 = vmatmul.mubr.bf16.gmra.mrb[0].mxu0 %v3244
        %v3414 = vpop.f32.mrb[0].mxu0
        %v3415 = vadd.f32 0.0, %v3414
        %v3416 = vpop.f32.mrb[0].mxu0
        %v3417 = vpop.f32.mrb[0].mxu0
        %v3418 = vadd.f32 0.0, %v3417
        %v3419 = vpop.f32.mrb[0].mxu0
        %3420 = vmatprep.mubr.bf16.mxu0 0
        %3421 = vmatmul.mubr.bf16.gmra.mrb[0].mxu0 %v3245
        %v3422 = vpop.f32.mrb[0].mxu0
        %v3423 = vadd.f32 0.0, %v3422
        %v3424 = vpop.f32.mrb[0].mxu0
        %v3425 = vpop.f32.mrb[0].mxu0
        %v3426 = vadd.f32 0.0, %v3425
        %v3427 = vpop.f32.mrb[0].mxu0
        %3428 = vmatprep.mubr.bf16.mxu0 0
        %3429 = vmatmul.mubr.bf16.gmra.mrb[0].mxu0 %v3246
        %v3430 = vpop.f32.mrb[0].mxu0
        %v3431 = vadd.f32 0.0, %v3430
        %v3432 = vpop.f32.mrb[0].mxu0
        %v3433 = vpop.f32.mrb[0].mxu0
        %v3434 = vadd.f32 0.0, %v3433
        %v3435 = vpop.f32.mrb[0].mxu0
        %3436 = vmatprep.mubr.bf16.mxu0 0
        %3437 = vmatmul.mubr.bf16.gmra.mrb[0].mxu0 %v3247
        %v3438 = vpop.f32.mrb[0].mxu0
        %v3439 = vadd.f32 0.0, %v3438
        %v3440 = vpop.f32.mrb[0].mxu0
        %v3441 = vpop.f32.mrb[0].mxu0
        %v3442 = vadd.f32 0.0, %v3441
        %v3443 = vpop.f32.mrb[0].mxu0
        %3444 = vmatprep.mubr.bf16.mxu0 0
        %3445 = vmatmul.mubr.bf16.gmra.mrb[0].mxu0 %v3248
        %v3446 = vpop.f32.mrb[0].mxu0
        %v3447 = vadd.f32 0.0, %v3446
        %v3448 = vpop.f32.mrb[0].mxu0
        %v3449 = vpop.f32.mrb[0].mxu0
        %v3450 = vadd.f32 0.0, %v3449
        %v3451 = vpop.f32.mrb[0].mxu0
        %3452 = vmatprep.mubr.bf16.mxu0 0
        %3453 = vmatmul.mubr.bf16.gmra.mrb[0].mxu0 %v3249
        %v3454 = vpop.f32.mrb[0].mxu0
        %v3455 = vadd.f32 0.0, %v3454
        %v3456 = vpop.f32.mrb[0].mxu0
        %v3457 = vpop.f32.mrb[0].mxu0
        %v3458 = vadd.f32 0.0, %v3457
        %v3459 = vpop.f32.mrb[0].mxu0
        %3460 = vmatprep.mubr.bf16.mxu0 0
        %3461 = vmatmul.mubr.bf16.gmra.mrb[0].mxu0 %v3250
        %v3462 = vpop.f32.mrb[0].mxu0
        %v3463 = vadd.f32 0.0, %v3462
        %v3464 = vpop.f32.mrb[0].mxu0
        %v3465 = vpop.f32.mrb[0].mxu0
        %v3466 = vadd.f32 0.0, %v3465
        %v3467 = vpop.f32.mrb[0].mxu0
        %3468 = vmatprep.mubr.bf16.mxu0 0
        %3469 = vmatmul.mubr.bf16.gmra.mrb[0].mxu0 %v3251
        %v3470 = vpop.f32.mrb[0].mxu0
        %v3471 = vadd.f32 0.0, %v3470
        %v3472 = vpop.f32.mrb[0].mxu0
        %v3473 = vpop.f32.mrb[0].mxu0
        %v3474 = vadd.f32 0.0, %v3473
        %v3475 = vpop.f32.mrb[0].mxu0
        %3476 = vdwg.mxu0
        %v3477 = vadd.f32 %v3091, %v3351
        %v3478 = vadd.f32 %v3092, %v3354
        %v3479 = vadd.f32 %v3093, %v3359
        %v3480 = vadd.f32 %v3094, %v3362
        %v3481 = vadd.f32 %v3095, %v3367
        %v3482 = vadd.f32 %v3096, %v3370
        %v3483 = vadd.f32 %v3097, %v3375
        %v3484 = vadd.f32 %v3098, %v3378
        %v3485 = vadd.f32 %v3099, %v3383
        %v3486 = vadd.f32 %v3100, %v3386
        %v3487 = vadd.f32 %v3101, %v3391
        %v3488 = vadd.f32 %v3102, %v3394
        %v3489 = vadd.f32 %v3103, %v3399
        %v3490 = vadd.f32 %v3104, %v3402
        %v3491 = vadd.f32 %v3105, %v3407
        %v3492 = vadd.f32 %v3106, %v3410
        %v3493 = vadd.f32 %v3107, %v3415
        %v3494 = vadd.f32 %v3108, %v3418
        %v3495 = vadd.f32 %v3109, %v3423
        %v3496 = vadd.f32 %v3110, %v3426
        %v3497 = vadd.f32 %v3111, %v3431
        %v3498 = vadd.f32 %v3112, %v3434
        %v3499 = vadd.f32 %v3113, %v3439
        %v3500 = vadd.f32 %v3114, %v3442
        %v3501 = vadd.f32 %v3115, %v3447
        %v3502 = vadd.f32 %v3116, %v3450
        %v3503 = vadd.f32 %v3117, %v3455
        %v3504 = vadd.f32 %v3118, %v3458
        %v3505 = vadd.f32 %v3119, %v3463
        %v3506 = vadd.f32 %v3120, %v3466
        %v3507 = vadd.f32 %v3121, %v3471
        %v3508 = vadd.f32 %v3122, %v3474
        %v3509 = vld [vmem:[%s1092] sm:$0xf]
        %v3510 = vld [vmem:[%s1092 + $0x4] sm:$0xf]
        %v3511 = vld [vmem:[%s1092 + $0x8] sm:$0x1]
        %v3512 = vld [vmem:[%s1092 + $0xc] sm:$0xf]
        %v3513 = vld [vmem:[%s1092 + $0x10] sm:$0xf]
        %v3514 = vld [vmem:[%s1092 + $0x14] sm:$0x1]
        %v3515 = vld [vmem:[%s1092 + $0x18] sm:$0xf]
        %v3516 = vld [vmem:[%s1092 + $0x1c] sm:$0xf]
        %v3517 = vld [vmem:[%s1092 + $0x20] sm:$0x1]
        %v3518 = vld [vmem:[%s1092 + $0x24] sm:$0xf]
        %v3519 = vld [vmem:[%s1092 + $0x28] sm:$0xf]
        %v3520 = vld [vmem:[%s1092 + $0x2c] sm:$0x1]
        %v3521 = vld [vmem:[%s1092 + $0x30] sm:$0xf]
        %v3522 = vld [vmem:[%s1092 + $0x34] sm:$0xf]
        %v3523 = vld [vmem:[%s1092 + $0x38] sm:$0x1]
        %v3524 = vld [vmem:[%s1092 + $0x3c] sm:$0xf]
        %v3525 = vld [vmem:[%s1092 + $0x40] sm:$0xf]
        %v3526 = vld [vmem:[%s1092 + $0x44] sm:$0x1]
        %v3527 = vld [vmem:[%s1092 + $0x48] sm:$0xf]
        %v3528 = vld [vmem:[%s1092 + $0x4c] sm:$0xf]
        %v3529 = vld [vmem:[%s1092 + $0x50] sm:$0x1]
        %v3530 = vld [vmem:[%s1092 + $0x54] sm:$0xf]
        %v3531 = vld [vmem:[%s1092 + $0x58] sm:$0xf]
        %v3532 = vld [vmem:[%s1092 + $0x5c] sm:$0x1]
        %v3533 = vld [vmem:[%s1092 + $0x60] sm:$0xf]
        %v3534 = vld [vmem:[%s1092 + $0x64] sm:$0xf]
        %v3535 = vld [vmem:[%s1092 + $0x68] sm:$0x1]
        %v3536 = vld [vmem:[%s1092 + $0x6c] sm:$0xf]
        %v3537 = vld [vmem:[%s1092 + $0x70] sm:$0xf]
        %v3538 = vld [vmem:[%s1092 + $0x74] sm:$0x1]
        %v3539 = vld [vmem:[%s1092 + $0x78] sm:$0xf]
        %v3540 = vld [vmem:[%s1092 + $0x7c] sm:$0xf]
        %v3541 = vld [vmem:[%s1092 + $0x80] sm:$0x1]
        %v3542 = vld [vmem:[%s1092 + $0x84] sm:$0xf]
        %v3543 = vld [vmem:[%s1092 + $0x88] sm:$0xf]
        %v3544 = vld [vmem:[%s1092 + $0x8c] sm:$0x1]
        %v3545 = vld [vmem:[%s1092 + $0x90] sm:$0xf]
        %v3546 = vld [vmem:[%s1092 + $0x94] sm:$0xf]
        %v3547 = vld [vmem:[%s1092 + $0x98] sm:$0x1]
        %v3548 = vld [vmem:[%s1092 + $0x9c] sm:$0xf]
        %v3549 = vld [vmem:[%s1092 + $0xa0] sm:$0xf]
        %v3550 = vld [vmem:[%s1092 + $0xa4] sm:$0x1]
        %v3551 = vld [vmem:[%s1092 + $0xa8] sm:$0xf]
        %v3552 = vld [vmem:[%s1092 + $0xac] sm:$0xf]
        %v3553 = vld [vmem:[%s1092 + $0xb0] sm:$0x1]
        %v3554 = vld [vmem:[%s1092 + $0xb4] sm:$0xf]
        %v3555 = vld [vmem:[%s1092 + $0xb8] sm:$0xf]
        %v3556 = vld [vmem:[%s1092 + $0xbc] sm:$0x1]
        %v3558 = vshrl.u32 %v3509, 16
        %v3560 = vrot.slane %v3558, 4
        %v3561 = vshll.u32 %v3509, 16
        %v3563 = vrot.slane %v3561, 5
        %v3564 = vor.u32 %v3560, %v3563
        %v3565 = vrot.slane %v3564, 4
        %v3567 = vshll.u32 %v3510, 16
        %v3569 = vrot.slane %v3567, 5
        %v3570 = vsel %vm1658, %v3565, %v3569
        %v3571 = vshrl.u32 %v3510, 16
        %v3573 = vrot.slane %v3571, 4
        %v3574 = vor.u32 %v3573, %v3569
        %v3575 = vrot.slane %v3574, 4
        %v3577 = vshll.u32 %v3511, 16
        %v3579 = vrot.slane %v3577, 5
        %v3580 = vsel %vm1658, %v3575, %v3579
        %v3582 = vshrl.u32 %v3512, 16
        %v3584 = vrot.slane %v3582, 4
        %v3585 = vshll.u32 %v3512, 16
        %v3587 = vrot.slane %v3585, 5
        %v3588 = vor.u32 %v3584, %v3587
        %v3589 = vrot.slane %v3588, 4
        %v3591 = vshll.u32 %v3513, 16
        %v3593 = vrot.slane %v3591, 5
        %v3594 = vsel %vm1658, %v3589, %v3593
        %v3595 = vshrl.u32 %v3513, 16
        %v3597 = vrot.slane %v3595, 4
        %v3598 = vor.u32 %v3597, %v3593
        %v3599 = vrot.slane %v3598, 4
        %v3601 = vshll.u32 %v3514, 16
        %v3603 = vrot.slane %v3601, 5
        %v3604 = vsel %vm1658, %v3599, %v3603
        %v3606 = vshrl.u32 %v3515, 16
        %v3608 = vrot.slane %v3606, 4
        %v3609 = vshll.u32 %v3515, 16
        %v3611 = vrot.slane %v3609, 5
        %v3612 = vor.u32 %v3608, %v3611
        %v3613 = vrot.slane %v3612, 4
        %v3615 = vshll.u32 %v3516, 16
        %v3617 = vrot.slane %v3615, 5
        %v3618 = vsel %vm1658, %v3613, %v3617
        %v3619 = vshrl.u32 %v3516, 16
        %v3621 = vrot.slane %v3619, 4
        %v3622 = vor.u32 %v3621, %v3617
        %v3623 = vrot.slane %v3622, 4
        %v3625 = vshll.u32 %v3517, 16
        %v3627 = vrot.slane %v3625, 5
        %v3628 = vsel %vm1658, %v3623, %v3627
        %v3630 = vshrl.u32 %v3518, 16
        %v3632 = vrot.slane %v3630, 4
        %v3633 = vshll.u32 %v3518, 16
        %v3635 = vrot.slane %v3633, 5
        %v3636 = vor.u32 %v3632, %v3635
        %v3637 = vrot.slane %v3636, 4
        %v3639 = vshll.u32 %v3519, 16
        %v3641 = vrot.slane %v3639, 5
        %v3642 = vsel %vm1658, %v3637, %v3641
        %v3643 = vshrl.u32 %v3519, 16
        %v3645 = vrot.slane %v3643, 4
        %v3646 = vor.u32 %v3645, %v3641
        %v3647 = vrot.slane %v3646, 4
        %v3649 = vshll.u32 %v3520, 16
        %v3651 = vrot.slane %v3649, 5
        %v3652 = vsel %vm1658, %v3647, %v3651
        %v3654 = vshrl.u32 %v3521, 16
        %v3656 = vrot.slane %v3654, 4
        %v3657 = vshll.u32 %v3521, 16
        %v3659 = vrot.slane %v3657, 5
        %v3660 = vor.u32 %v3656, %v3659
        %v3661 = vrot.slane %v3660, 4
        %v3663 = vshll.u32 %v3522, 16
        %v3665 = vrot.slane %v3663, 5
        %v3666 = vsel %vm1658, %v3661, %v3665
        %v3667 = vshrl.u32 %v3522, 16
        %v3669 = vrot.slane %v3667, 4
        %v3670 = vor.u32 %v3669, %v3665
        %v3671 = vrot.slane %v3670, 4
        %v3673 = vshll.u32 %v3523, 16
        %v3675 = vrot.slane %v3673, 5
        %v3676 = vsel %vm1658, %v3671, %v3675
        %v3678 = vshrl.u32 %v3524, 16
        %v3680 = vrot.slane %v3678, 4
        %v3681 = vshll.u32 %v3524, 16
        %v3683 = vrot.slane %v3681, 5
        %v3684 = vor.u32 %v3680, %v3683
        %v3685 = vrot.slane %v3684, 4
        %v3687 = vshll.u32 %v3525, 16
        %v3689 = vrot.slane %v3687, 5
        %v3690 = vsel %vm1658, %v3685, %v3689
        %v3691 = vshrl.u32 %v3525, 16
        %v3693 = vrot.slane %v3691, 4
        %v3694 = vor.u32 %v3693, %v3689
        %v3695 = vrot.slane %v3694, 4
        %v3697 = vshll.u32 %v3526, 16
        %v3699 = vrot.slane %v3697, 5
        %v3700 = vsel %vm1658, %v3695, %v3699
        %v3702 = vshrl.u32 %v3527, 16
        %v3704 = vrot.slane %v3702, 4
        %v3705 = vshll.u32 %v3527, 16
        %v3707 = vrot.slane %v3705, 5
        %v3708 = vor.u32 %v3704, %v3707
        %v3709 = vrot.slane %v3708, 4
        %v3711 = vshll.u32 %v3528, 16
        %v3713 = vrot.slane %v3711, 5
        %v3714 = vsel %vm1658, %v3709, %v3713
        %v3715 = vshrl.u32 %v3528, 16
        %v3717 = vrot.slane %v3715, 4
        %v3718 = vor.u32 %v3717, %v3713
        %v3719 = vrot.slane %v3718, 4
        %v3721 = vshll.u32 %v3529, 16
        %v3723 = vrot.slane %v3721, 5
        %v3724 = vsel %vm1658, %v3719, %v3723
        %v3726 = vshrl.u32 %v3530, 16
        %v3728 = vrot.slane %v3726, 4
        %v3729 = vshll.u32 %v3530, 16
        %v3731 = vrot.slane %v3729, 5
        %v3732 = vor.u32 %v3728, %v3731
        %v3733 = vrot.slane %v3732, 4
        %v3735 = vshll.u32 %v3531, 16
        %v3737 = vrot.slane %v3735, 5
        %v3738 = vsel %vm1658, %v3733, %v3737
        %v3739 = vshrl.u32 %v3531, 16
        %v3741 = vrot.slane %v3739, 4
        %v3742 = vor.u32 %v3741, %v3737
        %v3743 = vrot.slane %v3742, 4
        %v3745 = vshll.u32 %v3532, 16
        %v3747 = vrot.slane %v3745, 5
        %v3748 = vsel %vm1658, %v3743, %v3747
        %v3750 = vshrl.u32 %v3533, 16
        %v3752 = vrot.slane %v3750, 4
        %v3753 = vshll.u32 %v3533, 16
        %v3755 = vrot.slane %v3753, 5
        %v3756 = vor.u32 %v3752, %v3755
        %v3757 = vrot.slane %v3756, 4
        %v3759 = vshll.u32 %v3534, 16
        %v3761 = vrot.slane %v3759, 5
        %v3762 = vsel %vm1658, %v3757, %v3761
        %v3763 = vshrl.u32 %v3534, 16
        %v3765 = vrot.slane %v3763, 4
        %v3766 = vor.u32 %v3765, %v3761
        %v3767 = vrot.slane %v3766, 4
        %v3769 = vshll.u32 %v3535, 16
        %v3771 = vrot.slane %v3769, 5
        %v3772 = vsel %vm1658, %v3767, %v3771
        %v3774 = vshrl.u32 %v3536, 16
        %v3776 = vrot.slane %v3774, 4
        %v3777 = vshll.u32 %v3536, 16
        %v3779 = vrot.slane %v3777, 5
        %v3780 = vor.u32 %v3776, %v3779
        %v3781 = vrot.slane %v3780, 4
        %v3783 = vshll.u32 %v3537, 16
        %v3785 = vrot.slane %v3783, 5
        %v3786 = vsel %vm1658, %v3781, %v3785
        %v3787 = vshrl.u32 %v3537, 16
        %v3789 = vrot.slane %v3787, 4
        %v3790 = vor.u32 %v3789, %v3785
        %v3791 = vrot.slane %v3790, 4
        %v3793 = vshll.u32 %v3538, 16
        %v3795 = vrot.slane %v3793, 5
        %v3796 = vsel %vm1658, %v3791, %v3795
        %v3798 = vshrl.u32 %v3539, 16
        %v3800 = vrot.slane %v3798, 4
        %v3801 = vshll.u32 %v3539, 16
        %v3803 = vrot.slane %v3801, 5
        %v3804 = vor.u32 %v3800, %v3803
        %v3805 = vrot.slane %v3804, 4
        %v3807 = vshll.u32 %v3540, 16
        %v3809 = vrot.slane %v3807, 5
        %v3810 = vsel %vm1658, %v3805, %v3809
        %v3811 = vshrl.u32 %v3540, 16
        %v3813 = vrot.slane %v3811, 4
        %v3814 = vor.u32 %v3813, %v3809
        %v3815 = vrot.slane %v3814, 4
        %v3817 = vshll.u32 %v3541, 16
        %v3819 = vrot.slane %v3817, 5
        %v3820 = vsel %vm1658, %v3815, %v3819
        %v3822 = vshrl.u32 %v3542, 16
        %v3824 = vrot.slane %v3822, 4
        %v3825 = vshll.u32 %v3542, 16
        %v3827 = vrot.slane %v3825, 5
        %v3828 = vor.u32 %v3824, %v3827
        %v3829 = vrot.slane %v3828, 4
        %v3831 = vshll.u32 %v3543, 16
        %v3833 = vrot.slane %v3831, 5
        %v3834 = vsel %vm1658, %v3829, %v3833
        %v3835 = vshrl.u32 %v3543, 16
        %v3837 = vrot.slane %v3835, 4
        %v3838 = vor.u32 %v3837, %v3833
        %v3839 = vrot.slane %v3838, 4
        %v3841 = vshll.u32 %v3544, 16
        %v3843 = vrot.slane %v3841, 5
        %v3844 = vsel %vm1658, %v3839, %v3843
        %v3846 = vshrl.u32 %v3545, 16
        %v3848 = vrot.slane %v3846, 4
        %v3849 = vshll.u32 %v3545, 16
        %v3851 = vrot.slane %v3849, 5
        %v3852 = vor.u32 %v3848, %v3851
        %v3853 = vrot.slane %v3852, 4
        %v3855 = vshll.u32 %v3546, 16
        %v3857 = vrot.slane %v3855, 5
        %v3858 = vsel %vm1658, %v3853, %v3857
        %v3859 = vshrl.u32 %v3546, 16
        %v3861 = vrot.slane %v3859, 4
        %v3862 = vor.u32 %v3861, %v3857
        %v3863 = vrot.slane %v3862, 4
        %v3865 = vshll.u32 %v3547, 16
        %v3867 = vrot.slane %v3865, 5
        %v3868 = vsel %vm1658, %v3863, %v3867
        %v3870 = vshrl.u32 %v3548, 16
        %v3872 = vrot.slane %v3870, 4
        %v3873 = vshll.u32 %v3548, 16
        %v3875 = vrot.slane %v3873, 5
        %v3876 = vor.u32 %v3872, %v3875
        %v3877 = vrot.slane %v3876, 4
        %v3879 = vshll.u32 %v3549, 16
        %v3881 = vrot.slane %v3879, 5
        %v3882 = vsel %vm1658, %v3877, %v3881
        %v3883 = vshrl.u32 %v3549, 16
        %v3885 = vrot.slane %v3883, 4
        %v3886 = vor.u32 %v3885, %v3881
        %v3887 = vrot.slane %v3886, 4
        %v3889 = vshll.u32 %v3550, 16
        %v3891 = vrot.slane %v3889, 5
        %v3892 = vsel %vm1658, %v3887, %v3891
        %v3894 = vshrl.u32 %v3551, 16
        %v3896 = vrot.slane %v3894, 4
        %v3897 = vshll.u32 %v3551, 16
        %v3899 = vrot.slane %v3897, 5
        %v3900 = vor.u32 %v3896, %v3899
        %v3901 = vrot.slane %v3900, 4
        %v3903 = vshll.u32 %v3552, 16
        %v3905 = vrot.slane %v3903, 5
        %v3906 = vsel %vm1658, %v3901, %v3905
        %v3907 = vshrl.u32 %v3552, 16
        %v3909 = vrot.slane %v3907, 4
        %v3910 = vor.u32 %v3909, %v3905
        %v3911 = vrot.slane %v3910, 4
        %v3913 = vshll.u32 %v3553, 16
        %v3915 = vrot.slane %v3913, 5
        %v3916 = vsel %vm1658, %v3911, %v3915
        %v3918 = vshrl.u32 %v3554, 16
        %v3920 = vrot.slane %v3918, 4
        %v3921 = vshll.u32 %v3554, 16
        %v3923 = vrot.slane %v3921, 5
        %v3924 = vor.u32 %v3920, %v3923
        %v3925 = vrot.slane %v3924, 4
        %v3927 = vshll.u32 %v3555, 16
        %v3929 = vrot.slane %v3927, 5
        %v3930 = vsel %vm1658, %v3925, %v3929
        %v3931 = vshrl.u32 %v3555, 16
        %v3933 = vrot.slane %v3931, 4
        %v3934 = vor.u32 %v3933, %v3929
        %v3935 = vrot.slane %v3934, 4
        %v3937 = vshll.u32 %v3556, 16
        %v3939 = vrot.slane %v3937, 5
        %v3940 = vsel %vm1658, %v3935, %v3939
        %s3941 = scalar_lea.vmem [#allocation6], 256
        %v3942 = vld [vmem:[%s3941] sm:$0xf]
        %v3943 = vld [vmem:[%s3941 + $0x4] sm:$0xf]
        %v3944 = vld [vmem:[%s3941 + $0x8] sm:$0xf]
        %v3945 = vld [vmem:[%s3941 + $0xc] sm:$0xf]
        %v3946 = vld [vmem:[%s3941 + $0x10] sm:$0xf]
        %v3947 = vld [vmem:[%s3941 + $0x14] sm:$0xf]
        %v3948 = vld [vmem:[%s3941 + $0x18] sm:$0xf]
        %v3949 = vld [vmem:[%s3941 + $0x1c] sm:$0xf]
        %v3950 = vld [vmem:[%s3941 + $0x20] sm:$0xf]
        %v3951 = vld [vmem:[%s3941 + $0x24] sm:$0xf]
        %v3952 = vld [vmem:[%s3941 + $0x28] sm:$0xf]
        %v3953 = vld [vmem:[%s3941 + $0x2c] sm:$0xf]
        %v3954 = vld [vmem:[%s3941 + $0x30] sm:$0xf]
        %v3955 = vld [vmem:[%s3941 + $0x34] sm:$0xf]
        %v3956 = vld [vmem:[%s3941 + $0x38] sm:$0xf]
        %v3957 = vld [vmem:[%s3941 + $0x3c] sm:$0xf]
        %v3958 = vunpack.c.l.b16 %v3570
        %v3959 = vunpack.c.l.b16 %v3580
        %v3960 = vunpack.c.l.b16 %v3594
        %v3961 = vunpack.c.l.b16 %v3604
        %v3962 = vunpack.c.l.b16 %v3618
        %v3963 = vunpack.c.l.b16 %v3628
        %v3964 = vunpack.c.l.b16 %v3642
        %v3965 = vunpack.c.l.b16 %v3652
        %v3966 = vunpack.c.l.b16 %v3666
        %v3967 = vunpack.c.l.b16 %v3676
        %v3968 = vunpack.c.l.b16 %v3690
        %v3969 = vunpack.c.l.b16 %v3700
        %v3970 = vunpack.c.l.b16 %v3714
        %v3971 = vunpack.c.l.b16 %v3724
        %v3972 = vunpack.c.l.b16 %v3738
        %v3973 = vunpack.c.l.b16 %v3748
        %v3974 = vunpack.c.l.b16 %v3762
        %v3975 = vunpack.c.l.b16 %v3772
        %v3976 = vunpack.c.l.b16 %v3786
        %v3977 = vunpack.c.l.b16 %v3796
        %v3978 = vunpack.c.l.b16 %v3810
        %v3979 = vunpack.c.l.b16 %v3820
        %v3980 = vunpack.c.l.b16 %v3834
        %v3981 = vunpack.c.l.b16 %v3844
        %v3982 = vunpack.c.l.b16 %v3858
        %v3983 = vunpack.c.l.b16 %v3868
        %v3984 = vunpack.c.l.b16 %v3882
        %v3985 = vunpack.c.l.b16 %v3892
        %v3986 = vunpack.c.l.b16 %v3906
        %v3987 = vunpack.c.l.b16 %v3916
        %v3988 = vunpack.c.l.b16 %v3930
        %v3989 = vunpack.c.l.b16 %v3940
        %v3990 = vpack.c.b16 %v3959, %v3958
        %v3991 = vpack.c.b16 %v3961, %v3960
        %v3992 = vpack.c.b16 %v3963, %v3962
        %v3993 = vpack.c.b16 %v3965, %v3964
        %v3994 = vpack.c.b16 %v3967, %v3966
        %v3995 = vpack.c.b16 %v3969, %v3968
        %v3996 = vpack.c.b16 %v3971, %v3970
        %v3997 = vpack.c.b16 %v3973, %v3972
        %v3998 = vpack.c.b16 %v3975, %v3974
        %v3999 = vpack.c.b16 %v3977, %v3976
        %v4000 = vpack.c.b16 %v3979, %v3978
        %v4001 = vpack.c.b16 %v3981, %v3980
        %v4002 = vpack.c.b16 %v3983, %v3982
        %v4003 = vpack.c.b16 %v3985, %v3984
        %v4004 = vpack.c.b16 %v3987, %v3986
        %v4005 = vpack.c.b16 %v3989, %v3988
        %v4038 = vunpack.c.l.b16 %v3942
        %v4039 = vunpack.c.l.b16 %v3943
        %v4040 = vunpack.c.l.b16 %v3944
        %v4041 = vunpack.c.l.b16 %v3945
        %v4042 = vunpack.c.l.b16 %v3946
        %v4043 = vunpack.c.l.b16 %v3947
        %v4044 = vunpack.c.l.b16 %v3948
        %v4045 = vunpack.c.l.b16 %v3949
        %v4046 = vunpack.c.l.b16 %v3950
        %v4047 = vunpack.c.l.b16 %v3951
        %v4048 = vunpack.c.l.b16 %v3952
        %v4049 = vunpack.c.l.b16 %v3953
        %v4050 = vunpack.c.l.b16 %v3954
        %v4051 = vunpack.c.l.b16 %v3955
        %v4052 = vunpack.c.l.b16 %v3956
        %v4053 = vunpack.c.l.b16 %v3957
        %v4054 = vpack.c.b16 %v4039, %v4038
        %v4055 = vpack.c.b16 %v4041, %v4040
        %v4056 = vpack.c.b16 %v4043, %v4042
        %v4057 = vpack.c.b16 %v4045, %v4044
        %v4058 = vpack.c.b16 %v4047, %v4046
        %v4059 = vpack.c.b16 %v4049, %v4048
        %v4060 = vpack.c.b16 %v4051, %v4050
        %v4061 = vpack.c.b16 %v4053, %v4052
        %4070 = vmatprep.subr.bf16.mxu0 0
        %4071 = vmatpush1.bf16.msra.mxu0 %v4054
        %4072 = vmatprep.subr.bf16.mxu0 0
        %4073 = vmatpush1.bf16.msra.mxu0 %v4055
        %4074 = vmatprep.subr.bf16.mxu0 0
        %4075 = vmatpush1.bf16.msra.mxu0 %v4056
        %4076 = vmatprep.subr.bf16.mxu0 0
        %4077 = vmatpush1.bf16.msra.mxu0 %v4057
        %4078 = vmatprep.subr.bf16.mxu0 0
        %4079 = vmatpush1.bf16.msra.mxu0 %v4058
        %4080 = vmatprep.subr.bf16.mxu0 0
        %4081 = vmatpush1.bf16.msra.mxu0 %v4059
        %4082 = vmatprep.subr.bf16.mxu0 0
        %4083 = vmatpush1.bf16.msra.mxu0 %v4060
        %4084 = vmatprep.subr.bf16.mxu0 0
        %4085 = vmatpush1.bf16.msra.mxu0 %v4061
        %4086 = vmatprep.subr.bf16.mxu0 0
        %4087 = vmatpush1.bf16.msra.mxu0 0
        %4088 = vmatprep.subr.bf16.mxu0 0
        %4089 = vmatpush1.bf16.msra.mxu0 0
        %4090 = vmatprep.subr.bf16.mxu0 0
        %4091 = vmatpush1.bf16.msra.mxu0 0
        %4092 = vmatprep.subr.bf16.mxu0 0
        %4093 = vmatpush1.bf16.msra.mxu0 0
        %4094 = vmatprep.subr.bf16.mxu0 0
        %4095 = vmatpush1.bf16.msra.mxu0 0
        %4096 = vmatprep.subr.bf16.mxu0 0
        %4097 = vmatpush1.bf16.msra.mxu0 0
        %4098 = vmatprep.subr.bf16.mxu0 0
        %4099 = vmatpush1.bf16.msra.mxu0 0
        %4100 = vmatprep.subr.bf16.mxu0 0
        %4101 = vmatpush1.bf16.msra.mxu0 0
        %4102 = vmatprep.mubr.bf16.mxu0 0
        %4103 = vmatmul.mubr.bf16.gmra.mrb[0].mxu0 %v3990
        %v4104 = vpop.f32.mrb[0].mxu0
        %v4105 = vadd.f32 0.0, %v4104
        %v4106 = vpop.f32.mrb[0].mxu0
        %v4107 = vpop.f32.mrb[0].mxu0
        %v4108 = vadd.f32 0.0, %v4107
        %v4109 = vpop.f32.mrb[0].mxu0
        %4110 = vmatprep.mubr.bf16.mxu0 0
        %4111 = vmatmul.mubr.bf16.gmra.mrb[0].mxu0 %v3991
        %v4112 = vpop.f32.mrb[0].mxu0
        %v4113 = vadd.f32 0.0, %v4112
        %v4114 = vpop.f32.mrb[0].mxu0
        %v4115 = vpop.f32.mrb[0].mxu0
        %v4116 = vadd.f32 0.0, %v4115
        %v4117 = vpop.f32.mrb[0].mxu0
        %4118 = vmatprep.mubr.bf16.mxu0 0
        %4119 = vmatmul.mubr.bf16.gmra.mrb[0].mxu0 %v3992
        %v4120 = vpop.f32.mrb[0].mxu0
        %v4121 = vadd.f32 0.0, %v4120
        %v4122 = vpop.f32.mrb[0].mxu0
        %v4123 = vpop.f32.mrb[0].mxu0
        %v4124 = vadd.f32 0.0, %v4123
        %v4125 = vpop.f32.mrb[0].mxu0
        %4126 = vmatprep.mubr.bf16.mxu0 0
        %4127 = vmatmul.mubr.bf16.gmra.mrb[0].mxu0 %v3993
        %v4128 = vpop.f32.mrb[0].mxu0
        %v4129 = vadd.f32 0.0, %v4128
        %v4130 = vpop.f32.mrb[0].mxu0
        %v4131 = vpop.f32.mrb[0].mxu0
        %v4132 = vadd.f32 0.0, %v4131
        %v4133 = vpop.f32.mrb[0].mxu0
        %4134 = vmatprep.mubr.bf16.mxu0 0
        %4135 = vmatmul.mubr.bf16.gmra.mrb[0].mxu0 %v3994
        %v4136 = vpop.f32.mrb[0].mxu0
        %v4137 = vadd.f32 0.0, %v4136
        %v4138 = vpop.f32.mrb[0].mxu0
        %v4139 = vpop.f32.mrb[0].mxu0
        %v4140 = vadd.f32 0.0, %v4139
        %v4141 = vpop.f32.mrb[0].mxu0
        %4142 = vmatprep.mubr.bf16.mxu0 0
        %4143 = vmatmul.mubr.bf16.gmra.mrb[0].mxu0 %v3995
        %v4144 = vpop.f32.mrb[0].mxu0
        %v4145 = vadd.f32 0.0, %v4144
        %v4146 = vpop.f32.mrb[0].mxu0
        %v4147 = vpop.f32.mrb[0].mxu0
        %v4148 = vadd.f32 0.0, %v4147
        %v4149 = vpop.f32.mrb[0].mxu0
        %4150 = vmatprep.mubr.bf16.mxu0 0
        %4151 = vmatmul.mubr.bf16.gmra.mrb[0].mxu0 %v3996
        %v4152 = vpop.f32.mrb[0].mxu0
        %v4153 = vadd.f32 0.0, %v4152
        %v4154 = vpop.f32.mrb[0].mxu0
        %v4155 = vpop.f32.mrb[0].mxu0
        %v4156 = vadd.f32 0.0, %v4155
        %v4157 = vpop.f32.mrb[0].mxu0
        %4158 = vmatprep.mubr.bf16.mxu0 0
        %4159 = vmatmul.mubr.bf16.gmra.mrb[0].mxu0 %v3997
        %v4160 = vpop.f32.mrb[0].mxu0
        %v4161 = vadd.f32 0.0, %v4160
        %v4162 = vpop.f32.mrb[0].mxu0
        %v4163 = vpop.f32.mrb[0].mxu0
        %v4164 = vadd.f32 0.0, %v4163
        %v4165 = vpop.f32.mrb[0].mxu0
        %4166 = vmatprep.mubr.bf16.mxu0 0
        %4167 = vmatmul.mubr.bf16.gmra.mrb[0].mxu0 %v3998
        %v4168 = vpop.f32.mrb[0].mxu0
        %v4169 = vadd.f32 0.0, %v4168
        %v4170 = vpop.f32.mrb[0].mxu0
        %v4171 = vpop.f32.mrb[0].mxu0
        %v4172 = vadd.f32 0.0, %v4171
        %v4173 = vpop.f32.mrb[0].mxu0
        %4174 = vmatprep.mubr.bf16.mxu0 0
        %4175 = vmatmul.mubr.bf16.gmra.mrb[0].mxu0 %v3999
        %v4176 = vpop.f32.mrb[0].mxu0
        %v4177 = vadd.f32 0.0, %v4176
        %v4178 = vpop.f32.mrb[0].mxu0
        %v4179 = vpop.f32.mrb[0].mxu0
        %v4180 = vadd.f32 0.0, %v4179
        %v4181 = vpop.f32.mrb[0].mxu0
        %4182 = vmatprep.mubr.bf16.mxu0 0
        %4183 = vmatmul.mubr.bf16.gmra.mrb[0].mxu0 %v4000
        %v4184 = vpop.f32.mrb[0].mxu0
        %v4185 = vadd.f32 0.0, %v4184
        %v4186 = vpop.f32.mrb[0].mxu0
        %v4187 = vpop.f32.mrb[0].mxu0
        %v4188 = vadd.f32 0.0, %v4187
        %v4189 = vpop.f32.mrb[0].mxu0
        %4190 = vmatprep.mubr.bf16.mxu0 0
        %4191 = vmatmul.mubr.bf16.gmra.mrb[0].mxu0 %v4001
        %v4192 = vpop.f32.mrb[0].mxu0
        %v4193 = vadd.f32 0.0, %v4192
        %v4194 = vpop.f32.mrb[0].mxu0
        %v4195 = vpop.f32.mrb[0].mxu0
        %v4196 = vadd.f32 0.0, %v4195
        %v4197 = vpop.f32.mrb[0].mxu0
        %4198 = vmatprep.mubr.bf16.mxu0 0
        %4199 = vmatmul.mubr.bf16.gmra.mrb[0].mxu0 %v4002
        %v4200 = vpop.f32.mrb[0].mxu0
        %v4201 = vadd.f32 0.0, %v4200
        %v4202 = vpop.f32.mrb[0].mxu0
        %v4203 = vpop.f32.mrb[0].mxu0
        %v4204 = vadd.f32 0.0, %v4203
        %v4205 = vpop.f32.mrb[0].mxu0
        %4206 = vmatprep.mubr.bf16.mxu0 0
        %4207 = vmatmul.mubr.bf16.gmra.mrb[0].mxu0 %v4003
        %v4208 = vpop.f32.mrb[0].mxu0
        %v4209 = vadd.f32 0.0, %v4208
        %v4210 = vpop.f32.mrb[0].mxu0
        %v4211 = vpop.f32.mrb[0].mxu0
        %v4212 = vadd.f32 0.0, %v4211
        %v4213 = vpop.f32.mrb[0].mxu0
        %4214 = vmatprep.mubr.bf16.mxu0 0
        %4215 = vmatmul.mubr.bf16.gmra.mrb[0].mxu0 %v4004
        %v4216 = vpop.f32.mrb[0].mxu0
        %v4217 = vadd.f32 0.0, %v4216
        %v4218 = vpop.f32.mrb[0].mxu0
        %v4219 = vpop.f32.mrb[0].mxu0
        %v4220 = vadd.f32 0.0, %v4219
        %v4221 = vpop.f32.mrb[0].mxu0
        %4222 = vmatprep.mubr.bf16.mxu0 0
        %4223 = vmatmul.mubr.bf16.gmra.mrb[0].mxu0 %v4005
        %v4224 = vpop.f32.mrb[0].mxu0
        %v4225 = vadd.f32 0.0, %v4224
        %v4226 = vpop.f32.mrb[0].mxu0
        %v4227 = vpop.f32.mrb[0].mxu0
        %v4228 = vadd.f32 0.0, %v4227
        %v4229 = vpop.f32.mrb[0].mxu0
        %4230 = vdwg.mxu0
        %v4231 = vadd.f32 %v3477, %v4105
        %v4232 = vadd.f32 %v3478, %v4108
        %v4233 = vadd.f32 %v3479, %v4113
        %v4234 = vadd.f32 %v3480, %v4116
        %v4235 = vadd.f32 %v3481, %v4121
        %v4236 = vadd.f32 %v3482, %v4124
        %v4237 = vadd.f32 %v3483, %v4129
        %v4238 = vadd.f32 %v3484, %v4132
        %v4239 = vadd.f32 %v3485, %v4137
        %v4240 = vadd.f32 %v3486, %v4140
        %v4241 = vadd.f32 %v3487, %v4145
        %v4242 = vadd.f32 %v3488, %v4148
        %v4243 = vadd.f32 %v3489, %v4153
        %v4244 = vadd.f32 %v3490, %v4156
        %v4245 = vadd.f32 %v3491, %v4161
        %v4246 = vadd.f32 %v3492, %v4164
        %v4247 = vadd.f32 %v3493, %v4169
        %v4248 = vadd.f32 %v3494, %v4172
        %v4249 = vadd.f32 %v3495, %v4177
        %v4250 = vadd.f32 %v3496, %v4180
        %v4251 = vadd.f32 %v3497, %v4185
        %v4252 = vadd.f32 %v3498, %v4188
        %v4253 = vadd.f32 %v3499, %v4193
        %v4254 = vadd.f32 %v3500, %v4196
        %v4255 = vadd.f32 %v3501, %v4201
        %v4256 = vadd.f32 %v3502, %v4204
        %v4257 = vadd.f32 %v3503, %v4209
        %v4258 = vadd.f32 %v3504, %v4212
        %v4259 = vadd.f32 %v3505, %v4217
        %v4260 = vadd.f32 %v3506, %v4220
        %v4261 = vadd.f32 %v3507, %v4225
        %v4262 = vadd.f32 %v3508, %v4228
        %v4263 = vld [vmem:[%s1092] sm:$0xe]
        %v4264 = vld [vmem:[%s1092 + $0xc] sm:$0xe]
        %v4265 = vld [vmem:[%s1092 + $0x18] sm:$0xe]
        %v4266 = vld [vmem:[%s1092 + $0x24] sm:$0xe]
        %v4267 = vld [vmem:[%s1092 + $0x30] sm:$0xe]
        %v4268 = vld [vmem:[%s1092 + $0x3c] sm:$0xe]
        %v4269 = vld [vmem:[%s1092 + $0x48] sm:$0xe]
        %v4270 = vld [vmem:[%s1092 + $0x54] sm:$0xe]
        %v4271 = vld [vmem:[%s1092 + $0x60] sm:$0xe]
        %v4272 = vld [vmem:[%s1092 + $0x6c] sm:$0xe]
        %v4273 = vld [vmem:[%s1092 + $0x78] sm:$0xe]
        %v4274 = vld [vmem:[%s1092 + $0x84] sm:$0xe]
        %v4275 = vld [vmem:[%s1092 + $0x90] sm:$0xe]
        %v4276 = vld [vmem:[%s1092 + $0x9c] sm:$0xe]
        %v4277 = vld [vmem:[%s1092 + $0xa8] sm:$0xe]
        %v4278 = vld [vmem:[%s1092 + $0xb4] sm:$0xe]
        %v4327 = vrot.slane %v4263, 5
        %v4328 = vrot.slane %v4327, 4
        %v4329 = vrot.slane %v3510, 5
        %v4330 = vsel %vm2688, %v4328, %v4329
        %v4331 = vrot.slane %v4329, 4
        %v4332 = vrot.slane %v3511, 5
        %v4333 = vsel %vm2688, %v4331, %v4332
        %v4334 = vrot.slane %v4264, 5
        %v4335 = vrot.slane %v4334, 4
        %v4336 = vrot.slane %v3513, 5
        %v4337 = vsel %vm2688, %v4335, %v4336
        %v4338 = vrot.slane %v4336, 4
        %v4339 = vrot.slane %v3514, 5
        %v4340 = vsel %vm2688, %v4338, %v4339
        %v4341 = vrot.slane %v4265, 5
        %v4342 = vrot.slane %v4341, 4
        %v4343 = vrot.slane %v3516, 5
        %v4344 = vsel %vm2688, %v4342, %v4343
        %v4345 = vrot.slane %v4343, 4
        %v4346 = vrot.slane %v3517, 5
        %v4347 = vsel %vm2688, %v4345, %v4346
        %v4348 = vrot.slane %v4266, 5
        %v4349 = vrot.slane %v4348, 4
        %v4350 = vrot.slane %v3519, 5
        %v4351 = vsel %vm2688, %v4349, %v4350
        %v4352 = vrot.slane %v4350, 4
        %v4353 = vrot.slane %v3520, 5
        %v4354 = vsel %vm2688, %v4352, %v4353
        %v4355 = vrot.slane %v4267, 5
        %v4356 = vrot.slane %v4355, 4
        %v4357 = vrot.slane %v3522, 5
        %v4358 = vsel %vm2688, %v4356, %v4357
        %v4359 = vrot.slane %v4357, 4
        %v4360 = vrot.slane %v3523, 5
        %v4361 = vsel %vm2688, %v4359, %v4360
        %v4362 = vrot.slane %v4268, 5
        %v4363 = vrot.slane %v4362, 4
        %v4364 = vrot.slane %v3525, 5
        %v4365 = vsel %vm2688, %v4363, %v4364
        %v4366 = vrot.slane %v4364, 4
        %v4367 = vrot.slane %v3526, 5
        %v4368 = vsel %vm2688, %v4366, %v4367
        %v4369 = vrot.slane %v4269, 5
        %v4370 = vrot.slane %v4369, 4
        %v4371 = vrot.slane %v3528, 5
        %v4372 = vsel %vm2688, %v4370, %v4371
        %v4373 = vrot.slane %v4371, 4
        %v4374 = vrot.slane %v3529, 5
        %v4375 = vsel %vm2688, %v4373, %v4374
        %v4376 = vrot.slane %v4270, 5
        %v4377 = vrot.slane %v4376, 4
        %v4378 = vrot.slane %v3531, 5
        %v4379 = vsel %vm2688, %v4377, %v4378
        %v4380 = vrot.slane %v4378, 4
        %v4381 = vrot.slane %v3532, 5
        %v4382 = vsel %vm2688, %v4380, %v4381
        %v4383 = vrot.slane %v4271, 5
        %v4384 = vrot.slane %v4383, 4
        %v4385 = vrot.slane %v3534, 5
        %v4386 = vsel %vm2688, %v4384, %v4385
        %v4387 = vrot.slane %v4385, 4
        %v4388 = vrot.slane %v3535, 5
        %v4389 = vsel %vm2688, %v4387, %v4388
        %v4390 = vrot.slane %v4272, 5
        %v4391 = vrot.slane %v4390, 4
        %v4392 = vrot.slane %v3537, 5
        %v4393 = vsel %vm2688, %v4391, %v4392
        %v4394 = vrot.slane %v4392, 4
        %v4395 = vrot.slane %v3538, 5
        %v4396 = vsel %vm2688, %v4394, %v4395
        %v4397 = vrot.slane %v4273, 5
        %v4398 = vrot.slane %v4397, 4
        %v4399 = vrot.slane %v3540, 5
        %v4400 = vsel %vm2688, %v4398, %v4399
        %v4401 = vrot.slane %v4399, 4
        %v4402 = vrot.slane %v3541, 5
        %v4403 = vsel %vm2688, %v4401, %v4402
        %v4404 = vrot.slane %v4274, 5
        %v4405 = vrot.slane %v4404, 4
        %v4406 = vrot.slane %v3543, 5
        %v4407 = vsel %vm2688, %v4405, %v4406
        %v4408 = vrot.slane %v4406, 4
        %v4409 = vrot.slane %v3544, 5
        %v4410 = vsel %vm2688, %v4408, %v4409
        %v4411 = vrot.slane %v4275, 5
        %v4412 = vrot.slane %v4411, 4
        %v4413 = vrot.slane %v3546, 5
        %v4414 = vsel %vm2688, %v4412, %v4413
        %v4415 = vrot.slane %v4413, 4
        %v4416 = vrot.slane %v3547, 5
        %v4417 = vsel %vm2688, %v4415, %v4416
        %v4418 = vrot.slane %v4276, 5
        %v4419 = vrot.slane %v4418, 4
        %v4420 = vrot.slane %v3549, 5
        %v4421 = vsel %vm2688, %v4419, %v4420
        %v4422 = vrot.slane %v4420, 4
        %v4423 = vrot.slane %v3550, 5
        %v4424 = vsel %vm2688, %v4422, %v4423
        %v4425 = vrot.slane %v4277, 5
        %v4426 = vrot.slane %v4425, 4
        %v4427 = vrot.slane %v3552, 5
        %v4428 = vsel %vm2688, %v4426, %v4427
        %v4429 = vrot.slane %v4427, 4
        %v4430 = vrot.slane %v3553, 5
        %v4431 = vsel %vm2688, %v4429, %v4430
        %v4432 = vrot.slane %v4278, 5
        %v4433 = vrot.slane %v4432, 4
        %v4434 = vrot.slane %v3555, 5
        %v4435 = vsel %vm2688, %v4433, %v4434
        %v4436 = vrot.slane %v4434, 4
        %v4437 = vrot.slane %v3556, 5
        %v4438 = vsel %vm2688, %v4436, %v4437
        %s4439 = scalar_lea.vmem [#allocation6], 320
        %v4440 = vld [vmem:[%s4439] sm:$0xf]
        %v4441 = vld [vmem:[%s4439 + $0x4] sm:$0xf]
        %v4442 = vld [vmem:[%s4439 + $0x8] sm:$0xf]
        %v4443 = vld [vmem:[%s4439 + $0xc] sm:$0xf]
        %v4444 = vld [vmem:[%s4439 + $0x10] sm:$0xf]
        %v4445 = vld [vmem:[%s4439 + $0x14] sm:$0xf]
        %v4446 = vld [vmem:[%s4439 + $0x18] sm:$0xf]
        %v4447 = vld [vmem:[%s4439 + $0x1c] sm:$0xf]
        %v4448 = vld [vmem:[%s4439 + $0x20] sm:$0xf]
        %v4449 = vld [vmem:[%s4439 + $0x24] sm:$0xf]
        %v4450 = vld [vmem:[%s4439 + $0x28] sm:$0xf]
        %v4451 = vld [vmem:[%s4439 + $0x2c] sm:$0xf]
        %v4452 = vld [vmem:[%s4439 + $0x30] sm:$0xf]
        %v4453 = vld [vmem:[%s4439 + $0x34] sm:$0xf]
        %v4454 = vld [vmem:[%s4439 + $0x38] sm:$0xf]
        %v4455 = vld [vmem:[%s4439 + $0x3c] sm:$0xf]
        %v4456 = vunpack.c.l.b16 %v4330
        %v4457 = vunpack.c.l.b16 %v4333
        %v4458 = vunpack.c.l.b16 %v4337
        %v4459 = vunpack.c.l.b16 %v4340
        %v4460 = vunpack.c.l.b16 %v4344
        %v4461 = vunpack.c.l.b16 %v4347
        %v4462 = vunpack.c.l.b16 %v4351
        %v4463 = vunpack.c.l.b16 %v4354
        %v4464 = vunpack.c.l.b16 %v4358
        %v4465 = vunpack.c.l.b16 %v4361
        %v4466 = vunpack.c.l.b16 %v4365
        %v4467 = vunpack.c.l.b16 %v4368
        %v4468 = vunpack.c.l.b16 %v4372
        %v4469 = vunpack.c.l.b16 %v4375
        %v4470 = vunpack.c.l.b16 %v4379
        %v4471 = vunpack.c.l.b16 %v4382
        %v4472 = vunpack.c.l.b16 %v4386
        %v4473 = vunpack.c.l.b16 %v4389
        %v4474 = vunpack.c.l.b16 %v4393
        %v4475 = vunpack.c.l.b16 %v4396
        %v4476 = vunpack.c.l.b16 %v4400
        %v4477 = vunpack.c.l.b16 %v4403
        %v4478 = vunpack.c.l.b16 %v4407
        %v4479 = vunpack.c.l.b16 %v4410
        %v4480 = vunpack.c.l.b16 %v4414
        %v4481 = vunpack.c.l.b16 %v4417
        %v4482 = vunpack.c.l.b16 %v4421
        %v4483 = vunpack.c.l.b16 %v4424
        %v4484 = vunpack.c.l.b16 %v4428
        %v4485 = vunpack.c.l.b16 %v4431
        %v4486 = vunpack.c.l.b16 %v4435
        %v4487 = vunpack.c.l.b16 %v4438
        %v4488 = vpack.c.b16 %v4457, %v4456
        %v4489 = vpack.c.b16 %v4459, %v4458
        %v4490 = vpack.c.b16 %v4461, %v4460
        %v4491 = vpack.c.b16 %v4463, %v4462
        %v4492 = vpack.c.b16 %v4465, %v4464
        %v4493 = vpack.c.b16 %v4467, %v4466
        %v4494 = vpack.c.b16 %v4469, %v4468
        %v4495 = vpack.c.b16 %v4471, %v4470
        %v4496 = vpack.c.b16 %v4473, %v4472
        %v4497 = vpack.c.b16 %v4475, %v4474
        %v4498 = vpack.c.b16 %v4477, %v4476
        %v4499 = vpack.c.b16 %v4479, %v4478
        %v4500 = vpack.c.b16 %v4481, %v4480
        %v4501 = vpack.c.b16 %v4483, %v4482
        %v4502 = vpack.c.b16 %v4485, %v4484
        %v4503 = vpack.c.b16 %v4487, %v4486
        %v4536 = vunpack.c.l.b16 %v4440
        %v4537 = vunpack.c.l.b16 %v4441
        %v4538 = vunpack.c.l.b16 %v4442
        %v4539 = vunpack.c.l.b16 %v4443
        %v4540 = vunpack.c.l.b16 %v4444
        %v4541 = vunpack.c.l.b16 %v4445
        %v4542 = vunpack.c.l.b16 %v4446
        %v4543 = vunpack.c.l.b16 %v4447
        %v4544 = vunpack.c.l.b16 %v4448
        %v4545 = vunpack.c.l.b16 %v4449
        %v4546 = vunpack.c.l.b16 %v4450
        %v4547 = vunpack.c.l.b16 %v4451
        %v4548 = vunpack.c.l.b16 %v4452
        %v4549 = vunpack.c.l.b16 %v4453
        %v4550 = vunpack.c.l.b16 %v4454
        %v4551 = vunpack.c.l.b16 %v4455
        %v4552 = vpack.c.b16 %v4537, %v4536
        %v4553 = vpack.c.b16 %v4539, %v4538
        %v4554 = vpack.c.b16 %v4541, %v4540
        %v4555 = vpack.c.b16 %v4543, %v4542
        %v4556 = vpack.c.b16 %v4545, %v4544
        %v4557 = vpack.c.b16 %v4547, %v4546
        %v4558 = vpack.c.b16 %v4549, %v4548
        %v4559 = vpack.c.b16 %v4551, %v4550
        %4568 = vmatprep.subr.bf16.mxu0 0
        %4569 = vmatpush1.bf16.msra.mxu0 %v4552
        %4570 = vmatprep.subr.bf16.mxu0 0
        %4571 = vmatpush1.bf16.msra.mxu0 %v4553
        %4572 = vmatprep.subr.bf16.mxu0 0
        %4573 = vmatpush1.bf16.msra.mxu0 %v4554
        %4574 = vmatprep.subr.bf16.mxu0 0
        %4575 = vmatpush1.bf16.msra.mxu0 %v4555
        %4576 = vmatprep.subr.bf16.mxu0 0
        %4577 = vmatpush1.bf16.msra.mxu0 %v4556
        %4578 = vmatprep.subr.bf16.mxu0 0
        %4579 = vmatpush1.bf16.msra.mxu0 %v4557
        %4580 = vmatprep.subr.bf16.mxu0 0
        %4581 = vmatpush1.bf16.msra.mxu0 %v4558
        %4582 = vmatprep.subr.bf16.mxu0 0
        %4583 = vmatpush1.bf16.msra.mxu0 %v4559
        %4584 = vmatprep.subr.bf16.mxu0 0
        %4585 = vmatpush1.bf16.msra.mxu0 0
        %4586 = vmatprep.subr.bf16.mxu0 0
        %4587 = vmatpush1.bf16.msra.mxu0 0
        %4588 = vmatprep.subr.bf16.mxu0 0
        %4589 = vmatpush1.bf16.msra.mxu0 0
        %4590 = vmatprep.subr.bf16.mxu0 0
        %4591 = vmatpush1.bf16.msra.mxu0 0
        %4592 = vmatprep.subr.bf16.mxu0 0
        %4593 = vmatpush1.bf16.msra.mxu0 0
        %4594 = vmatprep.subr.bf16.mxu0 0
        %4595 = vmatpush1.bf16.msra.mxu0 0
        %4596 = vmatprep.subr.bf16.mxu0 0
        %4597 = vmatpush1.bf16.msra.mxu0 0
        %4598 = vmatprep.subr.bf16.mxu0 0
        %4599 = vmatpush1.bf16.msra.mxu0 0
        %4600 = vmatprep.mubr.bf16.mxu0 0
        %4601 = vmatmul.mubr.bf16.gmra.mrb[0].mxu0 %v4488
        %v4602 = vpop.f32.mrb[0].mxu0
        %v4603 = vadd.f32 0.0, %v4602
        %v4604 = vpop.f32.mrb[0].mxu0
        %v4605 = vpop.f32.mrb[0].mxu0
        %v4606 = vadd.f32 0.0, %v4605
        %v4607 = vpop.f32.mrb[0].mxu0
        %4608 = vmatprep.mubr.bf16.mxu0 0
        %4609 = vmatmul.mubr.bf16.gmra.mrb[0].mxu0 %v4489
        %v4610 = vpop.f32.mrb[0].mxu0
        %v4611 = vadd.f32 0.0, %v4610
        %v4612 = vpop.f32.mrb[0].mxu0
        %v4613 = vpop.f32.mrb[0].mxu0
        %v4614 = vadd.f32 0.0, %v4613
        %v4615 = vpop.f32.mrb[0].mxu0
        %4616 = vmatprep.mubr.bf16.mxu0 0
        %4617 = vmatmul.mubr.bf16.gmra.mrb[0].mxu0 %v4490
        %v4618 = vpop.f32.mrb[0].mxu0
        %v4619 = vadd.f32 0.0, %v4618
        %v4620 = vpop.f32.mrb[0].mxu0
        %v4621 = vpop.f32.mrb[0].mxu0
        %v4622 = vadd.f32 0.0, %v4621
        %v4623 = vpop.f32.mrb[0].mxu0
        %4624 = vmatprep.mubr.bf16.mxu0 0
        %4625 = vmatmul.mubr.bf16.gmra.mrb[0].mxu0 %v4491
        %v4626 = vpop.f32.mrb[0].mxu0
        %v4627 = vadd.f32 0.0, %v4626
        %v4628 = vpop.f32.mrb[0].mxu0
        %v4629 = vpop.f32.mrb[0].mxu0
        %v4630 = vadd.f32 0.0, %v4629
        %v4631 = vpop.f32.mrb[0].mxu0
        %4632 = vmatprep.mubr.bf16.mxu0 0
        %4633 = vmatmul.mubr.bf16.gmra.mrb[0].mxu0 %v4492
        %v4634 = vpop.f32.mrb[0].mxu0
        %v4635 = vadd.f32 0.0, %v4634
        %v4636 = vpop.f32.mrb[0].mxu0
        %v4637 = vpop.f32.mrb[0].mxu0
        %v4638 = vadd.f32 0.0, %v4637
        %v4639 = vpop.f32.mrb[0].mxu0
        %4640 = vmatprep.mubr.bf16.mxu0 0
        %4641 = vmatmul.mubr.bf16.gmra.mrb[0].mxu0 %v4493
        %v4642 = vpop.f32.mrb[0].mxu0
        %v4643 = vadd.f32 0.0, %v4642
        %v4644 = vpop.f32.mrb[0].mxu0
        %v4645 = vpop.f32.mrb[0].mxu0
        %v4646 = vadd.f32 0.0, %v4645
        %v4647 = vpop.f32.mrb[0].mxu0
        %4648 = vmatprep.mubr.bf16.mxu0 0
        %4649 = vmatmul.mubr.bf16.gmra.mrb[0].mxu0 %v4494
        %v4650 = vpop.f32.mrb[0].mxu0
        %v4651 = vadd.f32 0.0, %v4650
        %v4652 = vpop.f32.mrb[0].mxu0
        %v4653 = vpop.f32.mrb[0].mxu0
        %v4654 = vadd.f32 0.0, %v4653
        %v4655 = vpop.f32.mrb[0].mxu0
        %4656 = vmatprep.mubr.bf16.mxu0 0
        %4657 = vmatmul.mubr.bf16.gmra.mrb[0].mxu0 %v4495
        %v4658 = vpop.f32.mrb[0].mxu0
        %v4659 = vadd.f32 0.0, %v4658
        %v4660 = vpop.f32.mrb[0].mxu0
        %v4661 = vpop.f32.mrb[0].mxu0
        %v4662 = vadd.f32 0.0, %v4661
        %v4663 = vpop.f32.mrb[0].mxu0
        %4664 = vmatprep.mubr.bf16.mxu0 0
        %4665 = vmatmul.mubr.bf16.gmra.mrb[0].mxu0 %v4496
        %v4666 = vpop.f32.mrb[0].mxu0
        %v4667 = vadd.f32 0.0, %v4666
        %v4668 = vpop.f32.mrb[0].mxu0
        %v4669 = vpop.f32.mrb[0].mxu0
        %v4670 = vadd.f32 0.0, %v4669
        %v4671 = vpop.f32.mrb[0].mxu0
        %4672 = vmatprep.mubr.bf16.mxu0 0
        %4673 = vmatmul.mubr.bf16.gmra.mrb[0].mxu0 %v4497
        %v4674 = vpop.f32.mrb[0].mxu0
        %v4675 = vadd.f32 0.0, %v4674
        %v4676 = vpop.f32.mrb[0].mxu0
        %v4677 = vpop.f32.mrb[0].mxu0
        %v4678 = vadd.f32 0.0, %v4677
        %v4679 = vpop.f32.mrb[0].mxu0
        %4680 = vmatprep.mubr.bf16.mxu0 0
        %4681 = vmatmul.mubr.bf16.gmra.mrb[0].mxu0 %v4498
        %v4682 = vpop.f32.mrb[0].mxu0
        %v4683 = vadd.f32 0.0, %v4682
        %v4684 = vpop.f32.mrb[0].mxu0
        %v4685 = vpop.f32.mrb[0].mxu0
        %v4686 = vadd.f32 0.0, %v4685
        %v4687 = vpop.f32.mrb[0].mxu0
        %4688 = vmatprep.mubr.bf16.mxu0 0
        %4689 = vmatmul.mubr.bf16.gmra.mrb[0].mxu0 %v4499
        %v4690 = vpop.f32.mrb[0].mxu0
        %v4691 = vadd.f32 0.0, %v4690
        %v4692 = vpop.f32.mrb[0].mxu0
        %v4693 = vpop.f32.mrb[0].mxu0
        %v4694 = vadd.f32 0.0, %v4693
        %v4695 = vpop.f32.mrb[0].mxu0
        %4696 = vmatprep.mubr.bf16.mxu0 0
        %4697 = vmatmul.mubr.bf16.gmra.mrb[0].mxu0 %v4500
        %v4698 = vpop.f32.mrb[0].mxu0
        %v4699 = vadd.f32 0.0, %v4698
        %v4700 = vpop.f32.mrb[0].mxu0
        %v4701 = vpop.f32.mrb[0].mxu0
        %v4702 = vadd.f32 0.0, %v4701
        %v4703 = vpop.f32.mrb[0].mxu0
        %4704 = vmatprep.mubr.bf16.mxu0 0
        %4705 = vmatmul.mubr.bf16.gmra.mrb[0].mxu0 %v4501
        %v4706 = vpop.f32.mrb[0].mxu0
        %v4707 = vadd.f32 0.0, %v4706
        %v4708 = vpop.f32.mrb[0].mxu0
        %v4709 = vpop.f32.mrb[0].mxu0
        %v4710 = vadd.f32 0.0, %v4709
        %v4711 = vpop.f32.mrb[0].mxu0
        %4712 = vmatprep.mubr.bf16.mxu0 0
        %4713 = vmatmul.mubr.bf16.gmra.mrb[0].mxu0 %v4502
        %v4714 = vpop.f32.mrb[0].mxu0
        %v4715 = vadd.f32 0.0, %v4714
        %v4716 = vpop.f32.mrb[0].mxu0
        %v4717 = vpop.f32.mrb[0].mxu0
        %v4718 = vadd.f32 0.0, %v4717
        %v4719 = vpop.f32.mrb[0].mxu0
        %4720 = vmatprep.mubr.bf16.mxu0 0
        %4721 = vmatmul.mubr.bf16.gmra.mrb[0].mxu0 %v4503
        %v4722 = vpop.f32.mrb[0].mxu0
        %v4723 = vadd.f32 0.0, %v4722
        %v4724 = vpop.f32.mrb[0].mxu0
        %v4725 = vpop.f32.mrb[0].mxu0
        %v4726 = vadd.f32 0.0, %v4725
        %v4727 = vpop.f32.mrb[0].mxu0
        %4728 = vdwg.mxu0
        %v4729 = vadd.f32 %v4231, %v4603
        %v4730 = vadd.f32 %v4232, %v4606
        %v4731 = vadd.f32 %v4233, %v4611
        %v4732 = vadd.f32 %v4234, %v4614
        %v4733 = vadd.f32 %v4235, %v4619
        %v4734 = vadd.f32 %v4236, %v4622
        %v4735 = vadd.f32 %v4237, %v4627
        %v4736 = vadd.f32 %v4238, %v4630
        %v4737 = vadd.f32 %v4239, %v4635
        %v4738 = vadd.f32 %v4240, %v4638
        %v4739 = vadd.f32 %v4241, %v4643
        %v4740 = vadd.f32 %v4242, %v4646
        %v4741 = vadd.f32 %v4243, %v4651
        %v4742 = vadd.f32 %v4244, %v4654
        %v4743 = vadd.f32 %v4245, %v4659
        %v4744 = vadd.f32 %v4246, %v4662
        %v4745 = vadd.f32 %v4247, %v4667
        %v4746 = vadd.f32 %v4248, %v4670
        %v4747 = vadd.f32 %v4249, %v4675
        %v4748 = vadd.f32 %v4250, %v4678
        %v4749 = vadd.f32 %v4251, %v4683
        %v4750 = vadd.f32 %v4252, %v4686
        %v4751 = vadd.f32 %v4253, %v4691
        %v4752 = vadd.f32 %v4254, %v4694
        %v4753 = vadd.f32 %v4255, %v4699
        %v4754 = vadd.f32 %v4256, %v4702
        %v4755 = vadd.f32 %v4257, %v4707
        %v4756 = vadd.f32 %v4258, %v4710
        %v4757 = vadd.f32 %v4259, %v4715
        %v4758 = vadd.f32 %v4260, %v4718
        %v4759 = vadd.f32 %v4261, %v4723
        %v4760 = vadd.f32 %v4262, %v4726
        %s4761 = scalar_lea.vmem [#allocation2], 24
        %v4762 = vld [vmem:[%s4761] sm:$0xf]
        %v4763 = vld [vmem:[%s4761 + $0x4] sm:$0xf]
        %v4764 = vld [vmem:[%s4761 + $0xc] sm:$0xf]
        %v4765 = vld [vmem:[%s4761 + $0x10] sm:$0xf]
        %v4766 = vld [vmem:[%s4761 + $0x18] sm:$0xf]
        %v4767 = vld [vmem:[%s4761 + $0x1c] sm:$0xf]
        %v4768 = vld [vmem:[%s4761 + $0x24] sm:$0xf]
        %v4769 = vld [vmem:[%s4761 + $0x28] sm:$0xf]
        %v4770 = vld [vmem:[%s4761 + $0x30] sm:$0xf]
        %v4771 = vld [vmem:[%s4761 + $0x34] sm:$0xf]
        %v4772 = vld [vmem:[%s4761 + $0x3c] sm:$0xf]
        %v4773 = vld [vmem:[%s4761 + $0x40] sm:$0xf]
        %v4774 = vld [vmem:[%s4761 + $0x48] sm:$0xf]
        %v4775 = vld [vmem:[%s4761 + $0x4c] sm:$0xf]
        %v4776 = vld [vmem:[%s4761 + $0x54] sm:$0xf]
        %v4777 = vld [vmem:[%s4761 + $0x58] sm:$0xf]
        %v4778 = vld [vmem:[%s4761 + $0x60] sm:$0xf]
        %v4779 = vld [vmem:[%s4761 + $0x64] sm:$0xf]
        %v4780 = vld [vmem:[%s4761 + $0x6c] sm:$0xf]
        %v4781 = vld [vmem:[%s4761 + $0x70] sm:$0xf]
        %v4782 = vld [vmem:[%s4761 + $0x78] sm:$0xf]
        %v4783 = vld [vmem:[%s4761 + $0x7c] sm:$0xf]
        %v4784 = vld [vmem:[%s4761 + $0x84] sm:$0xf]
        %v4785 = vld [vmem:[%s4761 + $0x88] sm:$0xf]
        %v4786 = vld [vmem:[%s4761 + $0x90] sm:$0xf]
        %v4787 = vld [vmem:[%s4761 + $0x94] sm:$0xf]
        %v4788 = vld [vmem:[%s4761 + $0x9c] sm:$0xf]
        %v4789 = vld [vmem:[%s4761 + $0xa0] sm:$0xf]
        %v4790 = vld [vmem:[%s4761 + $0xa8] sm:$0xf]
        %v4791 = vld [vmem:[%s4761 + $0xac] sm:$0xf]
        %v4792 = vld [vmem:[%s4761 + $0xb4] sm:$0xf]
        %v4793 = vld [vmem:[%s4761 + $0xb8] sm:$0xf]
        %s4794 = scalar_lea.vmem [#allocation6], 384
        %v4795 = vld [vmem:[%s4794] sm:$0xf]
        %v4796 = vld [vmem:[%s4794 + $0x4] sm:$0xf]
        %v4797 = vld [vmem:[%s4794 + $0x8] sm:$0xf]
        %v4798 = vld [vmem:[%s4794 + $0xc] sm:$0xf]
        %v4799 = vld [vmem:[%s4794 + $0x10] sm:$0xf]
        %v4800 = vld [vmem:[%s4794 + $0x14] sm:$0xf]
        %v4801 = vld [vmem:[%s4794 + $0x18] sm:$0xf]
        %v4802 = vld [vmem:[%s4794 + $0x1c] sm:$0xf]
        %v4803 = vld [vmem:[%s4794 + $0x20] sm:$0xf]
        %v4804 = vld [vmem:[%s4794 + $0x24] sm:$0xf]
        %v4805 = vld [vmem:[%s4794 + $0x28] sm:$0xf]
        %v4806 = vld [vmem:[%s4794 + $0x2c] sm:$0xf]
        %v4807 = vld [vmem:[%s4794 + $0x30] sm:$0xf]
        %v4808 = vld [vmem:[%s4794 + $0x34] sm:$0xf]
        %v4809 = vld [vmem:[%s4794 + $0x38] sm:$0xf]
        %v4810 = vld [vmem:[%s4794 + $0x3c] sm:$0xf]
        %v4843 = vunpack.c.l.b16 %v4762
        %v4844 = vunpack.c.l.b16 %v4763
        %v4845 = vunpack.c.l.b16 %v4764
        %v4846 = vunpack.c.l.b16 %v4765
        %v4847 = vunpack.c.l.b16 %v4766
        %v4848 = vunpack.c.l.b16 %v4767
        %v4849 = vunpack.c.l.b16 %v4768
        %v4850 = vunpack.c.l.b16 %v4769
        %v4851 = vunpack.c.l.b16 %v4770
        %v4852 = vunpack.c.l.b16 %v4771
        %v4853 = vunpack.c.l.b16 %v4772
        %v4854 = vunpack.c.l.b16 %v4773
        %v4855 = vunpack.c.l.b16 %v4774
        %v4856 = vunpack.c.l.b16 %v4775
        %v4857 = vunpack.c.l.b16 %v4776
        %v4858 = vunpack.c.l.b16 %v4777
        %v4859 = vunpack.c.l.b16 %v4778
        %v4860 = vunpack.c.l.b16 %v4779
        %v4861 = vunpack.c.l.b16 %v4780
        %v4862 = vunpack.c.l.b16 %v4781
        %v4863 = vunpack.c.l.b16 %v4782
        %v4864 = vunpack.c.l.b16 %v4783
        %v4865 = vunpack.c.l.b16 %v4784
        %v4866 = vunpack.c.l.b16 %v4785
        %v4867 = vunpack.c.l.b16 %v4786
        %v4868 = vunpack.c.l.b16 %v4787
        %v4869 = vunpack.c.l.b16 %v4788
        %v4870 = vunpack.c.l.b16 %v4789
        %v4871 = vunpack.c.l.b16 %v4790
        %v4872 = vunpack.c.l.b16 %v4791
        %v4873 = vunpack.c.l.b16 %v4792
        %v4874 = vunpack.c.l.b16 %v4793
        %v4875 = vpack.c.b16 %v4844, %v4843
        %v4876 = vpack.c.b16 %v4846, %v4845
        %v4877 = vpack.c.b16 %v4848, %v4847
        %v4878 = vpack.c.b16 %v4850, %v4849
        %v4879 = vpack.c.b16 %v4852, %v4851
        %v4880 = vpack.c.b16 %v4854, %v4853
        %v4881 = vpack.c.b16 %v4856, %v4855
        %v4882 = vpack.c.b16 %v4858, %v4857
        %v4883 = vpack.c.b16 %v4860, %v4859
        %v4884 = vpack.c.b16 %v4862, %v4861
        %v4885 = vpack.c.b16 %v4864, %v4863
        %v4886 = vpack.c.b16 %v4866, %v4865
        %v4887 = vpack.c.b16 %v4868, %v4867
        %v4888 = vpack.c.b16 %v4870, %v4869
        %v4889 = vpack.c.b16 %v4872, %v4871
        %v4890 = vpack.c.b16 %v4874, %v4873
        %v4923 = vunpack.c.l.b16 %v4795
        %v4924 = vunpack.c.l.b16 %v4796
        %v4925 = vunpack.c.l.b16 %v4797
        %v4926 = vunpack.c.l.b16 %v4798
        %v4927 = vunpack.c.l.b16 %v4799
        %v4928 = vunpack.c.l.b16 %v4800
        %v4929 = vunpack.c.l.b16 %v4801
        %v4930 = vunpack.c.l.b16 %v4802
        %v4931 = vunpack.c.l.b16 %v4803
        %v4932 = vunpack.c.l.b16 %v4804
        %v4933 = vunpack.c.l.b16 %v4805
        %v4934 = vunpack.c.l.b16 %v4806
        %v4935 = vunpack.c.l.b16 %v4807
        %v4936 = vunpack.c.l.b16 %v4808
        %v4937 = vunpack.c.l.b16 %v4809
        %v4938 = vunpack.c.l.b16 %v4810
        %v4939 = vpack.c.b16 %v4924, %v4923
        %v4940 = vpack.c.b16 %v4926, %v4925
        %v4941 = vpack.c.b16 %v4928, %v4927
        %v4942 = vpack.c.b16 %v4930, %v4929
        %v4943 = vpack.c.b16 %v4932, %v4931
        %v4944 = vpack.c.b16 %v4934, %v4933
        %v4945 = vpack.c.b16 %v4936, %v4935
        %v4946 = vpack.c.b16 %v4938, %v4937
        %4955 = vmatprep.subr.bf16.mxu0 0
        %4956 = vmatpush1.bf16.msra.mxu0 %v4939
        %4957 = vmatprep.subr.bf16.mxu0 0
        %4958 = vmatpush1.bf16.msra.mxu0 %v4940
        %4959 = vmatprep.subr.bf16.mxu0 0
        %4960 = vmatpush1.bf16.msra.mxu0 %v4941
        %4961 = vmatprep.subr.bf16.mxu0 0
        %4962 = vmatpush1.bf16.msra.mxu0 %v4942
        %4963 = vmatprep.subr.bf16.mxu0 0
        %4964 = vmatpush1.bf16.msra.mxu0 %v4943
        %4965 = vmatprep.subr.bf16.mxu0 0
        %4966 = vmatpush1.bf16.msra.mxu0 %v4944
        %4967 = vmatprep.subr.bf16.mxu0 0
        %4968 = vmatpush1.bf16.msra.mxu0 %v4945
        %4969 = vmatprep.subr.bf16.mxu0 0
        %4970 = vmatpush1.bf16.msra.mxu0 %v4946
        %4971 = vmatprep.subr.bf16.mxu0 0
        %4972 = vmatpush1.bf16.msra.mxu0 0
        %4973 = vmatprep.subr.bf16.mxu0 0
        %4974 = vmatpush1.bf16.msra.mxu0 0
        %4975 = vmatprep.subr.bf16.mxu0 0
        %4976 = vmatpush1.bf16.msra.mxu0 0
        %4977 = vmatprep.subr.bf16.mxu0 0
        %4978 = vmatpush1.bf16.msra.mxu0 0
        %4979 = vmatprep.subr.bf16.mxu0 0
        %4980 = vmatpush1.bf16.msra.mxu0 0
        %4981 = vmatprep.subr.bf16.mxu0 0
        %4982 = vmatpush1.bf16.msra.mxu0 0
        %4983 = vmatprep.subr.bf16.mxu0 0
        %4984 = vmatpush1.bf16.msra.mxu0 0
        %4985 = vmatprep.subr.bf16.mxu0 0
        %4986 = vmatpush1.bf16.msra.mxu0 0
        %4987 = vmatprep.mubr.bf16.mxu0 0
        %4988 = vmatmul.mubr.bf16.gmra.mrb[0].mxu0 %v4875
        %v4989 = vpop.f32.mrb[0].mxu0
        %v4990 = vadd.f32 0.0, %v4989
        %v4991 = vpop.f32.mrb[0].mxu0
        %v4992 = vpop.f32.mrb[0].mxu0
        %v4993 = vadd.f32 0.0, %v4992
        %v4994 = vpop.f32.mrb[0].mxu0
        %4995 = vmatprep.mubr.bf16.mxu0 0
        %4996 = vmatmul.mubr.bf16.gmra.mrb[0].mxu0 %v4876
        %v4997 = vpop.f32.mrb[0].mxu0
        %v4998 = vadd.f32 0.0, %v4997
        %v4999 = vpop.f32.mrb[0].mxu0
        %v5000 = vpop.f32.mrb[0].mxu0
        %v5001 = vadd.f32 0.0, %v5000
        %v5002 = vpop.f32.mrb[0].mxu0
        %5003 = vmatprep.mubr.bf16.mxu0 0
        %5004 = vmatmul.mubr.bf16.gmra.mrb[0].mxu0 %v4877
        %v5005 = vpop.f32.mrb[0].mxu0
        %v5006 = vadd.f32 0.0, %v5005
        %v5007 = vpop.f32.mrb[0].mxu0
        %v5008 = vpop.f32.mrb[0].mxu0
        %v5009 = vadd.f32 0.0, %v5008
        %v5010 = vpop.f32.mrb[0].mxu0
        %5011 = vmatprep.mubr.bf16.mxu0 0
        %5012 = vmatmul.mubr.bf16.gmra.mrb[0].mxu0 %v4878
        %v5013 = vpop.f32.mrb[0].mxu0
        %v5014 = vadd.f32 0.0, %v5013
        %v5015 = vpop.f32.mrb[0].mxu0
        %v5016 = vpop.f32.mrb[0].mxu0
        %v5017 = vadd.f32 0.0, %v5016
        %v5018 = vpop.f32.mrb[0].mxu0
        %5019 = vmatprep.mubr.bf16.mxu0 0
        %5020 = vmatmul.mubr.bf16.gmra.mrb[0].mxu0 %v4879
        %v5021 = vpop.f32.mrb[0].mxu0
        %v5022 = vadd.f32 0.0, %v5021
        %v5023 = vpop.f32.mrb[0].mxu0
        %v5024 = vpop.f32.mrb[0].mxu0
        %v5025 = vadd.f32 0.0, %v5024
        %v5026 = vpop.f32.mrb[0].mxu0
        %5027 = vmatprep.mubr.bf16.mxu0 0
        %5028 = vmatmul.mubr.bf16.gmra.mrb[0].mxu0 %v4880
        %v5029 = vpop.f32.mrb[0].mxu0
        %v5030 = vadd.f32 0.0, %v5029
        %v5031 = vpop.f32.mrb[0].mxu0
        %v5032 = vpop.f32.mrb[0].mxu0
        %v5033 = vadd.f32 0.0, %v5032
        %v5034 = vpop.f32.mrb[0].mxu0
        %5035 = vmatprep.mubr.bf16.mxu0 0
        %5036 = vmatmul.mubr.bf16.gmra.mrb[0].mxu0 %v4881
        %v5037 = vpop.f32.mrb[0].mxu0
        %v5038 = vadd.f32 0.0, %v5037
        %v5039 = vpop.f32.mrb[0].mxu0
        %v5040 = vpop.f32.mrb[0].mxu0
        %v5041 = vadd.f32 0.0, %v5040
        %v5042 = vpop.f32.mrb[0].mxu0
        %5043 = vmatprep.mubr.bf16.mxu0 0
        %5044 = vmatmul.mubr.bf16.gmra.mrb[0].mxu0 %v4882
        %v5045 = vpop.f32.mrb[0].mxu0
        %v5046 = vadd.f32 0.0, %v5045
        %v5047 = vpop.f32.mrb[0].mxu0
        %v5048 = vpop.f32.mrb[0].mxu0
        %v5049 = vadd.f32 0.0, %v5048
        %v5050 = vpop.f32.mrb[0].mxu0
        %5051 = vmatprep.mubr.bf16.mxu0 0
        %5052 = vmatmul.mubr.bf16.gmra.mrb[0].mxu0 %v4883
        %v5053 = vpop.f32.mrb[0].mxu0
        %v5054 = vadd.f32 0.0, %v5053
        %v5055 = vpop.f32.mrb[0].mxu0
        %v5056 = vpop.f32.mrb[0].mxu0
        %v5057 = vadd.f32 0.0, %v5056
        %v5058 = vpop.f32.mrb[0].mxu0
        %5059 = vmatprep.mubr.bf16.mxu0 0
        %5060 = vmatmul.mubr.bf16.gmra.mrb[0].mxu0 %v4884
        %v5061 = vpop.f32.mrb[0].mxu0
        %v5062 = vadd.f32 0.0, %v5061
        %v5063 = vpop.f32.mrb[0].mxu0
        %v5064 = vpop.f32.mrb[0].mxu0
        %v5065 = vadd.f32 0.0, %v5064
        %v5066 = vpop.f32.mrb[0].mxu0
        %5067 = vmatprep.mubr.bf16.mxu0 0
        %5068 = vmatmul.mubr.bf16.gmra.mrb[0].mxu0 %v4885
        %v5069 = vpop.f32.mrb[0].mxu0
        %v5070 = vadd.f32 0.0, %v5069
        %v5071 = vpop.f32.mrb[0].mxu0
        %v5072 = vpop.f32.mrb[0].mxu0
        %v5073 = vadd.f32 0.0, %v5072
        %v5074 = vpop.f32.mrb[0].mxu0
        %5075 = vmatprep.mubr.bf16.mxu0 0
        %5076 = vmatmul.mubr.bf16.gmra.mrb[0].mxu0 %v4886
        %v5077 = vpop.f32.mrb[0].mxu0
        %v5078 = vadd.f32 0.0, %v5077
        %v5079 = vpop.f32.mrb[0].mxu0
        %v5080 = vpop.f32.mrb[0].mxu0
        %v5081 = vadd.f32 0.0, %v5080
        %v5082 = vpop.f32.mrb[0].mxu0
        %5083 = vmatprep.mubr.bf16.mxu0 0
        %5084 = vmatmul.mubr.bf16.gmra.mrb[0].mxu0 %v4887
        %v5085 = vpop.f32.mrb[0].mxu0
        %v5086 = vadd.f32 0.0, %v5085
        %v5087 = vpop.f32.mrb[0].mxu0
        %v5088 = vpop.f32.mrb[0].mxu0
        %v5089 = vadd.f32 0.0, %v5088
        %v5090 = vpop.f32.mrb[0].mxu0
        %5091 = vmatprep.mubr.bf16.mxu0 0
        %5092 = vmatmul.mubr.bf16.gmra.mrb[0].mxu0 %v4888
        %v5093 = vpop.f32.mrb[0].mxu0
        %v5094 = vadd.f32 0.0, %v5093
        %v5095 = vpop.f32.mrb[0].mxu0
        %v5096 = vpop.f32.mrb[0].mxu0
        %v5097 = vadd.f32 0.0, %v5096
        %v5098 = vpop.f32.mrb[0].mxu0
        %5099 = vmatprep.mubr.bf16.mxu0 0
        %5100 = vmatmul.mubr.bf16.gmra.mrb[0].mxu0 %v4889
        %v5101 = vpop.f32.mrb[0].mxu0
        %v5102 = vadd.f32 0.0, %v5101
        %v5103 = vpop.f32.mrb[0].mxu0
        %v5104 = vpop.f32.mrb[0].mxu0
        %v5105 = vadd.f32 0.0, %v5104
        %v5106 = vpop.f32.mrb[0].mxu0
        %5107 = vmatprep.mubr.bf16.mxu0 0
        %5108 = vmatmul.mubr.bf16.gmra.mrb[0].mxu0 %v4890
        %v5109 = vpop.f32.mrb[0].mxu0
        %v5110 = vadd.f32 0.0, %v5109
        %v5111 = vpop.f32.mrb[0].mxu0
        %v5112 = vpop.f32.mrb[0].mxu0
        %v5113 = vadd.f32 0.0, %v5112
        %v5114 = vpop.f32.mrb[0].mxu0
        %5115 = vdwg.mxu0
        %v5116 = vadd.f32 %v4729, %v4990
        %v5117 = vadd.f32 %v4730, %v4993
        %v5118 = vadd.f32 %v4731, %v4998
        %v5119 = vadd.f32 %v4732, %v5001
        %v5120 = vadd.f32 %v4733, %v5006
        %v5121 = vadd.f32 %v4734, %v5009
        %v5122 = vadd.f32 %v4735, %v5014
        %v5123 = vadd.f32 %v4736, %v5017
        %v5124 = vadd.f32 %v4737, %v5022
        %v5125 = vadd.f32 %v4738, %v5025
        %v5126 = vadd.f32 %v4739, %v5030
        %v5127 = vadd.f32 %v4740, %v5033
        %v5128 = vadd.f32 %v4741, %v5038
        %v5129 = vadd.f32 %v4742, %v5041
        %v5130 = vadd.f32 %v4743, %v5046
        %v5131 = vadd.f32 %v4744, %v5049
        %v5132 = vadd.f32 %v4745, %v5054
        %v5133 = vadd.f32 %v4746, %v5057
        %v5134 = vadd.f32 %v4747, %v5062
        %v5135 = vadd.f32 %v4748, %v5065
        %v5136 = vadd.f32 %v4749, %v5070
        %v5137 = vadd.f32 %v4750, %v5073
        %v5138 = vadd.f32 %v4751, %v5078
        %v5139 = vadd.f32 %v4752, %v5081
        %v5140 = vadd.f32 %v4753, %v5086
        %v5141 = vadd.f32 %v4754, %v5089
        %v5142 = vadd.f32 %v4755, %v5094
        %v5143 = vadd.f32 %v4756, %v5097
        %v5144 = vadd.f32 %v4757, %v5102
        %v5145 = vadd.f32 %v4758, %v5105
        %v5146 = vadd.f32 %v4759, %v5110
        %v5147 = vadd.f32 %v4760, %v5113
        %v5148 = vld [vmem:[%s4761] sm:$0xf]
        %v5149 = vld [vmem:[%s4761 + $0x4] sm:$0xf]
        %v5150 = vld [vmem:[%s4761 + $0x8] sm:$0x1]
        %v5151 = vld [vmem:[%s4761 + $0xc] sm:$0xf]
        %v5152 = vld [vmem:[%s4761 + $0x10] sm:$0xf]
        %v5153 = vld [vmem:[%s4761 + $0x14] sm:$0x1]
        %v5154 = vld [vmem:[%s4761 + $0x18] sm:$0xf]
        %v5155 = vld [vmem:[%s4761 + $0x1c] sm:$0xf]
        %v5156 = vld [vmem:[%s4761 + $0x20] sm:$0x1]
        %v5157 = vld [vmem:[%s4761 + $0x24] sm:$0xf]
        %v5158 = vld [vmem:[%s4761 + $0x28] sm:$0xf]
        %v5159 = vld [vmem:[%s4761 + $0x2c] sm:$0x1]
        %v5160 = vld [vmem:[%s4761 + $0x30] sm:$0xf]
        %v5161 = vld [vmem:[%s4761 + $0x34] sm:$0xf]
        %v5162 = vld [vmem:[%s4761 + $0x38] sm:$0x1]
        %v5163 = vld [vmem:[%s4761 + $0x3c] sm:$0xf]
        %v5164 = vld [vmem:[%s4761 + $0x40] sm:$0xf]
        %v5165 = vld [vmem:[%s4761 + $0x44] sm:$0x1]
        %v5166 = vld [vmem:[%s4761 + $0x48] sm:$0xf]
        %v5167 = vld [vmem:[%s4761 + $0x4c] sm:$0xf]
        %v5168 = vld [vmem:[%s4761 + $0x50] sm:$0x1]
        %v5169 = vld [vmem:[%s4761 + $0x54] sm:$0xf]
        %v5170 = vld [vmem:[%s4761 + $0x58] sm:$0xf]
        %v5171 = vld [vmem:[%s4761 + $0x5c] sm:$0x1]
        %v5172 = vld [vmem:[%s4761 + $0x60] sm:$0xf]
        %v5173 = vld [vmem:[%s4761 + $0x64] sm:$0xf]
        %v5174 = vld [vmem:[%s4761 + $0x68] sm:$0x1]
        %v5175 = vld [vmem:[%s4761 + $0x6c] sm:$0xf]
        %v5176 = vld [vmem:[%s4761 + $0x70] sm:$0xf]
        %v5177 = vld [vmem:[%s4761 + $0x74] sm:$0x1]
        %v5178 = vld [vmem:[%s4761 + $0x78] sm:$0xf]
        %v5179 = vld [vmem:[%s4761 + $0x7c] sm:$0xf]
        %v5180 = vld [vmem:[%s4761 + $0x80] sm:$0x1]
        %v5181 = vld [vmem:[%s4761 + $0x84] sm:$0xf]
        %v5182 = vld [vmem:[%s4761 + $0x88] sm:$0xf]
        %v5183 = vld [vmem:[%s4761 + $0x8c] sm:$0x1]
        %v5184 = vld [vmem:[%s4761 + $0x90] sm:$0xf]
        %v5185 = vld [vmem:[%s4761 + $0x94] sm:$0xf]
        %v5186 = vld [vmem:[%s4761 + $0x98] sm:$0x1]
        %v5187 = vld [vmem:[%s4761 + $0x9c] sm:$0xf]
        %v5188 = vld [vmem:[%s4761 + $0xa0] sm:$0xf]
        %v5189 = vld [vmem:[%s4761 + $0xa4] sm:$0x1]
        %v5190 = vld [vmem:[%s4761 + $0xa8] sm:$0xf]
        %v5191 = vld [vmem:[%s4761 + $0xac] sm:$0xf]
        %v5192 = vld [vmem:[%s4761 + $0xb0] sm:$0x1]
        %v5193 = vld [vmem:[%s4761 + $0xb4] sm:$0xf]
        %v5194 = vld [vmem:[%s4761 + $0xb8] sm:$0xf]
        %v5195 = vld [vmem:[%s4761 + $0xbc] sm:$0x1]
        %v5197 = vshrl.u32 %v5148, 16
        %v5199 = vrot.slane %v5197, 4
        %v5200 = vshll.u32 %v5148, 16
        %v5202 = vrot.slane %v5200, 5
        %v5203 = vor.u32 %v5199, %v5202
        %v5204 = vrot.slane %v5203, 4
        %v5206 = vshll.u32 %v5149, 16
        %v5208 = vrot.slane %v5206, 5
        %v5209 = vsel %vm1658, %v5204, %v5208
        %v5210 = vshrl.u32 %v5149, 16
        %v5212 = vrot.slane %v5210, 4
        %v5213 = vor.u32 %v5212, %v5208
        %v5214 = vrot.slane %v5213, 4
        %v5216 = vshll.u32 %v5150, 16
        %v5218 = vrot.slane %v5216, 5
        %v5219 = vsel %vm1658, %v5214, %v5218
        %v5221 = vshrl.u32 %v5151, 16
        %v5223 = vrot.slane %v5221, 4
        %v5224 = vshll.u32 %v5151, 16
        %v5226 = vrot.slane %v5224, 5
        %v5227 = vor.u32 %v5223, %v5226
        %v5228 = vrot.slane %v5227, 4
        %v5230 = vshll.u32 %v5152, 16
        %v5232 = vrot.slane %v5230, 5
        %v5233 = vsel %vm1658, %v5228, %v5232
        %v5234 = vshrl.u32 %v5152, 16
        %v5236 = vrot.slane %v5234, 4
        %v5237 = vor.u32 %v5236, %v5232
        %v5238 = vrot.slane %v5237, 4
        %v5240 = vshll.u32 %v5153, 16
        %v5242 = vrot.slane %v5240, 5
        %v5243 = vsel %vm1658, %v5238, %v5242
        %v5245 = vshrl.u32 %v5154, 16
        %v5247 = vrot.slane %v5245, 4
        %v5248 = vshll.u32 %v5154, 16
        %v5250 = vrot.slane %v5248, 5
        %v5251 = vor.u32 %v5247, %v5250
        %v5252 = vrot.slane %v5251, 4
        %v5254 = vshll.u32 %v5155, 16
        %v5256 = vrot.slane %v5254, 5
        %v5257 = vsel %vm1658, %v5252, %v5256
        %v5258 = vshrl.u32 %v5155, 16
        %v5260 = vrot.slane %v5258, 4
        %v5261 = vor.u32 %v5260, %v5256
        %v5262 = vrot.slane %v5261, 4
        %v5264 = vshll.u32 %v5156, 16
        %v5266 = vrot.slane %v5264, 5
        %v5267 = vsel %vm1658, %v5262, %v5266
        %v5269 = vshrl.u32 %v5157, 16
        %v5271 = vrot.slane %v5269, 4
        %v5272 = vshll.u32 %v5157, 16
        %v5274 = vrot.slane %v5272, 5
        %v5275 = vor.u32 %v5271, %v5274
        %v5276 = vrot.slane %v5275, 4
        %v5278 = vshll.u32 %v5158, 16
        %v5280 = vrot.slane %v5278, 5
        %v5281 = vsel %vm1658, %v5276, %v5280
        %v5282 = vshrl.u32 %v5158, 16
        %v5284 = vrot.slane %v5282, 4
        %v5285 = vor.u32 %v5284, %v5280
        %v5286 = vrot.slane %v5285, 4
        %v5288 = vshll.u32 %v5159, 16
        %v5290 = vrot.slane %v5288, 5
        %v5291 = vsel %vm1658, %v5286, %v5290
        %v5293 = vshrl.u32 %v5160, 16
        %v5295 = vrot.slane %v5293, 4
        %v5296 = vshll.u32 %v5160, 16
        %v5298 = vrot.slane %v5296, 5
        %v5299 = vor.u32 %v5295, %v5298
        %v5300 = vrot.slane %v5299, 4
        %v5302 = vshll.u32 %v5161, 16
        %v5304 = vrot.slane %v5302, 5
        %v5305 = vsel %vm1658, %v5300, %v5304
        %v5306 = vshrl.u32 %v5161, 16
        %v5308 = vrot.slane %v5306, 4
        %v5309 = vor.u32 %v5308, %v5304
        %v5310 = vrot.slane %v5309, 4
        %v5312 = vshll.u32 %v5162, 16
        %v5314 = vrot.slane %v5312, 5
        %v5315 = vsel %vm1658, %v5310, %v5314
        %v5317 = vshrl.u32 %v5163, 16
        %v5319 = vrot.slane %v5317, 4
        %v5320 = vshll.u32 %v5163, 16
        %v5322 = vrot.slane %v5320, 5
        %v5323 = vor.u32 %v5319, %v5322
        %v5324 = vrot.slane %v5323, 4
        %v5326 = vshll.u32 %v5164, 16
        %v5328 = vrot.slane %v5326, 5
        %v5329 = vsel %vm1658, %v5324, %v5328
        %v5330 = vshrl.u32 %v5164, 16
        %v5332 = vrot.slane %v5330, 4
        %v5333 = vor.u32 %v5332, %v5328
        %v5334 = vrot.slane %v5333, 4
        %v5336 = vshll.u32 %v5165, 16
        %v5338 = vrot.slane %v5336, 5
        %v5339 = vsel %vm1658, %v5334, %v5338
        %v5341 = vshrl.u32 %v5166, 16
        %v5343 = vrot.slane %v5341, 4
        %v5344 = vshll.u32 %v5166, 16
        %v5346 = vrot.slane %v5344, 5
        %v5347 = vor.u32 %v5343, %v5346
        %v5348 = vrot.slane %v5347, 4
        %v5350 = vshll.u32 %v5167, 16
        %v5352 = vrot.slane %v5350, 5
        %v5353 = vsel %vm1658, %v5348, %v5352
        %v5354 = vshrl.u32 %v5167, 16
        %v5356 = vrot.slane %v5354, 4
        %v5357 = vor.u32 %v5356, %v5352
        %v5358 = vrot.slane %v5357, 4
        %v5360 = vshll.u32 %v5168, 16
        %v5362 = vrot.slane %v5360, 5
        %v5363 = vsel %vm1658, %v5358, %v5362
        %v5365 = vshrl.u32 %v5169, 16
        %v5367 = vrot.slane %v5365, 4
        %v5368 = vshll.u32 %v5169, 16
        %v5370 = vrot.slane %v5368, 5
        %v5371 = vor.u32 %v5367, %v5370
        %v5372 = vrot.slane %v5371, 4
        %v5374 = vshll.u32 %v5170, 16
        %v5376 = vrot.slane %v5374, 5
        %v5377 = vsel %vm1658, %v5372, %v5376
        %v5378 = vshrl.u32 %v5170, 16
        %v5380 = vrot.slane %v5378, 4
        %v5381 = vor.u32 %v5380, %v5376
        %v5382 = vrot.slane %v5381, 4
        %v5384 = vshll.u32 %v5171, 16
        %v5386 = vrot.slane %v5384, 5
        %v5387 = vsel %vm1658, %v5382, %v5386
        %v5389 = vshrl.u32 %v5172, 16
        %v5391 = vrot.slane %v5389, 4
        %v5392 = vshll.u32 %v5172, 16
        %v5394 = vrot.slane %v5392, 5
        %v5395 = vor.u32 %v5391, %v5394
        %v5396 = vrot.slane %v5395, 4
        %v5398 = vshll.u32 %v5173, 16
        %v5400 = vrot.slane %v5398, 5
        %v5401 = vsel %vm1658, %v5396, %v5400
        %v5402 = vshrl.u32 %v5173, 16
        %v5404 = vrot.slane %v5402, 4
        %v5405 = vor.u32 %v5404, %v5400
        %v5406 = vrot.slane %v5405, 4
        %v5408 = vshll.u32 %v5174, 16
        %v5410 = vrot.slane %v5408, 5
        %v5411 = vsel %vm1658, %v5406, %v5410
        %v5413 = vshrl.u32 %v5175, 16
        %v5415 = vrot.slane %v5413, 4
        %v5416 = vshll.u32 %v5175, 16
        %v5418 = vrot.slane %v5416, 5
        %v5419 = vor.u32 %v5415, %v5418
        %v5420 = vrot.slane %v5419, 4
        %v5422 = vshll.u32 %v5176, 16
        %v5424 = vrot.slane %v5422, 5
        %v5425 = vsel %vm1658, %v5420, %v5424
        %v5426 = vshrl.u32 %v5176, 16
        %v5428 = vrot.slane %v5426, 4
        %v5429 = vor.u32 %v5428, %v5424
        %v5430 = vrot.slane %v5429, 4
        %v5432 = vshll.u32 %v5177, 16
        %v5434 = vrot.slane %v5432, 5
        %v5435 = vsel %vm1658, %v5430, %v5434
        %v5437 = vshrl.u32 %v5178, 16
        %v5439 = vrot.slane %v5437, 4
        %v5440 = vshll.u32 %v5178, 16
        %v5442 = vrot.slane %v5440, 5
        %v5443 = vor.u32 %v5439, %v5442
        %v5444 = vrot.slane %v5443, 4
        %v5446 = vshll.u32 %v5179, 16
        %v5448 = vrot.slane %v5446, 5
        %v5449 = vsel %vm1658, %v5444, %v5448
        %v5450 = vshrl.u32 %v5179, 16
        %v5452 = vrot.slane %v5450, 4
        %v5453 = vor.u32 %v5452, %v5448
        %v5454 = vrot.slane %v5453, 4
        %v5456 = vshll.u32 %v5180, 16
        %v5458 = vrot.slane %v5456, 5
        %v5459 = vsel %vm1658, %v5454, %v5458
        %v5461 = vshrl.u32 %v5181, 16
        %v5463 = vrot.slane %v5461, 4
        %v5464 = vshll.u32 %v5181, 16
        %v5466 = vrot.slane %v5464, 5
        %v5467 = vor.u32 %v5463, %v5466
        %v5468 = vrot.slane %v5467, 4
        %v5470 = vshll.u32 %v5182, 16
        %v5472 = vrot.slane %v5470, 5
        %v5473 = vsel %vm1658, %v5468, %v5472
        %v5474 = vshrl.u32 %v5182, 16
        %v5476 = vrot.slane %v5474, 4
        %v5477 = vor.u32 %v5476, %v5472
        %v5478 = vrot.slane %v5477, 4
        %v5480 = vshll.u32 %v5183, 16
        %v5482 = vrot.slane %v5480, 5
        %v5483 = vsel %vm1658, %v5478, %v5482
        %v5485 = vshrl.u32 %v5184, 16
        %v5487 = vrot.slane %v5485, 4
        %v5488 = vshll.u32 %v5184, 16
        %v5490 = vrot.slane %v5488, 5
        %v5491 = vor.u32 %v5487, %v5490
        %v5492 = vrot.slane %v5491, 4
        %v5494 = vshll.u32 %v5185, 16
        %v5496 = vrot.slane %v5494, 5
        %v5497 = vsel %vm1658, %v5492, %v5496
        %v5498 = vshrl.u32 %v5185, 16
        %v5500 = vrot.slane %v5498, 4
        %v5501 = vor.u32 %v5500, %v5496
        %v5502 = vrot.slane %v5501, 4
        %v5504 = vshll.u32 %v5186, 16
        %v5506 = vrot.slane %v5504, 5
        %v5507 = vsel %vm1658, %v5502, %v5506
        %v5509 = vshrl.u32 %v5187, 16
        %v5511 = vrot.slane %v5509, 4
        %v5512 = vshll.u32 %v5187, 16
        %v5514 = vrot.slane %v5512, 5
        %v5515 = vor.u32 %v5511, %v5514
        %v5516 = vrot.slane %v5515, 4
        %v5518 = vshll.u32 %v5188, 16
        %v5520 = vrot.slane %v5518, 5
        %v5521 = vsel %vm1658, %v5516, %v5520
        %v5522 = vshrl.u32 %v5188, 16
        %v5524 = vrot.slane %v5522, 4
        %v5525 = vor.u32 %v5524, %v5520
        %v5526 = vrot.slane %v5525, 4
        %v5528 = vshll.u32 %v5189, 16
        %v5530 = vrot.slane %v5528, 5
        %v5531 = vsel %vm1658, %v5526, %v5530
        %v5533 = vshrl.u32 %v5190, 16
        %v5535 = vrot.slane %v5533, 4
        %v5536 = vshll.u32 %v5190, 16
        %v5538 = vrot.slane %v5536, 5
        %v5539 = vor.u32 %v5535, %v5538
        %v5540 = vrot.slane %v5539, 4
        %v5542 = vshll.u32 %v5191, 16
        %v5544 = vrot.slane %v5542, 5
        %v5545 = vsel %vm1658, %v5540, %v5544
        %v5546 = vshrl.u32 %v5191, 16
        %v5548 = vrot.slane %v5546, 4
        %v5549 = vor.u32 %v5548, %v5544
        %v5550 = vrot.slane %v5549, 4
        %v5552 = vshll.u32 %v5192, 16
        %v5554 = vrot.slane %v5552, 5
        %v5555 = vsel %vm1658, %v5550, %v5554
        %v5557 = vshrl.u32 %v5193, 16
        %v5559 = vrot.slane %v5557, 4
        %v5560 = vshll.u32 %v5193, 16
        %v5562 = vrot.slane %v5560, 5
        %v5563 = vor.u32 %v5559, %v5562
        %v5564 = vrot.slane %v5563, 4
        %v5566 = vshll.u32 %v5194, 16
        %v5568 = vrot.slane %v5566, 5
        %v5569 = vsel %vm1658, %v5564, %v5568
        %v5570 = vshrl.u32 %v5194, 16
        %v5572 = vrot.slane %v5570, 4
        %v5573 = vor.u32 %v5572, %v5568
        %v5574 = vrot.slane %v5573, 4
        %v5576 = vshll.u32 %v5195, 16
        %v5578 = vrot.slane %v5576, 5
        %v5579 = vsel %vm1658, %v5574, %v5578
        %s5580 = scalar_lea.vmem [#allocation6], 448
        %v5581 = vld [vmem:[%s5580] sm:$0xf]
        %v5582 = vld [vmem:[%s5580 + $0x4] sm:$0xf]
        %v5583 = vld [vmem:[%s5580 + $0x8] sm:$0xf]
        %v5584 = vld [vmem:[%s5580 + $0xc] sm:$0xf]
        %v5585 = vld [vmem:[%s5580 + $0x10] sm:$0xf]
        %v5586 = vld [vmem:[%s5580 + $0x14] sm:$0xf]
        %v5587 = vld [vmem:[%s5580 + $0x18] sm:$0xf]
        %v5588 = vld [vmem:[%s5580 + $0x1c] sm:$0xf]
        %v5589 = vld [vmem:[%s5580 + $0x20] sm:$0xf]
        %v5590 = vld [vmem:[%s5580 + $0x24] sm:$0xf]
        %v5591 = vld [vmem:[%s5580 + $0x28] sm:$0xf]
        %v5592 = vld [vmem:[%s5580 + $0x2c] sm:$0xf]
        %v5593 = vld [vmem:[%s5580 + $0x30] sm:$0xf]
        %v5594 = vld [vmem:[%s5580 + $0x34] sm:$0xf]
        %v5595 = vld [vmem:[%s5580 + $0x38] sm:$0xf]
        %v5596 = vld [vmem:[%s5580 + $0x3c] sm:$0xf]
        %v5597 = vunpack.c.l.b16 %v5209
        %v5598 = vunpack.c.l.b16 %v5219
        %v5599 = vunpack.c.l.b16 %v5233
        %v5600 = vunpack.c.l.b16 %v5243
        %v5601 = vunpack.c.l.b16 %v5257
        %v5602 = vunpack.c.l.b16 %v5267
        %v5603 = vunpack.c.l.b16 %v5281
        %v5604 = vunpack.c.l.b16 %v5291
        %v5605 = vunpack.c.l.b16 %v5305
        %v5606 = vunpack.c.l.b16 %v5315
        %v5607 = vunpack.c.l.b16 %v5329
        %v5608 = vunpack.c.l.b16 %v5339
        %v5609 = vunpack.c.l.b16 %v5353
        %v5610 = vunpack.c.l.b16 %v5363
        %v5611 = vunpack.c.l.b16 %v5377
        %v5612 = vunpack.c.l.b16 %v5387
        %v5613 = vunpack.c.l.b16 %v5401
        %v5614 = vunpack.c.l.b16 %v5411
        %v5615 = vunpack.c.l.b16 %v5425
        %v5616 = vunpack.c.l.b16 %v5435
        %v5617 = vunpack.c.l.b16 %v5449
        %v5618 = vunpack.c.l.b16 %v5459
        %v5619 = vunpack.c.l.b16 %v5473
        %v5620 = vunpack.c.l.b16 %v5483
        %v5621 = vunpack.c.l.b16 %v5497
        %v5622 = vunpack.c.l.b16 %v5507
        %v5623 = vunpack.c.l.b16 %v5521
        %v5624 = vunpack.c.l.b16 %v5531
        %v5625 = vunpack.c.l.b16 %v5545
        %v5626 = vunpack.c.l.b16 %v5555
        %v5627 = vunpack.c.l.b16 %v5569
        %v5628 = vunpack.c.l.b16 %v5579
        %v5629 = vpack.c.b16 %v5598, %v5597
        %v5630 = vpack.c.b16 %v5600, %v5599
        %v5631 = vpack.c.b16 %v5602, %v5601
        %v5632 = vpack.c.b16 %v5604, %v5603
        %v5633 = vpack.c.b16 %v5606, %v5605
        %v5634 = vpack.c.b16 %v5608, %v5607
        %v5635 = vpack.c.b16 %v5610, %v5609
        %v5636 = vpack.c.b16 %v5612, %v5611
        %v5637 = vpack.c.b16 %v5614, %v5613
        %v5638 = vpack.c.b16 %v5616, %v5615
        %v5639 = vpack.c.b16 %v5618, %v5617
        %v5640 = vpack.c.b16 %v5620, %v5619
        %v5641 = vpack.c.b16 %v5622, %v5621
        %v5642 = vpack.c.b16 %v5624, %v5623
        %v5643 = vpack.c.b16 %v5626, %v5625
        %v5644 = vpack.c.b16 %v5628, %v5627
        %v5677 = vunpack.c.l.b16 %v5581
        %v5678 = vunpack.c.l.b16 %v5582
        %v5679 = vunpack.c.l.b16 %v5583
        %v5680 = vunpack.c.l.b16 %v5584
        %v5681 = vunpack.c.l.b16 %v5585
        %v5682 = vunpack.c.l.b16 %v5586
        %v5683 = vunpack.c.l.b16 %v5587
        %v5684 = vunpack.c.l.b16 %v5588
        %v5685 = vunpack.c.l.b16 %v5589
        %v5686 = vunpack.c.l.b16 %v5590
        %v5687 = vunpack.c.l.b16 %v5591
        %v5688 = vunpack.c.l.b16 %v5592
        %v5689 = vunpack.c.l.b16 %v5593
        %v5690 = vunpack.c.l.b16 %v5594
        %v5691 = vunpack.c.l.b16 %v5595
        %v5692 = vunpack.c.l.b16 %v5596
        %v5693 = vpack.c.b16 %v5678, %v5677
        %v5694 = vpack.c.b16 %v5680, %v5679
        %v5695 = vpack.c.b16 %v5682, %v5681
        %v5696 = vpack.c.b16 %v5684, %v5683
        %v5697 = vpack.c.b16 %v5686, %v5685
        %v5698 = vpack.c.b16 %v5688, %v5687
        %v5699 = vpack.c.b16 %v5690, %v5689
        %v5700 = vpack.c.b16 %v5692, %v5691
        %5709 = vmatprep.subr.bf16.mxu0 0
        %5710 = vmatpush1.bf16.msra.mxu0 %v5693
        %5711 = vmatprep.subr.bf16.mxu0 0
        %5712 = vmatpush1.bf16.msra.mxu0 %v5694
        %5713 = vmatprep.subr.bf16.mxu0 0
        %5714 = vmatpush1.bf16.msra.mxu0 %v5695
        %5715 = vmatprep.subr.bf16.mxu0 0
        %5716 = vmatpush1.bf16.msra.mxu0 %v5696
        %5717 = vmatprep.subr.bf16.mxu0 0
        %5718 = vmatpush1.bf16.msra.mxu0 %v5697
        %5719 = vmatprep.subr.bf16.mxu0 0
        %5720 = vmatpush1.bf16.msra.mxu0 %v5698
        %5721 = vmatprep.subr.bf16.mxu0 0
        %5722 = vmatpush1.bf16.msra.mxu0 %v5699
        %5723 = vmatprep.subr.bf16.mxu0 0
        %5724 = vmatpush1.bf16.msra.mxu0 %v5700
        %5725 = vmatprep.subr.bf16.mxu0 0
        %5726 = vmatpush1.bf16.msra.mxu0 0
        %5727 = vmatprep.subr.bf16.mxu0 0
        %5728 = vmatpush1.bf16.msra.mxu0 0
        %5729 = vmatprep.subr.bf16.mxu0 0
        %5730 = vmatpush1.bf16.msra.mxu0 0
        %5731 = vmatprep.subr.bf16.mxu0 0
        %5732 = vmatpush1.bf16.msra.mxu0 0
        %5733 = vmatprep.subr.bf16.mxu0 0
        %5734 = vmatpush1.bf16.msra.mxu0 0
        %5735 = vmatprep.subr.bf16.mxu0 0
        %5736 = vmatpush1.bf16.msra.mxu0 0
        %5737 = vmatprep.subr.bf16.mxu0 0
        %5738 = vmatpush1.bf16.msra.mxu0 0
        %5739 = vmatprep.subr.bf16.mxu0 0
        %5740 = vmatpush1.bf16.msra.mxu0 0
        %5741 = vmatprep.mubr.bf16.mxu0 0
        %5742 = vmatmul.mubr.bf16.gmra.mrb[0].mxu0 %v5629
        %v5743 = vpop.f32.mrb[0].mxu0
        %v5744 = vadd.f32 0.0, %v5743
        %v5745 = vpop.f32.mrb[0].mxu0
        %v5746 = vpop.f32.mrb[0].mxu0
        %v5747 = vadd.f32 0.0, %v5746
        %v5748 = vpop.f32.mrb[0].mxu0
        %5749 = vmatprep.mubr.bf16.mxu0 0
        %5750 = vmatmul.mubr.bf16.gmra.mrb[0].mxu0 %v5630
        %v5751 = vpop.f32.mrb[0].mxu0
        %v5752 = vadd.f32 0.0, %v5751
        %v5753 = vpop.f32.mrb[0].mxu0
        %v5754 = vpop.f32.mrb[0].mxu0
        %v5755 = vadd.f32 0.0, %v5754
        %v5756 = vpop.f32.mrb[0].mxu0
        %5757 = vmatprep.mubr.bf16.mxu0 0
        %5758 = vmatmul.mubr.bf16.gmra.mrb[0].mxu0 %v5631
        %v5759 = vpop.f32.mrb[0].mxu0
        %v5760 = vadd.f32 0.0, %v5759
        %v5761 = vpop.f32.mrb[0].mxu0
        %v5762 = vpop.f32.mrb[0].mxu0
        %v5763 = vadd.f32 0.0, %v5762
        %v5764 = vpop.f32.mrb[0].mxu0
        %5765 = vmatprep.mubr.bf16.mxu0 0
        %5766 = vmatmul.mubr.bf16.gmra.mrb[0].mxu0 %v5632
        %v5767 = vpop.f32.mrb[0].mxu0
        %v5768 = vadd.f32 0.0, %v5767
        %v5769 = vpop.f32.mrb[0].mxu0
        %v5770 = vpop.f32.mrb[0].mxu0
        %v5771 = vadd.f32 0.0, %v5770
        %v5772 = vpop.f32.mrb[0].mxu0
        %5773 = vmatprep.mubr.bf16.mxu0 0
        %5774 = vmatmul.mubr.bf16.gmra.mrb[0].mxu0 %v5633
        %v5775 = vpop.f32.mrb[0].mxu0
        %v5776 = vadd.f32 0.0, %v5775
        %v5777 = vpop.f32.mrb[0].mxu0
        %v5778 = vpop.f32.mrb[0].mxu0
        %v5779 = vadd.f32 0.0, %v5778
        %v5780 = vpop.f32.mrb[0].mxu0
        %5781 = vmatprep.mubr.bf16.mxu0 0
        %5782 = vmatmul.mubr.bf16.gmra.mrb[0].mxu0 %v5634
        %v5783 = vpop.f32.mrb[0].mxu0
        %v5784 = vadd.f32 0.0, %v5783
        %v5785 = vpop.f32.mrb[0].mxu0
        %v5786 = vpop.f32.mrb[0].mxu0
        %v5787 = vadd.f32 0.0, %v5786
        %v5788 = vpop.f32.mrb[0].mxu0
        %5789 = vmatprep.mubr.bf16.mxu0 0
        %5790 = vmatmul.mubr.bf16.gmra.mrb[0].mxu0 %v5635
        %v5791 = vpop.f32.mrb[0].mxu0
        %v5792 = vadd.f32 0.0, %v5791
        %v5793 = vpop.f32.mrb[0].mxu0
        %v5794 = vpop.f32.mrb[0].mxu0
        %v5795 = vadd.f32 0.0, %v5794
        %v5796 = vpop.f32.mrb[0].mxu0
        %5797 = vmatprep.mubr.bf16.mxu0 0
        %5798 = vmatmul.mubr.bf16.gmra.mrb[0].mxu0 %v5636
        %v5799 = vpop.f32.mrb[0].mxu0
        %v5800 = vadd.f32 0.0, %v5799
        %v5801 = vpop.f32.mrb[0].mxu0
        %v5802 = vpop.f32.mrb[0].mxu0
        %v5803 = vadd.f32 0.0, %v5802
        %v5804 = vpop.f32.mrb[0].mxu0
        %5805 = vmatprep.mubr.bf16.mxu0 0
        %5806 = vmatmul.mubr.bf16.gmra.mrb[0].mxu0 %v5637
        %v5807 = vpop.f32.mrb[0].mxu0
        %v5808 = vadd.f32 0.0, %v5807
        %v5809 = vpop.f32.mrb[0].mxu0
        %v5810 = vpop.f32.mrb[0].mxu0
        %v5811 = vadd.f32 0.0, %v5810
        %v5812 = vpop.f32.mrb[0].mxu0
        %5813 = vmatprep.mubr.bf16.mxu0 0
        %5814 = vmatmul.mubr.bf16.gmra.mrb[0].mxu0 %v5638
        %v5815 = vpop.f32.mrb[0].mxu0
        %v5816 = vadd.f32 0.0, %v5815
        %v5817 = vpop.f32.mrb[0].mxu0
        %v5818 = vpop.f32.mrb[0].mxu0
        %v5819 = vadd.f32 0.0, %v5818
        %v5820 = vpop.f32.mrb[0].mxu0
        %5821 = vmatprep.mubr.bf16.mxu0 0
        %5822 = vmatmul.mubr.bf16.gmra.mrb[0].mxu0 %v5639
        %v5823 = vpop.f32.mrb[0].mxu0
        %v5824 = vadd.f32 0.0, %v5823
        %v5825 = vpop.f32.mrb[0].mxu0
        %v5826 = vpop.f32.mrb[0].mxu0
        %v5827 = vadd.f32 0.0, %v5826
        %v5828 = vpop.f32.mrb[0].mxu0
        %5829 = vmatprep.mubr.bf16.mxu0 0
        %5830 = vmatmul.mubr.bf16.gmra.mrb[0].mxu0 %v5640
        %v5831 = vpop.f32.mrb[0].mxu0
        %v5832 = vadd.f32 0.0, %v5831
        %v5833 = vpop.f32.mrb[0].mxu0
        %v5834 = vpop.f32.mrb[0].mxu0
        %v5835 = vadd.f32 0.0, %v5834
        %v5836 = vpop.f32.mrb[0].mxu0
        %5837 = vmatprep.mubr.bf16.mxu0 0
        %5838 = vmatmul.mubr.bf16.gmra.mrb[0].mxu0 %v5641
        %v5839 = vpop.f32.mrb[0].mxu0
        %v5840 = vadd.f32 0.0, %v5839
        %v5841 = vpop.f32.mrb[0].mxu0
        %v5842 = vpop.f32.mrb[0].mxu0
        %v5843 = vadd.f32 0.0, %v5842
        %v5844 = vpop.f32.mrb[0].mxu0
        %5845 = vmatprep.mubr.bf16.mxu0 0
        %5846 = vmatmul.mubr.bf16.gmra.mrb[0].mxu0 %v5642
        %v5847 = vpop.f32.mrb[0].mxu0
        %v5848 = vadd.f32 0.0, %v5847
        %v5849 = vpop.f32.mrb[0].mxu0
        %v5850 = vpop.f32.mrb[0].mxu0
        %v5851 = vadd.f32 0.0, %v5850
        %v5852 = vpop.f32.mrb[0].mxu0
        %5853 = vmatprep.mubr.bf16.mxu0 0
        %5854 = vmatmul.mubr.bf16.gmra.mrb[0].mxu0 %v5643
        %v5855 = vpop.f32.mrb[0].mxu0
        %v5856 = vadd.f32 0.0, %v5855
        %v5857 = vpop.f32.mrb[0].mxu0
        %v5858 = vpop.f32.mrb[0].mxu0
        %v5859 = vadd.f32 0.0, %v5858
        %v5860 = vpop.f32.mrb[0].mxu0
        %5861 = vmatprep.mubr.bf16.mxu0 0
        %5862 = vmatmul.mubr.bf16.gmra.mrb[0].mxu0 %v5644
        %v5863 = vpop.f32.mrb[0].mxu0
        %v5864 = vadd.f32 0.0, %v5863
        %v5865 = vpop.f32.mrb[0].mxu0
        %v5866 = vpop.f32.mrb[0].mxu0
        %v5867 = vadd.f32 0.0, %v5866
        %v5868 = vpop.f32.mrb[0].mxu0
        %5869 = vdwg.mxu0
        %v5870 = vadd.f32 %v5116, %v5744
        %v5871 = vadd.f32 %v5117, %v5747
        %v5872 = vadd.f32 %v5118, %v5752
        %v5873 = vadd.f32 %v5119, %v5755
        %v5874 = vadd.f32 %v5120, %v5760
        %v5875 = vadd.f32 %v5121, %v5763
        %v5876 = vadd.f32 %v5122, %v5768
        %v5877 = vadd.f32 %v5123, %v5771
        %v5878 = vadd.f32 %v5124, %v5776
        %v5879 = vadd.f32 %v5125, %v5779
        %v5880 = vadd.f32 %v5126, %v5784
        %v5881 = vadd.f32 %v5127, %v5787
        %v5882 = vadd.f32 %v5128, %v5792
        %v5883 = vadd.f32 %v5129, %v5795
        %v5884 = vadd.f32 %v5130, %v5800
        %v5885 = vadd.f32 %v5131, %v5803
        %v5886 = vadd.f32 %v5132, %v5808
        %v5887 = vadd.f32 %v5133, %v5811
        %v5888 = vadd.f32 %v5134, %v5816
        %v5889 = vadd.f32 %v5135, %v5819
        %v5890 = vadd.f32 %v5136, %v5824
        %v5891 = vadd.f32 %v5137, %v5827
        %v5892 = vadd.f32 %v5138, %v5832
        %v5893 = vadd.f32 %v5139, %v5835
        %v5894 = vadd.f32 %v5140, %v5840
        %v5895 = vadd.f32 %v5141, %v5843
        %v5896 = vadd.f32 %v5142, %v5848
        %v5897 = vadd.f32 %v5143, %v5851
        %v5898 = vadd.f32 %v5144, %v5856
        %v5899 = vadd.f32 %v5145, %v5859
        %v5900 = vadd.f32 %v5146, %v5864
        %v5901 = vadd.f32 %v5147, %v5867
        %v5902 = vld [vmem:[%s4761] sm:$0xe]
        %v5903 = vld [vmem:[%s4761 + $0xc] sm:$0xe]
        %v5904 = vld [vmem:[%s4761 + $0x18] sm:$0xe]
        %v5905 = vld [vmem:[%s4761 + $0x24] sm:$0xe]
        %v5906 = vld [vmem:[%s4761 + $0x30] sm:$0xe]
        %v5907 = vld [vmem:[%s4761 + $0x3c] sm:$0xe]
        %v5908 = vld [vmem:[%s4761 + $0x48] sm:$0xe]
        %v5909 = vld [vmem:[%s4761 + $0x54] sm:$0xe]
        %v5910 = vld [vmem:[%s4761 + $0x60] sm:$0xe]
        %v5911 = vld [vmem:[%s4761 + $0x6c] sm:$0xe]
        %v5912 = vld [vmem:[%s4761 + $0x78] sm:$0xe]
        %v5913 = vld [vmem:[%s4761 + $0x84] sm:$0xe]
        %v5914 = vld [vmem:[%s4761 + $0x90] sm:$0xe]
        %v5915 = vld [vmem:[%s4761 + $0x9c] sm:$0xe]
        %v5916 = vld [vmem:[%s4761 + $0xa8] sm:$0xe]
        %v5917 = vld [vmem:[%s4761 + $0xb4] sm:$0xe]
        %v5966 = vrot.slane %v5902, 5
        %v5967 = vrot.slane %v5966, 4
        %v5968 = vrot.slane %v5149, 5
        %v5969 = vsel %vm2688, %v5967, %v5968
        %v5970 = vrot.slane %v5968, 4
        %v5971 = vrot.slane %v5150, 5
        %v5972 = vsel %vm2688, %v5970, %v5971
        %v5973 = vrot.slane %v5903, 5
        %v5974 = vrot.slane %v5973, 4
        %v5975 = vrot.slane %v5152, 5
        %v5976 = vsel %vm2688, %v5974, %v5975
        %v5977 = vrot.slane %v5975, 4
        %v5978 = vrot.slane %v5153, 5
        %v5979 = vsel %vm2688, %v5977, %v5978
        %v5980 = vrot.slane %v5904, 5
        %v5981 = vrot.slane %v5980, 4
        %v5982 = vrot.slane %v5155, 5
        %v5983 = vsel %vm2688, %v5981, %v5982
        %v5984 = vrot.slane %v5982, 4
        %v5985 = vrot.slane %v5156, 5
        %v5986 = vsel %vm2688, %v5984, %v5985
        %v5987 = vrot.slane %v5905, 5
        %v5988 = vrot.slane %v5987, 4
        %v5989 = vrot.slane %v5158, 5
        %v5990 = vsel %vm2688, %v5988, %v5989
        %v5991 = vrot.slane %v5989, 4
        %v5992 = vrot.slane %v5159, 5
        %v5993 = vsel %vm2688, %v5991, %v5992
        %v5994 = vrot.slane %v5906, 5
        %v5995 = vrot.slane %v5994, 4
        %v5996 = vrot.slane %v5161, 5
        %v5997 = vsel %vm2688, %v5995, %v5996
        %v5998 = vrot.slane %v5996, 4
        %v5999 = vrot.slane %v5162, 5
        %v6000 = vsel %vm2688, %v5998, %v5999
        %v6001 = vrot.slane %v5907, 5
        %v6002 = vrot.slane %v6001, 4
        %v6003 = vrot.slane %v5164, 5
        %v6004 = vsel %vm2688, %v6002, %v6003
        %v6005 = vrot.slane %v6003, 4
        %v6006 = vrot.slane %v5165, 5
        %v6007 = vsel %vm2688, %v6005, %v6006
        %v6008 = vrot.slane %v5908, 5
        %v6009 = vrot.slane %v6008, 4
        %v6010 = vrot.slane %v5167, 5
        %v6011 = vsel %vm2688, %v6009, %v6010
        %v6012 = vrot.slane %v6010, 4
        %v6013 = vrot.slane %v5168, 5
        %v6014 = vsel %vm2688, %v6012, %v6013
        %v6015 = vrot.slane %v5909, 5
        %v6016 = vrot.slane %v6015, 4
        %v6017 = vrot.slane %v5170, 5
        %v6018 = vsel %vm2688, %v6016, %v6017
        %v6019 = vrot.slane %v6017, 4
        %v6020 = vrot.slane %v5171, 5
        %v6021 = vsel %vm2688, %v6019, %v6020
        %v6022 = vrot.slane %v5910, 5
        %v6023 = vrot.slane %v6022, 4
        %v6024 = vrot.slane %v5173, 5
        %v6025 = vsel %vm2688, %v6023, %v6024
        %v6026 = vrot.slane %v6024, 4
        %v6027 = vrot.slane %v5174, 5
        %v6028 = vsel %vm2688, %v6026, %v6027
        %v6029 = vrot.slane %v5911, 5
        %v6030 = vrot.slane %v6029, 4
        %v6031 = vrot.slane %v5176, 5
        %v6032 = vsel %vm2688, %v6030, %v6031
        %v6033 = vrot.slane %v6031, 4
        %v6034 = vrot.slane %v5177, 5
        %v6035 = vsel %vm2688, %v6033, %v6034
        %v6036 = vrot.slane %v5912, 5
        %v6037 = vrot.slane %v6036, 4
        %v6038 = vrot.slane %v5179, 5
        %v6039 = vsel %vm2688, %v6037, %v6038
        %v6040 = vrot.slane %v6038, 4
        %v6041 = vrot.slane %v5180, 5
        %v6042 = vsel %vm2688, %v6040, %v6041
        %v6043 = vrot.slane %v5913, 5
        %v6044 = vrot.slane %v6043, 4
        %v6045 = vrot.slane %v5182, 5
        %v6046 = vsel %vm2688, %v6044, %v6045
        %v6047 = vrot.slane %v6045, 4
        %v6048 = vrot.slane %v5183, 5
        %v6049 = vsel %vm2688, %v6047, %v6048
        %v6050 = vrot.slane %v5914, 5
        %v6051 = vrot.slane %v6050, 4
        %v6052 = vrot.slane %v5185, 5
        %v6053 = vsel %vm2688, %v6051, %v6052
        %v6054 = vrot.slane %v6052, 4
        %v6055 = vrot.slane %v5186, 5
        %v6056 = vsel %vm2688, %v6054, %v6055
        %v6057 = vrot.slane %v5915, 5
        %v6058 = vrot.slane %v6057, 4
        %v6059 = vrot.slane %v5188, 5
        %v6060 = vsel %vm2688, %v6058, %v6059
        %v6061 = vrot.slane %v6059, 4
        %v6062 = vrot.slane %v5189, 5
        %v6063 = vsel %vm2688, %v6061, %v6062
        %v6064 = vrot.slane %v5916, 5
        %v6065 = vrot.slane %v6064, 4
        %v6066 = vrot.slane %v5191, 5
        %v6067 = vsel %vm2688, %v6065, %v6066
        %v6068 = vrot.slane %v6066, 4
        %v6069 = vrot.slane %v5192, 5
        %v6070 = vsel %vm2688, %v6068, %v6069
        %v6071 = vrot.slane %v5917, 5
        %v6072 = vrot.slane %v6071, 4
        %v6073 = vrot.slane %v5194, 5
        %v6074 = vsel %vm2688, %v6072, %v6073
        %v6075 = vrot.slane %v6073, 4
        %v6076 = vrot.slane %v5195, 5
        %v6077 = vsel %vm2688, %v6075, %v6076
        %s6078 = scalar_lea.vmem [#allocation6], 512
        %v6079 = vld [vmem:[%s6078] sm:$0xf]
        %v6080 = vld [vmem:[%s6078 + $0x4] sm:$0xf]
        %v6081 = vld [vmem:[%s6078 + $0x8] sm:$0xf]
        %v6082 = vld [vmem:[%s6078 + $0xc] sm:$0xf]
        %v6083 = vld [vmem:[%s6078 + $0x10] sm:$0xf]
        %v6084 = vld [vmem:[%s6078 + $0x14] sm:$0xf]
        %v6085 = vld [vmem:[%s6078 + $0x18] sm:$0xf]
        %v6086 = vld [vmem:[%s6078 + $0x1c] sm:$0xf]
        %v6087 = vld [vmem:[%s6078 + $0x20] sm:$0xf]
        %v6088 = vld [vmem:[%s6078 + $0x24] sm:$0xf]
        %v6089 = vld [vmem:[%s6078 + $0x28] sm:$0xf]
        %v6090 = vld [vmem:[%s6078 + $0x2c] sm:$0xf]
        %v6091 = vld [vmem:[%s6078 + $0x30] sm:$0xf]
        %v6092 = vld [vmem:[%s6078 + $0x34] sm:$0xf]
        %v6093 = vld [vmem:[%s6078 + $0x38] sm:$0xf]
        %v6094 = vld [vmem:[%s6078 + $0x3c] sm:$0xf]
        %v6095 = vunpack.c.l.b16 %v5969
        %v6096 = vunpack.c.l.b16 %v5972
        %v6097 = vunpack.c.l.b16 %v5976
        %v6098 = vunpack.c.l.b16 %v5979
        %v6099 = vunpack.c.l.b16 %v5983
        %v6100 = vunpack.c.l.b16 %v5986
        %v6101 = vunpack.c.l.b16 %v5990
        %v6102 = vunpack.c.l.b16 %v5993
        %v6103 = vunpack.c.l.b16 %v5997
        %v6104 = vunpack.c.l.b16 %v6000
        %v6105 = vunpack.c.l.b16 %v6004
        %v6106 = vunpack.c.l.b16 %v6007
        %v6107 = vunpack.c.l.b16 %v6011
        %v6108 = vunpack.c.l.b16 %v6014
        %v6109 = vunpack.c.l.b16 %v6018
        %v6110 = vunpack.c.l.b16 %v6021
        %v6111 = vunpack.c.l.b16 %v6025
        %v6112 = vunpack.c.l.b16 %v6028
        %v6113 = vunpack.c.l.b16 %v6032
        %v6114 = vunpack.c.l.b16 %v6035
        %v6115 = vunpack.c.l.b16 %v6039
        %v6116 = vunpack.c.l.b16 %v6042
        %v6117 = vunpack.c.l.b16 %v6046
        %v6118 = vunpack.c.l.b16 %v6049
        %v6119 = vunpack.c.l.b16 %v6053
        %v6120 = vunpack.c.l.b16 %v6056
        %v6121 = vunpack.c.l.b16 %v6060
        %v6122 = vunpack.c.l.b16 %v6063
        %v6123 = vunpack.c.l.b16 %v6067
        %v6124 = vunpack.c.l.b16 %v6070
        %v6125 = vunpack.c.l.b16 %v6074
        %v6126 = vunpack.c.l.b16 %v6077
        %v6127 = vpack.c.b16 %v6096, %v6095
        %v6128 = vpack.c.b16 %v6098, %v6097
        %v6129 = vpack.c.b16 %v6100, %v6099
        %v6130 = vpack.c.b16 %v6102, %v6101
        %v6131 = vpack.c.b16 %v6104, %v6103
        %v6132 = vpack.c.b16 %v6106, %v6105
        %v6133 = vpack.c.b16 %v6108, %v6107
        %v6134 = vpack.c.b16 %v6110, %v6109
        %v6135 = vpack.c.b16 %v6112, %v6111
        %v6136 = vpack.c.b16 %v6114, %v6113
        %v6137 = vpack.c.b16 %v6116, %v6115
        %v6138 = vpack.c.b16 %v6118, %v6117
        %v6139 = vpack.c.b16 %v6120, %v6119
        %v6140 = vpack.c.b16 %v6122, %v6121
        %v6141 = vpack.c.b16 %v6124, %v6123
        %v6142 = vpack.c.b16 %v6126, %v6125
        %v6175 = vunpack.c.l.b16 %v6079
        %v6176 = vunpack.c.l.b16 %v6080
        %v6177 = vunpack.c.l.b16 %v6081
        %v6178 = vunpack.c.l.b16 %v6082
        %v6179 = vunpack.c.l.b16 %v6083
        %v6180 = vunpack.c.l.b16 %v6084
        %v6181 = vunpack.c.l.b16 %v6085
        %v6182 = vunpack.c.l.b16 %v6086
        %v6183 = vunpack.c.l.b16 %v6087
        %v6184 = vunpack.c.l.b16 %v6088
        %v6185 = vunpack.c.l.b16 %v6089
        %v6186 = vunpack.c.l.b16 %v6090
        %v6187 = vunpack.c.l.b16 %v6091
        %v6188 = vunpack.c.l.b16 %v6092
        %v6189 = vunpack.c.l.b16 %v6093
        %v6190 = vunpack.c.l.b16 %v6094
        %v6191 = vpack.c.b16 %v6176, %v6175
        %v6192 = vpack.c.b16 %v6178, %v6177
        %v6193 = vpack.c.b16 %v6180, %v6179
        %v6194 = vpack.c.b16 %v6182, %v6181
        %v6195 = vpack.c.b16 %v6184, %v6183
        %v6196 = vpack.c.b16 %v6186, %v6185
        %v6197 = vpack.c.b16 %v6188, %v6187
        %v6198 = vpack.c.b16 %v6190, %v6189
        %6207 = vmatprep.subr.bf16.mxu0 0
        %6208 = vmatpush1.bf16.msra.mxu0 %v6191
        %6209 = vmatprep.subr.bf16.mxu0 0
        %6210 = vmatpush1.bf16.msra.mxu0 %v6192
        %6211 = vmatprep.subr.bf16.mxu0 0
        %6212 = vmatpush1.bf16.msra.mxu0 %v6193
        %6213 = vmatprep.subr.bf16.mxu0 0
        %6214 = vmatpush1.bf16.msra.mxu0 %v6194
        %6215 = vmatprep.subr.bf16.mxu0 0
        %6216 = vmatpush1.bf16.msra.mxu0 %v6195
        %6217 = vmatprep.subr.bf16.mxu0 0
        %6218 = vmatpush1.bf16.msra.mxu0 %v6196
        %6219 = vmatprep.subr.bf16.mxu0 0
        %6220 = vmatpush1.bf16.msra.mxu0 %v6197
        %6221 = vmatprep.subr.bf16.mxu0 0
        %6222 = vmatpush1.bf16.msra.mxu0 %v6198
        %6223 = vmatprep.subr.bf16.mxu0 0
        %6224 = vmatpush1.bf16.msra.mxu0 0
        %6225 = vmatprep.subr.bf16.mxu0 0
        %6226 = vmatpush1.bf16.msra.mxu0 0
        %6227 = vmatprep.subr.bf16.mxu0 0
        %6228 = vmatpush1.bf16.msra.mxu0 0
        %6229 = vmatprep.subr.bf16.mxu0 0
        %6230 = vmatpush1.bf16.msra.mxu0 0
        %6231 = vmatprep.subr.bf16.mxu0 0
        %6232 = vmatpush1.bf16.msra.mxu0 0
        %6233 = vmatprep.subr.bf16.mxu0 0
        %6234 = vmatpush1.bf16.msra.mxu0 0
        %6235 = vmatprep.subr.bf16.mxu0 0
        %6236 = vmatpush1.bf16.msra.mxu0 0
        %6237 = vmatprep.subr.bf16.mxu0 0
        %6238 = vmatpush1.bf16.msra.mxu0 0
        %6239 = vmatprep.mubr.bf16.mxu0 0
        %6240 = vmatmul.mubr.bf16.gmra.mrb[0].mxu0 %v6127
        %v6241 = vpop.f32.mrb[0].mxu0
        %v6242 = vadd.f32 0.0, %v6241
        %v6243 = vpop.f32.mrb[0].mxu0
        %v6244 = vpop.f32.mrb[0].mxu0
        %v6245 = vadd.f32 0.0, %v6244
        %v6246 = vpop.f32.mrb[0].mxu0
        %6247 = vmatprep.mubr.bf16.mxu0 0
        %6248 = vmatmul.mubr.bf16.gmra.mrb[0].mxu0 %v6128
        %v6249 = vpop.f32.mrb[0].mxu0
        %v6250 = vadd.f32 0.0, %v6249
        %v6251 = vpop.f32.mrb[0].mxu0
        %v6252 = vpop.f32.mrb[0].mxu0
        %v6253 = vadd.f32 0.0, %v6252
        %v6254 = vpop.f32.mrb[0].mxu0
        %6255 = vmatprep.mubr.bf16.mxu0 0
        %6256 = vmatmul.mubr.bf16.gmra.mrb[0].mxu0 %v6129
        %v6257 = vpop.f32.mrb[0].mxu0
        %v6258 = vadd.f32 0.0, %v6257
        %v6259 = vpop.f32.mrb[0].mxu0
        %v6260 = vpop.f32.mrb[0].mxu0
        %v6261 = vadd.f32 0.0, %v6260
        %v6262 = vpop.f32.mrb[0].mxu0
        %6263 = vmatprep.mubr.bf16.mxu0 0
        %6264 = vmatmul.mubr.bf16.gmra.mrb[0].mxu0 %v6130
        %v6265 = vpop.f32.mrb[0].mxu0
        %v6266 = vadd.f32 0.0, %v6265
        %v6267 = vpop.f32.mrb[0].mxu0
        %v6268 = vpop.f32.mrb[0].mxu0
        %v6269 = vadd.f32 0.0, %v6268
        %v6270 = vpop.f32.mrb[0].mxu0
        %6271 = vmatprep.mubr.bf16.mxu0 0
        %6272 = vmatmul.mubr.bf16.gmra.mrb[0].mxu0 %v6131
        %v6273 = vpop.f32.mrb[0].mxu0
        %v6274 = vadd.f32 0.0, %v6273
        %v6275 = vpop.f32.mrb[0].mxu0
        %v6276 = vpop.f32.mrb[0].mxu0
        %v6277 = vadd.f32 0.0, %v6276
        %v6278 = vpop.f32.mrb[0].mxu0
        %6279 = vmatprep.mubr.bf16.mxu0 0
        %6280 = vmatmul.mubr.bf16.gmra.mrb[0].mxu0 %v6132
        %v6281 = vpop.f32.mrb[0].mxu0
        %v6282 = vadd.f32 0.0, %v6281
        %v6283 = vpop.f32.mrb[0].mxu0
        %v6284 = vpop.f32.mrb[0].mxu0
        %v6285 = vadd.f32 0.0, %v6284
        %v6286 = vpop.f32.mrb[0].mxu0
        %6287 = vmatprep.mubr.bf16.mxu0 0
        %6288 = vmatmul.mubr.bf16.gmra.mrb[0].mxu0 %v6133
        %v6289 = vpop.f32.mrb[0].mxu0
        %v6290 = vadd.f32 0.0, %v6289
        %v6291 = vpop.f32.mrb[0].mxu0
        %v6292 = vpop.f32.mrb[0].mxu0
        %v6293 = vadd.f32 0.0, %v6292
        %v6294 = vpop.f32.mrb[0].mxu0
        %6295 = vmatprep.mubr.bf16.mxu0 0
        %6296 = vmatmul.mubr.bf16.gmra.mrb[0].mxu0 %v6134
        %v6297 = vpop.f32.mrb[0].mxu0
        %v6298 = vadd.f32 0.0, %v6297
        %v6299 = vpop.f32.mrb[0].mxu0
        %v6300 = vpop.f32.mrb[0].mxu0
        %v6301 = vadd.f32 0.0, %v6300
        %v6302 = vpop.f32.mrb[0].mxu0
        %6303 = vmatprep.mubr.bf16.mxu0 0
        %6304 = vmatmul.mubr.bf16.gmra.mrb[0].mxu0 %v6135
        %v6305 = vpop.f32.mrb[0].mxu0
        %v6306 = vadd.f32 0.0, %v6305
        %v6307 = vpop.f32.mrb[0].mxu0
        %v6308 = vpop.f32.mrb[0].mxu0
        %v6309 = vadd.f32 0.0, %v6308
        %v6310 = vpop.f32.mrb[0].mxu0
        %6311 = vmatprep.mubr.bf16.mxu0 0
        %6312 = vmatmul.mubr.bf16.gmra.mrb[0].mxu0 %v6136
        %v6313 = vpop.f32.mrb[0].mxu0
        %v6314 = vadd.f32 0.0, %v6313
        %v6315 = vpop.f32.mrb[0].mxu0
        %v6316 = vpop.f32.mrb[0].mxu0
        %v6317 = vadd.f32 0.0, %v6316
        %v6318 = vpop.f32.mrb[0].mxu0
        %6319 = vmatprep.mubr.bf16.mxu0 0
        %6320 = vmatmul.mubr.bf16.gmra.mrb[0].mxu0 %v6137
        %v6321 = vpop.f32.mrb[0].mxu0
        %v6322 = vadd.f32 0.0, %v6321
        %v6323 = vpop.f32.mrb[0].mxu0
        %v6324 = vpop.f32.mrb[0].mxu0
        %v6325 = vadd.f32 0.0, %v6324
        %v6326 = vpop.f32.mrb[0].mxu0
        %6327 = vmatprep.mubr.bf16.mxu0 0
        %6328 = vmatmul.mubr.bf16.gmra.mrb[0].mxu0 %v6138
        %v6329 = vpop.f32.mrb[0].mxu0
        %v6330 = vadd.f32 0.0, %v6329
        %v6331 = vpop.f32.mrb[0].mxu0
        %v6332 = vpop.f32.mrb[0].mxu0
        %v6333 = vadd.f32 0.0, %v6332
        %v6334 = vpop.f32.mrb[0].mxu0
        %6335 = vmatprep.mubr.bf16.mxu0 0
        %6336 = vmatmul.mubr.bf16.gmra.mrb[0].mxu0 %v6139
        %v6337 = vpop.f32.mrb[0].mxu0
        %v6338 = vadd.f32 0.0, %v6337
        %v6339 = vpop.f32.mrb[0].mxu0
        %v6340 = vpop.f32.mrb[0].mxu0
        %v6341 = vadd.f32 0.0, %v6340
        %v6342 = vpop.f32.mrb[0].mxu0
        %6343 = vmatprep.mubr.bf16.mxu0 0
        %6344 = vmatmul.mubr.bf16.gmra.mrb[0].mxu0 %v6140
        %v6345 = vpop.f32.mrb[0].mxu0
        %v6346 = vadd.f32 0.0, %v6345
        %v6347 = vpop.f32.mrb[0].mxu0
        %v6348 = vpop.f32.mrb[0].mxu0
        %v6349 = vadd.f32 0.0, %v6348
        %v6350 = vpop.f32.mrb[0].mxu0
        %6351 = vmatprep.mubr.bf16.mxu0 0
        %6352 = vmatmul.mubr.bf16.gmra.mrb[0].mxu0 %v6141
        %v6353 = vpop.f32.mrb[0].mxu0
        %v6354 = vadd.f32 0.0, %v6353
        %v6355 = vpop.f32.mrb[0].mxu0
        %v6356 = vpop.f32.mrb[0].mxu0
        %v6357 = vadd.f32 0.0, %v6356
        %v6358 = vpop.f32.mrb[0].mxu0
        %6359 = vmatprep.mubr.bf16.mxu0 0
        %6360 = vmatmul.mubr.bf16.gmra.mrb[0].mxu0 %v6142
        %v6361 = vpop.f32.mrb[0].mxu0
        %v6362 = vadd.f32 0.0, %v6361
        %v6363 = vpop.f32.mrb[0].mxu0
        %v6364 = vpop.f32.mrb[0].mxu0
        %v6365 = vadd.f32 0.0, %v6364
        %v6366 = vpop.f32.mrb[0].mxu0
        %6367 = vdwg.mxu0
        %v6368 = vadd.f32 %v5870, %v6242
        %v6369 = vadd.f32 %v5871, %v6245
        %v6370 = vadd.f32 %v5872, %v6250
        %v6371 = vadd.f32 %v5873, %v6253
        %v6372 = vadd.f32 %v5874, %v6258
        %v6373 = vadd.f32 %v5875, %v6261
        %v6374 = vadd.f32 %v5876, %v6266
        %v6375 = vadd.f32 %v5877, %v6269
        %v6376 = vadd.f32 %v5878, %v6274
        %v6377 = vadd.f32 %v5879, %v6277
        %v6378 = vadd.f32 %v5880, %v6282
        %v6379 = vadd.f32 %v5881, %v6285
        %v6380 = vadd.f32 %v5882, %v6290
        %v6381 = vadd.f32 %v5883, %v6293
        %v6382 = vadd.f32 %v5884, %v6298
        %v6383 = vadd.f32 %v5885, %v6301
        %v6384 = vadd.f32 %v5886, %v6306
        %v6385 = vadd.f32 %v5887, %v6309
        %v6386 = vadd.f32 %v5888, %v6314
        %v6387 = vadd.f32 %v5889, %v6317
        %v6388 = vadd.f32 %v5890, %v6322
        %v6389 = vadd.f32 %v5891, %v6325
        %v6390 = vadd.f32 %v5892, %v6330
        %v6391 = vadd.f32 %v5893, %v6333
        %v6392 = vadd.f32 %v5894, %v6338
        %v6393 = vadd.f32 %v5895, %v6341
        %v6394 = vadd.f32 %v5896, %v6346
        %v6395 = vadd.f32 %v5897, %v6349
        %v6396 = vadd.f32 %v5898, %v6354
        %v6397 = vadd.f32 %v5899, %v6357
        %v6398 = vadd.f32 %v5900, %v6362
        %v6399 = vadd.f32 %v5901, %v6365
        %v6400 = vpack.c.bf16 %v6369, %v6368
        %v6401 = vpack.c.bf16 %v6371, %v6370
        %v6402 = vpack.c.bf16 %v6373, %v6372
        %v6403 = vpack.c.bf16 %v6375, %v6374
        %v6404 = vpack.c.bf16 %v6377, %v6376
        %v6405 = vpack.c.bf16 %v6379, %v6378
        %v6406 = vpack.c.bf16 %v6381, %v6380
        %v6407 = vpack.c.bf16 %v6383, %v6382
        %v6408 = vpack.c.bf16 %v6385, %v6384
        %v6409 = vpack.c.bf16 %v6387, %v6386
        %v6410 = vpack.c.bf16 %v6389, %v6388
        %v6411 = vpack.c.bf16 %v6391, %v6390
        %v6412 = vpack.c.bf16 %v6393, %v6392
        %v6413 = vpack.c.bf16 %v6395, %v6394
        %v6414 = vpack.c.bf16 %v6397, %v6396
        %v6415 = vpack.c.bf16 %v6399, %v6398
        %v6432 = vunpack.c.l.b16 %v6400
        %v6433 = vunpack.c.h.b16 %v6400
        %v6434 = vunpack.c.l.b16 %v6401
        %v6435 = vunpack.c.h.b16 %v6401
        %v6436 = vunpack.c.l.b16 %v6402
        %v6437 = vunpack.c.h.b16 %v6402
        %v6438 = vunpack.c.l.b16 %v6403
        %v6439 = vunpack.c.h.b16 %v6403
        %v6440 = vunpack.c.l.b16 %v6404
        %v6441 = vunpack.c.h.b16 %v6404
        %v6442 = vunpack.c.l.b16 %v6405
        %v6443 = vunpack.c.h.b16 %v6405
        %v6444 = vunpack.c.l.b16 %v6406
        %v6445 = vunpack.c.h.b16 %v6406
        %v6446 = vunpack.c.l.b16 %v6407
        %v6447 = vunpack.c.h.b16 %v6407
        %v6448 = vunpack.c.l.b16 %v6408
        %v6449 = vunpack.c.h.b16 %v6408
        %v6450 = vunpack.c.l.b16 %v6409
        %v6451 = vunpack.c.h.b16 %v6409
        %v6452 = vunpack.c.l.b16 %v6410
        %v6453 = vunpack.c.h.b16 %v6410
        %v6454 = vunpack.c.l.b16 %v6411
        %v6455 = vunpack.c.h.b16 %v6411
        %v6456 = vunpack.c.l.b16 %v6412
        %v6457 = vunpack.c.h.b16 %v6412
        %v6458 = vunpack.c.l.b16 %v6413
        %v6459 = vunpack.c.h.b16 %v6413
        %v6460 = vunpack.c.l.b16 %v6414
        %v6461 = vunpack.c.h.b16 %v6414
        %v6462 = vunpack.c.l.b16 %v6415
        %v6463 = vunpack.c.h.b16 %v6415
        %v6464 = vpack.c.b16 %v6432, %v6432
        %v6465 = vpack.c.b16 %v6433, %v6433
        %v6466 = vpack.c.b16 %v6434, %v6434
        %v6467 = vpack.c.b16 %v6435, %v6435
        %v6468 = vpack.c.b16 %v6436, %v6436
        %v6469 = vpack.c.b16 %v6437, %v6437
        %v6470 = vpack.c.b16 %v6438, %v6438
        %v6471 = vpack.c.b16 %v6439, %v6439
        %v6472 = vpack.c.b16 %v6440, %v6440
        %v6473 = vpack.c.b16 %v6441, %v6441
        %v6474 = vpack.c.b16 %v6442, %v6442
        %v6475 = vpack.c.b16 %v6443, %v6443
        %v6476 = vpack.c.b16 %v6444, %v6444
        %v6477 = vpack.c.b16 %v6445, %v6445
        %v6478 = vpack.c.b16 %v6446, %v6446
        %v6479 = vpack.c.b16 %v6447, %v6447
        %v6480 = vpack.c.b16 %v6448, %v6448
        %v6481 = vpack.c.b16 %v6449, %v6449
        %v6482 = vpack.c.b16 %v6450, %v6450
        %v6483 = vpack.c.b16 %v6451, %v6451
        %v6484 = vpack.c.b16 %v6452, %v6452
        %v6485 = vpack.c.b16 %v6453, %v6453
        %v6486 = vpack.c.b16 %v6454, %v6454
        %v6487 = vpack.c.b16 %v6455, %v6455
        %v6488 = vpack.c.b16 %v6456, %v6456
        %v6489 = vpack.c.b16 %v6457, %v6457
        %v6490 = vpack.c.b16 %v6458, %v6458
        %v6491 = vpack.c.b16 %v6459, %v6459
        %v6492 = vpack.c.b16 %v6460, %v6460
        %v6493 = vpack.c.b16 %v6461, %v6461
        %v6494 = vpack.c.b16 %v6462, %v6462
        %v6495 = vpack.c.b16 %v6463, %v6463
        %6528 = vst [vmem:[%s359] sm:$0xf] %v6464
        %6529 = vst [vmem:[%s359 + $0x4] sm:$0xf] %v6465
        %6530 = vst [vmem:[%s359 + $0x8] sm:$0xf] %v6466
        %6531 = vst [vmem:[%s359 + $0xc] sm:$0xf] %v6467
        %6532 = vst [vmem:[%s359 + $0x10] sm:$0xf] %v6468
        %6533 = vst [vmem:[%s359 + $0x14] sm:$0xf] %v6469
        %6534 = vst [vmem:[%s359 + $0x18] sm:$0xf] %v6470
        %6535 = vst [vmem:[%s359 + $0x1c] sm:$0xf] %v6471
        %6536 = vst [vmem:[%s359 + $0x20] sm:$0xf] %v6472
        %6537 = vst [vmem:[%s359 + $0x24] sm:$0xf] %v6473
        %6538 = vst [vmem:[%s359 + $0x28] sm:$0xf] %v6474
        %6539 = vst [vmem:[%s359 + $0x2c] sm:$0xf] %v6475
        %6540 = vst [vmem:[%s359 + $0x30] sm:$0xf] %v6476
        %6541 = vst [vmem:[%s359 + $0x34] sm:$0xf] %v6477
        %6542 = vst [vmem:[%s359 + $0x38] sm:$0xf] %v6478
        %6543 = vst [vmem:[%s359 + $0x3c] sm:$0xf] %v6479
        %6544 = vst [vmem:[%s359 + $0x40] sm:$0xf] %v6480
        %6545 = vst [vmem:[%s359 + $0x44] sm:$0xf] %v6481
        %6546 = vst [vmem:[%s359 + $0x48] sm:$0xf] %v6482
        %6547 = vst [vmem:[%s359 + $0x4c] sm:$0xf] %v6483
        %6548 = vst [vmem:[%s359 + $0x50] sm:$0xf] %v6484
        %6549 = vst [vmem:[%s359 + $0x54] sm:$0xf] %v6485
        %6550 = vst [vmem:[%s359 + $0x58] sm:$0xf] %v6486
        %6551 = vst [vmem:[%s359 + $0x5c] sm:$0xf] %v6487
        %6552 = vst [vmem:[%s359 + $0x60] sm:$0xf] %v6488
        %6553 = vst [vmem:[%s359 + $0x64] sm:$0xf] %v6489
        %6554 = vst [vmem:[%s359 + $0x68] sm:$0xf] %v6490
        %6555 = vst [vmem:[%s359 + $0x6c] sm:$0xf] %v6491
        %6556 = vst [vmem:[%s359 + $0x70] sm:$0xf] %v6492
        %6557 = vst [vmem:[%s359 + $0x74] sm:$0xf] %v6493
        %6558 = vst [vmem:[%s359 + $0x78] sm:$0xf] %v6494
        %6559 = vst [vmem:[%s359 + $0x7c] sm:$0xf] %v6495
        %v6560 = vadd.f32 %v6368, %v6369
        %v6561 = vadd.f32 %v6560, %v6370
        %v6562 = vadd.f32 %v6561, %v6371
        %v6563 = vadd.f32 %v6562, %v6372
        %v6564 = vadd.f32 %v6563, %v6373
        %v6565 = vadd.f32 %v6564, %v6374
        %v6566 = vadd.f32 %v6565, %v6375
        %v6567 = vadd.f32 %v6566, %v6376
        %v6568 = vadd.f32 %v6567, %v6377
        %v6569 = vadd.f32 %v6568, %v6378
        %v6570 = vadd.f32 %v6569, %v6379
        %v6571 = vadd.f32 %v6570, %v6380
        %v6572 = vadd.f32 %v6571, %v6381
        %v6573 = vadd.f32 %v6572, %v6382
        %v6574 = vadd.f32 %v6573, %v6383
        %v6575 = vadd.f32 %v6574, %v6384
        %v6576 = vadd.f32 %v6575, %v6385
        %v6577 = vadd.f32 %v6576, %v6386
        %v6578 = vadd.f32 %v6577, %v6387
        %v6579 = vadd.f32 %v6578, %v6388
        %v6580 = vadd.f32 %v6579, %v6389
        %v6581 = vadd.f32 %v6580, %v6390
        %v6582 = vadd.f32 %v6581, %v6391
        %v6583 = vadd.f32 %v6582, %v6392
        %v6584 = vadd.f32 %v6583, %v6393
        %v6585 = vadd.f32 %v6584, %v6394
        %v6586 = vadd.f32 %v6585, %v6395
        %v6587 = vadd.f32 %v6586, %v6396
        %v6588 = vadd.f32 %v6587, %v6397
        %v6589 = vadd.f32 %v6588, %v6398
        %v6590 = vadd.f32 %v6589, %v6399
        %v6591 = vrot.slane %v6590, 4
        %v6592 = vadd.f32 %v6590, %v6591
        %v6593 = vrot.slane %v6592, 2
        %v6594 = vadd.f32 %v6592, %v6593
        %v6595 = vrot.slane %v6594, 1
        %v6596 = vadd.f32 %v6594, %v6595
        %6597 = vst [vmem:[%s372] sm:$0x1] %v6596
        %v6598 = vmul.f32 %v6368, %v6368
        %v6599 = vmul.f32 %v6369, %v6369
        %v6600 = vmul.f32 %v6370, %v6370
        %v6601 = vmul.f32 %v6371, %v6371
        %v6602 = vmul.f32 %v6372, %v6372
        %v6603 = vmul.f32 %v6373, %v6373
        %v6604 = vmul.f32 %v6374, %v6374
        %v6605 = vmul.f32 %v6375, %v6375
        %v6606 = vmul.f32 %v6376, %v6376
        %v6607 = vmul.f32 %v6377, %v6377
        %v6608 = vmul.f32 %v6378, %v6378
        %v6609 = vmul.f32 %v6379, %v6379
        %v6610 = vmul.f32 %v6380, %v6380
        %v6611 = vmul.f32 %v6381, %v6381
        %v6612 = vmul.f32 %v6382, %v6382
        %v6613 = vmul.f32 %v6383, %v6383
        %v6614 = vmul.f32 %v6384, %v6384
        %v6615 = vmul.f32 %v6385, %v6385
        %v6616 = vmul.f32 %v6386, %v6386
        %v6617 = vmul.f32 %v6387, %v6387
        %v6618 = vmul.f32 %v6388, %v6388
        %v6619 = vmul.f32 %v6389, %v6389
        %v6620 = vmul.f32 %v6390, %v6390
        %v6621 = vmul.f32 %v6391, %v6391
        %v6622 = vmul.f32 %v6392, %v6392
        %v6623 = vmul.f32 %v6393, %v6393
        %v6624 = vmul.f32 %v6394, %v6394
        %v6625 = vmul.f32 %v6395, %v6395
        %v6626 = vmul.f32 %v6396, %v6396
        %v6627 = vmul.f32 %v6397, %v6397
        %v6628 = vmul.f32 %v6398, %v6398
        %v6629 = vmul.f32 %v6399, %v6399
        %v6630 = vadd.f32 %v6598, %v6599
        %v6631 = vadd.f32 %v6630, %v6600
        %v6632 = vadd.f32 %v6631, %v6601
        %v6633 = vadd.f32 %v6632, %v6602
        %v6634 = vadd.f32 %v6633, %v6603
        %v6635 = vadd.f32 %v6634, %v6604
        %v6636 = vadd.f32 %v6635, %v6605
        %v6637 = vadd.f32 %v6636, %v6606
        %v6638 = vadd.f32 %v6637, %v6607
        %v6639 = vadd.f32 %v6638, %v6608
        %v6640 = vadd.f32 %v6639, %v6609
        %v6641 = vadd.f32 %v6640, %v6610
        %v6642 = vadd.f32 %v6641, %v6611
        %v6643 = vadd.f32 %v6642, %v6612
        %v6644 = vadd.f32 %v6643, %v6613
        %v6645 = vadd.f32 %v6644, %v6614
        %v6646 = vadd.f32 %v6645, %v6615
        %v6647 = vadd.f32 %v6646, %v6616
        %v6648 = vadd.f32 %v6647, %v6617
        %v6649 = vadd.f32 %v6648, %v6618
        %v6650 = vadd.f32 %v6649, %v6619
        %v6651 = vadd.f32 %v6650, %v6620
        %v6652 = vadd.f32 %v6651, %v6621
        %v6653 = vadd.f32 %v6652, %v6622
        %v6654 = vadd.f32 %v6653, %v6623
        %v6655 = vadd.f32 %v6654, %v6624
        %v6656 = vadd.f32 %v6655, %v6625
        %v6657 = vadd.f32 %v6656, %v6626
        %v6658 = vadd.f32 %v6657, %v6627
        %v6659 = vadd.f32 %v6658, %v6628
        %v6660 = vadd.f32 %v6659, %v6629
        %v6661 = vrot.slane %v6660, 4
        %v6662 = vadd.f32 %v6660, %v6661
        %v6663 = vrot.slane %v6662, 2
        %v6664 = vadd.f32 %v6662, %v6663
        %v6665 = vrot.slane %v6664, 1
        %v6666 = vadd.f32 %v6664, %v6665
        %6667 = vst [vmem:[%s378] sm:$0x1] %v6666
        %s6668 = sand.u32 %s151, 1
        %s6669 = scalar_lea.sflag [#allocation5], %s6668
        %s6670 = sand.u32 %s151, 1
        %s6671 = smul.addr %s6670, 128
        %s6672 = scalar_lea.vmem [#allocation9], %s6671
        %s6673 = sand.u32 %s33, 1
        %s6674 = scalar_lea.sflag [#allocation11], %s6673
        %s6675 = sand.u32 %s177, 1
        %s6676 = smul.addr %s6675, 128
        %s6677 = scalar_lea.vmem [#allocation10], %s6676
        %s6678 = sand.u32 %s33, 1
        %s6679 = scalar_lea.sflag [#allocation11], %s6678
        %s6680 = sand.u32 %s203, 1
        %s6681 = scalar_lea.vmem [#allocation12], %s6680
        %s6682 = sand.u32 %s229, 1
        %s6683 = scalar_lea.sflag [#allocation14], %s6682
        %s6684 = sand.u32 %s229, 1
        %s6685 = scalar_lea.vmem [#allocation13], %s6684
        // Predicated region
        $region53: #{tpu_custom_call.1} parent=39 // pred_check
          %p6686 = pneg %p161
        $region54: #{tpu_custom_call.1} parent=39 // pred_check_branch
          %6688 = sbr.rel (%p6686) target = $region56
        $region55: #{tpu_custom_call.1} parent=39 // pred_region
          %s6690 = ssub.s32 2048, 2048
          %6691 = vsyncadd %s6669, %s6690
          %s6692 = smul.addr %s33, 32
          %s6693 = smul.addr %s6692, 64
          %s6694 = scalar_lea.hbm %s5, %s6693
          %s6695 = sshll.u32 %s6672, 4
          %s6696 = int_to_ptr.vmem [resolvable:$true] %s6695
          %6701 = dma.vmem_to_hbm [thread:$0]  %s6696, 2048, %s6694, %s6669, 64, 64, 4
        $region56: #{tpu_custom_call.1} parent=39 // pred_fallthru
          _
        // Predicated region
        $region57: #{tpu_custom_call.1} parent=39 // pred_check
          %p6702 = pneg %p187
        $region58: #{tpu_custom_call.1} parent=39 // pred_check_branch
          %6704 = sbr.rel (%p6702) target = $region60
        $region59: #{tpu_custom_call.1} parent=39 // pred_region
          %s6706 = ssub.s32 2048, 2048
          %6707 = vsyncadd %s6674, %s6706
          %s6708 = smul.addr %s33, 32
          %s6709 = smul.addr %s6708, 64
          %s6710 = scalar_lea.hbm %s6, %s6709
          %s6711 = sshll.u32 %s6677, 4
          %s6712 = int_to_ptr.vmem [resolvable:$true] %s6711
          %6717 = dma.vmem_to_hbm [thread:$0]  %s6712, 2048, %s6710, %s6674, 64, 64, 4
        $region60: #{tpu_custom_call.1} parent=39 // pred_fallthru
          _
        // Predicated region
        $region61: #{tpu_custom_call.1} parent=39 // pred_check
          %p6718 = pneg %p213
        $region62: #{tpu_custom_call.1} parent=39 // pred_check_branch
          %6720 = sbr.rel (%p6718) target = $region64
        $region63: #{tpu_custom_call.1} parent=39 // pred_region
          %s6722 = ssub.s32 16, 16
          %6723 = vsyncadd %s6679, %s6722
          %s6724 = smul.addr %s33, 16
          %s6725 = scalar_lea.hbm %s7, %s6724
          %s6727 = sshll.u32 %s6681, 4
          %s6728 = int_to_ptr.vmem [resolvable:$true] %s6727
          %6730 = dma.vmem_to_hbm [thread:$0]  %s6728, 16, %s6725, %s6679
        $region64: #{tpu_custom_call.1} parent=39 // pred_fallthru
          _
        // Predicated region
        $region65: #{tpu_custom_call.1} parent=39 // pred_check
          %p6731 = pneg %p239
        $region66: #{tpu_custom_call.1} parent=39 // pred_check_branch
          %6733 = sbr.rel (%p6731) target = $region68
        $region67: #{tpu_custom_call.1} parent=39 // pred_region
          %s6735 = ssub.s32 16, 16
          %6736 = vsyncadd %s6683, %s6735
          %s6737 = smul.addr %s33, 16
          %s6738 = scalar_lea.hbm %s8, %s6737
          %s6740 = sshll.u32 %s6685, 4
          %s6741 = int_to_ptr.vmem [resolvable:$true] %s6740
          %6743 = dma.vmem_to_hbm [thread:$0]  %s6741, 16, %s6738, %s6683
        $region68: #{tpu_custom_call.1} parent=39 // pred_fallthru
          _
      $region40: #{tpu_custom_call.1} parent=5 // pred_fallthru
        _
      %p6744 = scmp.le.s32.totalorder 2, %s28
      // Predicated region
      $region69: #{tpu_custom_call.1} parent=5 // pred_check
        %p6745 = pneg %p6744
      $region70: #{tpu_custom_call.1} parent=5 // pred_check_branch
        %6747 = sbr.rel (%p6745) target = $region72
      $region71: #{tpu_custom_call.1} parent=5 // pred_region
        %s6748 = ssub.s32 %s28, 2
        // Predicated region
        $region73: #{tpu_custom_call.1} parent=71 // pred_check
          %p6749 = pneg %p167
        $region74: #{tpu_custom_call.1} parent=71 // pred_check_branch
          %6751 = sbr.rel (%p6749) target = $region76
        $region75: #{tpu_custom_call.1} parent=71 // pred_region
          %s6752 = sand.u32 %s152, 1
          %s6753 = scalar_lea.sflag [#allocation5], %s6752
          %s6754 = sand.u32 %s152, 1
          %s6755 = smul.addr %s6754, 128
          %s6756 = scalar_lea.vmem [#allocation9], %s6755
          %6757 = dma.done %s6753, 2048
        $region76: #{tpu_custom_call.1} parent=71 // pred_fallthru
          _
        // Predicated region
        $region77: #{tpu_custom_call.1} parent=71 // pred_check
          %p6758 = pneg %p193
        $region78: #{tpu_custom_call.1} parent=71 // pred_check_branch
          %6760 = sbr.rel (%p6758) target = $region80
        $region79: #{tpu_custom_call.1} parent=71 // pred_region
          %s6761 = sand.u32 %s34, 1
          %s6762 = scalar_lea.sflag [#allocation11], %s6761
          %s6763 = sand.u32 %s178, 1
          %s6764 = smul.addr %s6763, 128
          %s6765 = scalar_lea.vmem [#allocation10], %s6764
          %6766 = dma.done %s6762, 2048
        $region80: #{tpu_custom_call.1} parent=71 // pred_fallthru
          _
        // Predicated region
        $region81: #{tpu_custom_call.1} parent=71 // pred_check
          %p6767 = pneg %p219
        $region82: #{tpu_custom_call.1} parent=71 // pred_check_branch
          %6769 = sbr.rel (%p6767) target = $region84
        $region83: #{tpu_custom_call.1} parent=71 // pred_region
          %s6770 = sand.u32 %s34, 1
          %s6771 = scalar_lea.sflag [#allocation11], %s6770
          %s6772 = sand.u32 %s204, 1
          %s6773 = scalar_lea.vmem [#allocation12], %s6772
          %6774 = dma.done %s6771, 16
        $region84: #{tpu_custom_call.1} parent=71 // pred_fallthru
          _
        // Predicated region
        $region85: #{tpu_custom_call.1} parent=71 // pred_check
          %p6775 = pneg %p245
        $region86: #{tpu_custom_call.1} parent=71 // pred_check_branch
          %6777 = sbr.rel (%p6775) target = $region88
        $region87: #{tpu_custom_call.1} parent=71 // pred_region
          %s6778 = sand.u32 %s230, 1
          %s6779 = scalar_lea.sflag [#allocation14], %s6778
          %s6780 = sand.u32 %s230, 1
          %s6781 = scalar_lea.vmem [#allocation13], %s6780
          %6782 = dma.done %s6779, 16
        $region88: #{tpu_custom_call.1} parent=71 // pred_fallthru
          _
      $region72: #{tpu_custom_call.1} parent=5 // pred_fallthru
        _
    $region6: #{tpu_custom_call.1} parent=1 // loop_footer
      %s32 = sadd.s32 1, %s28
    $region7: #{tpu_custom_call.1} parent=1 // loop_footer_branch
      %27 = sbr.rel target = $region3
    $region8: #{tpu_custom_call.1} parent=1 // loop_exit
      _
    %6783 = vsyncpa [#allocation4], 1
    %s6784 = scalar_lea.sflag [#allocation4], 1
    %6785 = vsyncpa %s6784, 1
    %6786 = vsyncpa [#allocation7], 1
    %6787 = vsyncpa [#allocation5], 1
    %s6788 = scalar_lea.sflag [#allocation5], 1
    %6789 = vsyncpa %s6788, 1
    %6790 = vsyncpa [#allocation11], 1
    %s6791 = scalar_lea.sflag [#allocation11], 1
    %6792 = vsyncpa %s6791, 1
    %6793 = vsyncpa [#allocation14], 1
    %s6794 = scalar_lea.sflag [#allocation14], 1
    %6795 = vsyncpa %s6794, 1

</llo_original>
